<compile_context>
chip_gen: v7x
topology: tpu7x:2x2x1
jax: 0.10.0
libtpu: 0.0.40
codegen_flags: <defaults>
</compile_context>

<pallas_src>
import functools

import jax
import jax.numpy as jnp
from jax.experimental import pallas as pl
from jax.experimental.pallas import tpu as pltpu


def _round_up(x, m):
    return -(-x // m) * m


# ----------------------------------------------------------------------------- conv GEMM kernel
def _conv_gemm_bias_relu_kernel(a_ref, w_ref, b_ref, o_ref):
    # a: (tm, Kp) bf16 patch tile, w: (Kp, OC) bf16 resident weight, b: (1, OC) f32.
    acc = jnp.dot(a_ref[...], w_ref[...], preferred_element_type=jnp.float32)
    o_ref[...] = jnp.maximum(acc + b_ref[...], 0.0).astype(o_ref.dtype)


def conv_gemm_bias_relu(patches, w_mat, bias, tile_m=2048):
    """(M, K) x (K, OC) + bias, ReLU.  bf16 operands/outputs, f32 accumulate.

    Tiled over M (>= 2 grid steps so v7x's two TensorCores both get work), weight resident
    in VMEM (constant index_map -> fetched once)."""
    M, K = patches.shape
    _, OC = w_mat.shape

    # bf16 operands; cast BEFORE padding so the padded patch array XLA writes is already bf16.
    patches = patches.astype(jnp.bfloat16)
    w_mat = w_mat.astype(jnp.bfloat16)

    # Pad K to a multiple of 128 (lane alignment of the contraction dim; 576 -> 640 for conv3).
    Kp = _round_up(K, 128)
    if Kp != K:
        patches = jnp.pad(patches, ((0, 0), (0, Kp - K)))
        w_mat = jnp.pad(w_mat, ((0, Kp - K), (0, 0)))

    # M tile: 8-aligned, capped at tile_m, and small enough that the grid has >= 2 steps.
    tm = min(tile_m, _round_up((M + 1) // 2, 8))
    Mp = _round_up(M, tm)
    if Mp != M:
        patches = jnp.pad(patches, ((0, Mp - M), (0, 0)))

    out = pl.pallas_call(
        _conv_gemm_bias_relu_kernel,
        out_shape=jax.ShapeDtypeStruct((Mp, OC), jnp.bfloat16),
        grid_spec=pltpu.PrefetchScalarGridSpec(
            num_scalar_prefetch=0,
            grid=(Mp // tm,),
            in_specs=[
                pl.BlockSpec((tm, Kp), lambda i: (i, 0)),   # pipelined patch tiles
                pl.BlockSpec((Kp, OC), lambda i: (0, 0)),   # resident weight (fetched once)
                pl.BlockSpec((1, OC), lambda i: (0, 0)),    # resident bias
            ],
            out_specs=pl.BlockSpec((tm, OC), lambda i: (i, 0)),
        ),
        compiler_params=pltpu.CompilerParams(
            dimension_semantics=("parallel",),
            vmem_limit_bytes=32 * 1024 * 1024,
        ),
    )(patches, w_mat, bias.reshape(1, OC).astype(jnp.float32))
    return out[:M]


def im2col_nhwc(x, kh, kw, stride):
    """x: (B, H, W, C) -> (B*oh*ow, kh*kw*C) patches, flatten order (kh, kw, C)."""
    B, H, W, C = x.shape
    oh = (H - kh) // stride + 1
    ow = (W - kw) // stride + 1
    cols = []
    for i in range(kh):
        for j in range(kw):
            cols.append(
                x[:, i:i + (oh - 1) * stride + 1:stride,
                     j:j + (ow - 1) * stride + 1:stride, :]
            )
    patches = jnp.stack(cols, axis=3)            # (B, oh, ow, kh*kw, C)
    return patches.reshape(B * oh * ow, kh * kw * C), oh, ow


def conv2d_relu_nhwc(x_nhwc, w_mat, bias, kh, kw, stride):
    """Valid conv, NHWC activations, pre-packed (kh*kw*IC, OC) bf16 weight, fused ReLU."""
    B = x_nhwc.shape[0]
    OC = w_mat.shape[1]
    patches, oh, ow = im2col_nhwc(x_nhwc, kh, kw, stride)
    out = conv_gemm_bias_relu(patches, w_mat, bias)          # (B*oh*ow, OC) bf16
    return out.reshape(B, oh, ow, OC)


# ------------------------------------------------------------------- fused dueling-heads kernel
def _dueling_kernel(h_ref, w1_ref, b1_ref, w2_ref, b2_ref, q_ref, *, n_actions):
    # h: (tb, D) bf16; w1: (1, D, 2H) bf16; b1: (1, 1, 2H) f32;
    # w2: (1, 2H, N2) bf16 (block-diag, cols [0:A]=adv, col A=value); b2: (1, 1, N2) f32.
    z = jnp.dot(h_ref[...], w1_ref[0], preferred_element_type=jnp.float32) + b1_ref[0]
    z = jnp.maximum(z, 0.0)                                           # (tb, 2H) f32
    y = jnp.dot(z.astype(jnp.bfloat16), w2_ref[0],
                preferred_element_type=jnp.float32) + b2_ref[0]       # (tb, N2) f32

    # dueling combine in f32: cols [0:A] are the advantage head, col A is the value head.
    lane = jax.lax.broadcasted_iota(jnp.int32, y.shape, 1)
    a_mask = lane < n_actions
    ya = jnp.where(a_mask, y, 0.0)
    mean = jnp.sum(ya, axis=1, keepdims=True) * (1.0 / n_actions)
    ys = jnp.sum(jnp.where(lane == n_actions, y, 0.0), axis=1, keepdims=True)
    q_ref[0] = ya - mean + ys


def dueling_heads(h_flat, policy_indices, prepared, n_actions, tile_b=512):
    """h_flat: (B, 1024), policy_indices: (B,) int32. Returns q: (B, n_actions) f32."""
    B, D = h_flat.shape
    w1, b1, w2, b2 = prepared["w1"], prepared["b1"], prepared["w2"], prepared["b2"]
    S, _, H2 = w1.shape                             # (n_streams, 1024, 1024)
    N2 = w2.shape[-1]
    A = n_actions

    h_bf = h_flat.astype(jnp.bfloat16)
    tb = min(tile_b, _round_up(B, 8))
    Bp = _round_up(B, tb)
    if Bp != B:
        h_bf = jnp.pad(h_bf, ((0, Bp - B), (0, 0)))

    grid_spec = pltpu.PrefetchScalarGridSpec(
        num_scalar_prefetch=0,
        grid=(S, Bp // tb),                          # stream outermost: weights stay resident
        in_specs=[
            pl.BlockSpec((tb, D), lambda s, b: (b, 0)),          # pipelined activation tiles
            pl.BlockSpec((1, D, H2), lambda s, b: (s, 0, 0)),    # fused layer-1 weight
            pl.BlockSpec((1, 1, H2), lambda s, b: (s, 0, 0)),
            pl.BlockSpec((1, H2, N2), lambda s, b: (s, 0, 0)),   # block-diag layer-2 weight
            pl.BlockSpec((1, 1, N2), lambda s, b: (s, 0, 0)),
        ],
        out_specs=pl.BlockSpec((1, tb, N2), lambda s, b: (s, b, 0)),
    )
    y_all = pl.pallas_call(
        functools.partial(_dueling_kernel, n_actions=A),
        out_shape=jax.ShapeDtypeStruct((S, Bp, N2), jnp.float32),
        grid_spec=grid_spec,
        compiler_params=pltpu.CompilerParams(
            dimension_semantics=("parallel", "parallel"),
            vmem_limit_bytes=32 * 1024 * 1024,
        ),
    )(h_bf, w1, b1, w2, b2)

    # Per-sample stream selection (tiny gather) + slice off the lane padding.
    q = y_all[policy_indices, jnp.arange(B)]                # (B, N2)
    return q[:, :A]


# -------------------------------------------------------------------- one-time weight packing
def prepare_params(params, n_actions):
    """Hoisted out of the forward: pack conv weights into (K, OC) bf16 matrices and fuse the
    per-stream advantage/value heads into one bf16 GEMM pair per stream."""
    A = n_actions
    S, D, Hh = params["w1a"].shape
    N2 = _round_up(A + 1, 128)                     # lane-dense padded head output width

    def conv_mat(w_oihw):
        OC, IC, KH, KW = w_oihw.shape
        return jnp.transpose(w_oihw, (2, 3, 1, 0)).reshape(KH * KW * IC, OC).astype(jnp.bfloat16)

    # Fuse advantage + value layer-1: (S, D, 2H) bf16, bias (S, 1, 2H) f32.
    w1 = jnp.concatenate([params["w1a"], params["w1v"]], axis=2).astype(jnp.bfloat16)
    b1 = jnp.concatenate([params["b1a"], params["b1v"]], axis=1)[:, None, :].astype(jnp.float32)

    # Fuse layer-2 into block-diagonal (S, 2H, N2): rows [0:H] x cols [0:A] = W2a,
    # rows [H:2H] x col A = W2v.  Padding columns are zero and sliced off in the wrapper.
    w2 = jnp.zeros((S, 2 * Hh, N2), jnp.float32)
    w2 = w2.at[:, :Hh, :A].set(params["w2a"])
    w2 = w2.at[:, Hh:, A].set(params["w2v"][..., 0])
    w2 = w2.astype(jnp.bfloat16)
    b2 = jnp.zeros((S, 1, N2), jnp.float32)
    b2 = b2.at[:, 0, :A].set(params["b2a"])
    b2 = b2.at[:, 0, A].set(params["b2v"][:, 0])

    return {
        "cw1": conv_mat(params["cw1"]), "cb1": params["cb1"].reshape(1, -1),
        "cw2": conv_mat(params["cw2"]), "cb2": params["cb2"].reshape(1, -1),
        "cw3": conv_mat(params["cw3"]), "cb3": params["cb3"].reshape(1, -1),
        "w1": w1, "b1": b1, "w2": w2, "b2": b2,
    }


# ------------------------------------------------------------------------------- full forward
def option_dueling_dqn_forward(x_nchw, prepared, boundaries, n_actions):
    """x_nchw: (B, C, H, W) float32. Returns q-values (B, n_actions).
    (DiscreteActionValue is just a thin wrapper around q; we return q directly.)"""
    B = x_nchw.shape[0]

    # option selection from cumulative-reward channel (glue, tiny)
    rewards = x_nchw[:, -1, 0, 0]                                        # (B,)
    policy_indices = jnp.sum(rewards[:, None] > boundaries[None, :], axis=1).astype(jnp.int32)

    # conv trunk (im2col glue + tiled bf16 Pallas GEMM/bias/ReLU)
    h = jnp.transpose(x_nchw, (0, 2, 3, 1))                              # NCHW -> NHWC
    h = conv2d_relu_nhwc(h, prepared["cw1"], prepared["cb1"], 8, 8, 4)   # (B, 14, 14, 32) bf16
    h = conv2d_relu_nhwc(h, prepared["cw2"], prepared["cb2"], 4, 4, 2)   # (B, 6, 6, 64) bf16
    h = conv2d_relu_nhwc(h, prepared["cw3"], prepared["cb3"], 3, 3, 1)   # (B, 4, 4, 64) bf16

    # flatten exactly like torch: NCHW order
    h_flat = jnp.transpose(h, (0, 3, 1, 2)).reshape(B, -1)               # (B, 1024) bf16

    return dueling_heads(h_flat, policy_indices, prepared, n_actions)


# ------------------------------------------------------------------------------ param creation
def make_params(key, n_input_channels, n_actions, n_streams, hidden=512, feat=1024):
    ks = jax.random.split(key, 16)
    norm = lambda k, shape, scale: (scale * jax.random.normal(k, shape)).astype(jnp.float32)
    p = {
        # conv weights in PyTorch (OC, IC, KH, KW) layout, bias = 0.1 (constant_bias_initializer)
        "cw1": norm(ks[0], (32, n_input_channels, 8, 8), 0.05),
        "cb1": jnp.full((32,), 0.1, jnp.float32),
        "cw2": norm(ks[1], (64, 32, 4, 4), 0.05),
        "cb2": jnp.full((64,), 0.1, jnp.float32),
        "cw3": norm(ks[2], (64, 64, 3, 3), 0.05),
        "cb3": jnp.full((64,), 0.1, jnp.float32),
        # per-stream MLP params stored as (streams, in, out)
        "w1a": norm(ks[3], (n_streams, feat, hidden), 0.03),
        "b1a": norm(ks[4], (n_streams, hidden), 0.01),
        "w2a": norm(ks[5], (n_streams, hidden, n_actions), 0.03),
        "b2a": norm(ks[6], (n_streams, n_actions), 0.01),
        "w1v": norm(ks[7], (n_streams, feat, hidden), 0.03),
        "b1v": norm(ks[8], (n_streams, hidden), 0.01),
        "w2v": norm(ks[9], (n_streams, hidden, 1), 0.03),
        "b2v": norm(ks[10], (n_streams, 1), 0.01),
    }
    return p


# --------------------------------------------------------------------------------- reference
def reference_forward(x_nchw, params, boundaries, n_actions):
    B = x_nchw.shape[0]
    rewards = x_nchw[:, -1, 0, 0]
    pidx = jnp.sum(rewards[:, None] > boundaries[None, :], axis=1).astype(jnp.int32)

    h = x_nchw
    for w, b, s in ((params["cw1"], params["cb1"], 4),
                    (params["cw2"], params["cb2"], 2),
                    (params["cw3"], params["cb3"], 1)):
        h = jax.lax.conv_general_dilated(
            h, w, window_strides=(s, s), padding="VALID",
            dimension_numbers=("NCHW", "OIHW", "NCHW"))
        h = jnp.maximum(h + b[None, :, None, None], 0.0)
    h = h.reshape(B, -1)

    def mlp(hb, w1, b1, w2, b2):
        z = jnp.maximum(hb @ w1 + b1, 0.0)
        return z @ w2 + b2

    ya = jnp.stack([mlp(h[i], params["w1a"][pidx[i]], params["b1a"][pidx[i]],
                        params["w2a"][pidx[i]], params["b2a"][pidx[i]]) for i in range(B)])
    ys = jnp.stack([mlp(h[i], params["w1v"][pidx[i]], params["b1v"][pidx[i]],
                        params["w2v"][pidx[i]], params["b2v"][pidx[i]]) for i in range(B)])
    mean = jnp.sum(ya, axis=1, keepdims=True) / n_actions
    return ya - mean + ys


# ------------------------------------------------------------------------------------- main
if __name__ == "__main__":
    n_actions = 6
    n_input_channels = 4
    reward_boundaries = [0.3, 0.7]
    reward_channel_scale = 1.0
    boundaries = (jnp.asarray(reward_boundaries, jnp.float32) * reward_channel_scale) - 1e-8
    n_streams = len(reward_boundaries) + 1

    B, H, W = 2, 60, 60   # 60x60 is required so the flattened conv features are 1024

    key = jax.random.PRNGKey(0)
    kx, kp = jax.random.split(key)
    x = jax.random.normal(kx, (B, n_input_channels, H, W), jnp.float32)
    params = make_params(kp, n_input_channels, n_actions, n_streams)

    # One-time weight packing, hoisted out of the forward path.
    prepared = prepare_params(params, n_actions)

    forward = jax.jit(lambda xx, pp, bb: option_dueling_dqn_forward(xx, pp, bb, n_actions))
    q = jax.block_until_ready(forward(x, prepared, boundaries))

    q_ref = jax.block_until_ready(reference_forward(x, params, boundaries, n_actions))
    assert q.shape == (B, n_actions)
    assert jnp.allclose(q, q_ref, rtol=2e-2, atol=2e-2), (q, q_ref)

    print("KERNEL_OK")
</pallas_src>

<mosaic_0001>
module attributes {stable_mosaic.version = 11 : i64} {
  func.func @_conv_gemm_bias_relu_kernel(%arg0: i32, %arg1: memref<200x256xbf16, #tpu.memory_space<vmem>>, %arg2: memref<256x32xbf16, #tpu.memory_space<vmem>>, %arg3: memref<1x32xf32, #tpu.memory_space<vmem>>, %arg4: memref<200x32xbf16, #tpu.memory_space<vmem>>) attributes {dimension_semantics = [#tpu.dimension_semantics<parallel>], iteration_bounds = array<i64: 2>, scalar_prefetch = 0 : i64, scratch_operands = 0 : i64, tpu.core_type = #tpu.core_type<tc>, window_params = [{transform_indices = @transform_0, window_bounds = array<i64: 200, 256>}, {pipeline_mode = #tpu.pipeline_mode<synchronous>, transform_indices = @transform_1, window_bounds = array<i64: 256, 32>}, {pipeline_mode = #tpu.pipeline_mode<synchronous>, transform_indices = @transform_2, window_bounds = array<i64: 1, 32>}, {transform_indices = @transform_3, window_bounds = array<i64: 200, 32>}]} {
    %c0 = arith.constant 0 : index
    %c0_0 = arith.constant 0 : index
    %0 = vector.load %arg1[%c0, %c0_0] : memref<200x256xbf16, #tpu.memory_space<vmem>>, vector<200x256xbf16>
    %c0_1 = arith.constant 0 : index
    %c0_2 = arith.constant 0 : index
    %1 = vector.load %arg2[%c0_1, %c0_2] : memref<256x32xbf16, #tpu.memory_space<vmem>>, vector<256x32xbf16>
    %cst = arith.constant dense<0.000000e+00> : vector<200x32xf32>
    %2 = tpu.matmul %0, %1, %cst {dimension_numbers = #tpu.dot_dimension_numbers<[1], [0], [0], [1], [0, 0, 1, 1], [], []>} : vector<200x256xbf16>, vector<256x32xbf16>, vector<200x32xf32> -> vector<200x32xf32>
    %c0_3 = arith.constant 0 : index
    %c0_4 = arith.constant 0 : index
    %3 = vector.load %arg3[%c0_3, %c0_4] : memref<1x32xf32, #tpu.memory_space<vmem>>, vector<1x32xf32>
    %4 = vector.broadcast %3 : vector<1x32xf32> to vector<200x32xf32>
    %5 = arith.addf %2, %4 : vector<200x32xf32>
    %cst_5 = arith.constant 0.000000e+00 : f32
    %6 = vector.broadcast %cst_5 : f32 to vector<200x32xf32>
    %7 = arith.maximumf %5, %6 : vector<200x32xf32>
    %8 = arith.truncf %7 : vector<200x32xf32> to vector<200x32xbf16>
    %c0_6 = arith.constant 0 : index
    %c0_7 = arith.constant 0 : index
    %9 = vector.load %arg4[%c0_6, %c0_7] : memref<200x32xbf16, #tpu.memory_space<vmem>>, vector<200x32xbf16>
    tpu.vector_store %arg4[%c0_6, %c0_7], %8 {strides = array<i32>} : memref<200x32xbf16, #tpu.memory_space<vmem>>, vector<200x32xbf16>,
    return
  }
  func.func @transform_0(%arg0: i32) -> (i32, i32) {
    %c0_i32 = arith.constant 0 : i32
    %c0_i32_0 = arith.constant 0 : i32
    return %arg0, %c0_i32 : i32, i32
  }
  func.func @transform_1(%arg0: i32) -> (i32, i32) {
    %c0_i32 = arith.constant 0 : i32
    %c0_i32_0 = arith.constant 0 : i32
    %c0_i32_1 = arith.constant 0 : i32
    return %c0_i32, %c0_i32_0 : i32, i32
  }
  func.func @transform_2(%arg0: i32) -> (i32, i32) {
    %c0_i32 = arith.constant 0 : i32
    %c0_i32_0 = arith.constant 0 : i32
    %c0_i32_1 = arith.constant 0 : i32
    return %c0_i32, %c0_i32_0 : i32, i32
  }
  func.func @transform_3(%arg0: i32) -> (i32, i32) {
    %c0_i32 = arith.constant 0 : i32
    %c0_i32_0 = arith.constant 0 : i32
    return %arg0, %c0_i32 : i32, i32
  }
}

module attributes {stable_mosaic.version = 11 : i64} {
  func.func @_conv_gemm_bias_relu_kernel(%arg0: i32, %arg1: memref<40x512xbf16, #tpu.memory_space<vmem>>, %arg2: memref<512x64xbf16, #tpu.memory_space<vmem>>, %arg3: memref<1x64xf32, #tpu.memory_space<vmem>>, %arg4: memref<40x64xbf16, #tpu.memory_space<vmem>>) attributes {dimension_semantics = [#tpu.dimension_semantics<parallel>], iteration_bounds = array<i64: 2>, scalar_prefetch = 0 : i64, scratch_operands = 0 : i64, tpu.core_type = #tpu.core_type<tc>, window_params = [{transform_indices = @transform_0, window_bounds = array<i64: 40, 512>}, {pipeline_mode = #tpu.pipeline_mode<synchronous>, transform_indices = @transform_1, window_bounds = array<i64: 512, 64>}, {pipeline_mode = #tpu.pipeline_mode<synchronous>, transform_indices = @transform_2, window_bounds = array<i64: 1, 64>}, {transform_indices = @transform_3, window_bounds = array<i64: 40, 64>}]} {
    %c0 = arith.constant 0 : index
    %c0_0 = arith.constant 0 : index
    %0 = vector.load %arg1[%c0, %c0_0] : memref<40x512xbf16, #tpu.memory_space<vmem>>, vector<40x512xbf16>
    %c0_1 = arith.constant 0 : index
    %c0_2 = arith.constant 0 : index
    %1 = vector.load %arg2[%c0_1, %c0_2] : memref<512x64xbf16, #tpu.memory_space<vmem>>, vector<512x64xbf16>
    %cst = arith.constant dense<0.000000e+00> : vector<40x64xf32>
    %2 = tpu.matmul %0, %1, %cst {dimension_numbers = #tpu.dot_dimension_numbers<[1], [0], [0], [1], [0, 0, 1, 1], [], []>} : vector<40x512xbf16>, vector<512x64xbf16>, vector<40x64xf32> -> vector<40x64xf32>
    %c0_3 = arith.constant 0 : index
    %c0_4 = arith.constant 0 : index
    %3 = vector.load %arg3[%c0_3, %c0_4] : memref<1x64xf32, #tpu.memory_space<vmem>>, vector<1x64xf32>
    %4 = vector.broadcast %3 : vector<1x64xf32> to vector<40x64xf32>
    %5 = arith.addf %2, %4 : vector<40x64xf32>
    %cst_5 = arith.constant 0.000000e+00 : f32
    %6 = vector.broadcast %cst_5 : f32 to vector<40x64xf32>
    %7 = arith.maximumf %5, %6 : vector<40x64xf32>
    %8 = arith.truncf %7 : vector<40x64xf32> to vector<40x64xbf16>
    %c0_6 = arith.constant 0 : index
    %c0_7 = arith.constant 0 : index
    %9 = vector.load %arg4[%c0_6, %c0_7] : memref<40x64xbf16, #tpu.memory_space<vmem>>, vector<40x64xbf16>
    tpu.vector_store %arg4[%c0_6, %c0_7], %8 {strides = array<i32>} : memref<40x64xbf16, #tpu.memory_space<vmem>>, vector<40x64xbf16>,
    return
  }
  func.func @transform_0(%arg0: i32) -> (i32, i32) {
    %c0_i32 = arith.constant 0 : i32
    %c0_i32_0 = arith.constant 0 : i32
    return %arg0, %c0_i32 : i32, i32
  }
  func.func @transform_1(%arg0: i32) -> (i32, i32) {
    %c0_i32 = arith.constant 0 : i32
    %c0_i32_0 = arith.constant 0 : i32
    %c0_i32_1 = arith.constant 0 : i32
    return %c0_i32, %c0_i32_0 : i32, i32
  }
  func.func @transform_2(%arg0: i32) -> (i32, i32) {
    %c0_i32 = arith.constant 0 : i32
    %c0_i32_0 = arith.constant 0 : i32
    %c0_i32_1 = arith.constant 0 : i32
    return %c0_i32, %c0_i32_0 : i32, i32
  }
  func.func @transform_3(%arg0: i32) -> (i32, i32) {
    %c0_i32 = arith.constant 0 : i32
    %c0_i32_0 = arith.constant 0 : i32
    return %arg0, %c0_i32 : i32, i32
  }
}

module attributes {stable_mosaic.version = 11 : i64} {
  func.func @_conv_gemm_bias_relu_kernel(%arg0: i32, %arg1: memref<16x640xbf16, #tpu.memory_space<vmem>>, %arg2: memref<640x64xbf16, #tpu.memory_space<vmem>>, %arg3: memref<1x64xf32, #tpu.memory_space<vmem>>, %arg4: memref<16x64xbf16, #tpu.memory_space<vmem>>) attributes {dimension_semantics = [#tpu.dimension_semantics<parallel>], iteration_bounds = array<i64: 2>, scalar_prefetch = 0 : i64, scratch_operands = 0 : i64, tpu.core_type = #tpu.core_type<tc>, window_params = [{transform_indices = @transform_0, window_bounds = array<i64: 16, 640>}, {pipeline_mode = #tpu.pipeline_mode<synchronous>, transform_indices = @transform_1, window_bounds = array<i64: 640, 64>}, {pipeline_mode = #tpu.pipeline_mode<synchronous>, transform_indices = @transform_2, window_bounds = array<i64: 1, 64>}, {transform_indices = @transform_3, window_bounds = array<i64: 16, 64>}]} {
    %c0 = arith.constant 0 : index
    %c0_0 = arith.constant 0 : index
    %0 = vector.load %arg1[%c0, %c0_0] : memref<16x640xbf16, #tpu.memory_space<vmem>>, vector<16x640xbf16>
    %c0_1 = arith.constant 0 : index
    %c0_2 = arith.constant 0 : index
    %1 = vector.load %arg2[%c0_1, %c0_2] : memref<640x64xbf16, #tpu.memory_space<vmem>>, vector<640x64xbf16>
    %cst = arith.constant dense<0.000000e+00> : vector<16x64xf32>
    %2 = tpu.matmul %0, %1, %cst {dimension_numbers = #tpu.dot_dimension_numbers<[1], [0], [0], [1], [0, 0, 1, 1], [], []>} : vector<16x640xbf16>, vector<640x64xbf16>, vector<16x64xf32> -> vector<16x64xf32>
    %c0_3 = arith.constant 0 : index
    %c0_4 = arith.constant 0 : index
    %3 = vector.load %arg3[%c0_3, %c0_4] : memref<1x64xf32, #tpu.memory_space<vmem>>, vector<1x64xf32>
    %4 = vector.broadcast %3 : vector<1x64xf32> to vector<16x64xf32>
    %5 = arith.addf %2, %4 : vector<16x64xf32>
    %cst_5 = arith.constant 0.000000e+00 : f32
    %6 = vector.broadcast %cst_5 : f32 to vector<16x64xf32>
    %7 = arith.maximumf %5, %6 : vector<16x64xf32>
    %8 = arith.truncf %7 : vector<16x64xf32> to vector<16x64xbf16>
    %c0_6 = arith.constant 0 : index
    %c0_7 = arith.constant 0 : index
    %9 = vector.load %arg4[%c0_6, %c0_7] : memref<16x64xbf16, #tpu.memory_space<vmem>>, vector<16x64xbf16>
    tpu.vector_store %arg4[%c0_6, %c0_7], %8 {strides = array<i32>} : memref<16x64xbf16, #tpu.memory_space<vmem>>, vector<16x64xbf16>,
    return
  }
  func.func @transform_0(%arg0: i32) -> (i32, i32) {
    %c0_i32 = arith.constant 0 : i32
    %c0_i32_0 = arith.constant 0 : i32
    return %arg0, %c0_i32 : i32, i32
  }
  func.func @transform_1(%arg0: i32) -> (i32, i32) {
    %c0_i32 = arith.constant 0 : i32
    %c0_i32_0 = arith.constant 0 : i32
    %c0_i32_1 = arith.constant 0 : i32
    return %c0_i32, %c0_i32_0 : i32, i32
  }
  func.func @transform_2(%arg0: i32) -> (i32, i32) {
    %c0_i32 = arith.constant 0 : i32
    %c0_i32_0 = arith.constant 0 : i32
    %c0_i32_1 = arith.constant 0 : i32
    return %c0_i32, %c0_i32_0 : i32, i32
  }
  func.func @transform_3(%arg0: i32) -> (i32, i32) {
    %c0_i32 = arith.constant 0 : i32
    %c0_i32_0 = arith.constant 0 : i32
    return %arg0, %c0_i32 : i32, i32
  }
}

module attributes {stable_mosaic.version = 11 : i64} {
  func.func @_dueling_kernel(%arg0: i32, %arg1: i32, %arg2: memref<8x1024xbf16, #tpu.memory_space<vmem>>, %arg3: memref<1x1024x1024xbf16, #tpu.memory_space<vmem>>, %arg4: memref<1x1x1024xf32, #tpu.memory_space<vmem>>, %arg5: memref<1x1024x128xbf16, #tpu.memory_space<vmem>>, %arg6: memref<1x1x128xf32, #tpu.memory_space<vmem>>, %arg7: memref<1x8x128xf32, #tpu.memory_space<vmem>>) attributes {dimension_semantics = [#tpu.dimension_semantics<parallel>, #tpu.dimension_semantics<parallel>], iteration_bounds = array<i64: 3, 1>, scalar_prefetch = 0 : i64, scratch_operands = 0 : i64, tpu.core_type = #tpu.core_type<tc>, window_params = [{transform_indices = @transform_0, window_bounds = array<i64: 8, 1024>}, {transform_indices = @transform_1, window_bounds = array<i64: 1, 1024, 1024>}, {transform_indices = @transform_2, window_bounds = array<i64: 1, 1, 1024>}, {transform_indices = @transform_3, window_bounds = array<i64: 1, 1024, 128>}, {transform_indices = @transform_4, window_bounds = array<i64: 1, 1, 128>}, {transform_indices = @transform_5, window_bounds = array<i64: 1, 8, 128>}]} {
    %c0 = arith.constant 0 : index
    %c0_0 = arith.constant 0 : index
    %0 = vector.load %arg2[%c0, %c0_0] : memref<8x1024xbf16, #tpu.memory_space<vmem>>, vector<8x1024xbf16>
    %c0_1 = arith.constant 0 : index
    %c0_2 = arith.constant 0 : index
    %c0_3 = arith.constant 0 : index
    %1 = vector.load %arg3[%c0_1, %c0_2, %c0_3] : memref<1x1024x1024xbf16, #tpu.memory_space<vmem>>, vector<1x1024x1024xbf16>
    %2 = vector.shape_cast %1 : vector<1x1024x1024xbf16> to vector<1024x1024xbf16>
    %cst = arith.constant dense<0.000000e+00> : vector<8x1024xf32>
    %3 = tpu.matmul %0, %2, %cst {dimension_numbers = #tpu.dot_dimension_numbers<[1], [0], [0], [1], [0, 0, 1, 1], [], []>} : vector<8x1024xbf16>, vector<1024x1024xbf16>, vector<8x1024xf32> -> vector<8x1024xf32>
    %c0_4 = arith.constant 0 : index
    %c0_5 = arith.constant 0 : index
    %c0_6 = arith.constant 0 : index
    %4 = vector.load %arg4[%c0_4, %c0_5, %c0_6] : memref<1x1x1024xf32, #tpu.memory_space<vmem>>, vector<1x1x1024xf32>
    %5 = vector.shape_cast %4 : vector<1x1x1024xf32> to vector<1x1024xf32>
    %6 = vector.broadcast %5 : vector<1x1024xf32> to vector<8x1024xf32>
    %7 = arith.addf %3, %6 : vector<8x1024xf32>
    %cst_7 = arith.constant 0.000000e+00 : f32
    %8 = vector.broadcast %cst_7 : f32 to vector<8x1024xf32>
    %9 = arith.maximumf %7, %8 : vector<8x1024xf32>
    %10 = arith.truncf %9 : vector<8x1024xf32> to vector<8x1024xbf16>
    %c0_8 = arith.constant 0 : index
    %c0_9 = arith.constant 0 : index
    %c0_10 = arith.constant 0 : index
    %11 = vector.load %arg5[%c0_8, %c0_9, %c0_10] : memref<1x1024x128xbf16, #tpu.memory_space<vmem>>, vector<1x1024x128xbf16>
    %12 = vector.shape_cast %11 : vector<1x1024x128xbf16> to vector<1024x128xbf16>
    %cst_11 = arith.constant dense<0.000000e+00> : vector<8x128xf32>
    %13 = tpu.matmul %10, %12, %cst_11 {dimension_numbers = #tpu.dot_dimension_numbers<[1], [0], [0], [1], [0, 0, 1, 1], [], []>} : vector<8x1024xbf16>, vector<1024x128xbf16>, vector<8x128xf32> -> vector<8x128xf32>
    %c0_12 = arith.constant 0 : index
    %c0_13 = arith.constant 0 : index
    %c0_14 = arith.constant 0 : index
    %14 = vector.load %arg6[%c0_12, %c0_13, %c0_14] : memref<1x1x128xf32, #tpu.memory_space<vmem>>, vector<1x1x128xf32>
    %15 = vector.shape_cast %14 : vector<1x1x128xf32> to vector<1x128xf32>
    %16 = vector.broadcast %15 : vector<1x128xf32> to vector<8x128xf32>
    %17 = arith.addf %13, %16 : vector<8x128xf32>
    %18 = tpu.iota {dimensions = array<i32: 1>} : vector<8x128xi32>
    %c6_i32 = arith.constant 6 : i32
    %19 = vector.broadcast %c6_i32 : i32 to vector<8x128xi32>
    %20 = arith.cmpi slt, %18, %19 : vector<8x128xi32>
    %cst_15 = arith.constant 0.000000e+00 : f32
    %21 = vector.broadcast %cst_15 : f32 to vector<8x128xf32>
    %22 = arith.select %20, %17, %21 : vector<8x128xi1>, vector<8x128xf32>
    %cst_16 = arith.constant dense<0.000000e+00> : vector<8xf32>
    %23 = vector.multi_reduction <add>, %22, %cst_16 [1] : vector<8x128xf32> to vector<8xf32>
    %24 = vector.shape_cast %23 : vector<8xf32> to vector<8x1xf32>
    %cst_17 = arith.constant 0.166666672 : f32
    %25 = vector.broadcast %cst_17 : f32 to vector<8x1xf32>
    %26 = arith.mulf %24, %25 : vector<8x1xf32>
    %c6_i32_18 = arith.constant 6 : i32
    %27 = vector.broadcast %c6_i32_18 : i32 to vector<8x128xi32>
    %28 = arith.cmpi eq, %18, %27 : vector<8x128xi32>
    %cst_19 = arith.constant 0.000000e+00 : f32
    %29 = vector.broadcast %cst_19 : f32 to vector<8x128xf32>
    %30 = arith.select %28, %17, %29 : vector<8x128xi1>, vector<8x128xf32>
    %cst_20 = arith.constant dense<0.000000e+00> : vector<8xf32>
    %31 = vector.multi_reduction <add>, %30, %cst_20 [1] : vector<8x128xf32> to vector<8xf32>
    %32 = vector.shape_cast %31 : vector<8xf32> to vector<8x1xf32>
    %33 = vector.broadcast %26 : vector<8x1xf32> to vector<8x128xf32>
    %34 = arith.subf %22, %33 : vector<8x128xf32>
    %35 = vector.broadcast %32 : vector<8x1xf32> to vector<8x128xf32>
    %36 = arith.addf %34, %35 : vector<8x128xf32>
    %c0_21 = arith.constant 0 : index
    %c0_22 = arith.constant 0 : index
    %c0_23 = arith.constant 0 : index
    %37 = vector.load %arg7[%c0_21, %c0_22, %c0_23] : memref<1x8x128xf32, #tpu.memory_space<vmem>>, vector<1x8x128xf32>
    %38 = vector.shape_cast %37 : vector<1x8x128xf32> to vector<8x128xf32>
    %39 = vector.shape_cast %36 : vector<8x128xf32> to vector<1x8x128xf32>
    tpu.vector_store %arg7[%c0_21, %c0_22, %c0_23], %39 {strides = array<i32>} : memref<1x8x128xf32, #tpu.memory_space<vmem>>, vector<1x8x128xf32>,
    return
  }
  func.func @transform_0(%arg0: i32, %arg1: i32) -> (i32, i32) {
    %c0_i32 = arith.constant 0 : i32
    %c0_i32_0 = arith.constant 0 : i32
    return %arg1, %c0_i32 : i32, i32
  }
  func.func @transform_1(%arg0: i32, %arg1: i32) -> (i32, i32, i32) {
    %c0_i32 = arith.constant 0 : i32
    %c0_i32_0 = arith.constant 0 : i32
    %c0_i32_1 = arith.constant 0 : i32
    return %arg0, %c0_i32, %c0_i32_0 : i32, i32, i32
  }
  func.func @transform_2(%arg0: i32, %arg1: i32) -> (i32, i32, i32) {
    %c0_i32 = arith.constant 0 : i32
    %c0_i32_0 = arith.constant 0 : i32
    %c0_i32_1 = arith.constant 0 : i32
    return %arg0, %c0_i32, %c0_i32_0 : i32, i32, i32
  }
  func.func @transform_3(%arg0: i32, %arg1: i32) -> (i32, i32, i32) {
    %c0_i32 = arith.constant 0 : i32
    %c0_i32_0 = arith.constant 0 : i32
    %c0_i32_1 = arith.constant 0 : i32
    return %arg0, %c0_i32, %c0_i32_0 : i32, i32, i32
  }
  func.func @transform_4(%arg0: i32, %arg1: i32) -> (i32, i32, i32) {
    %c0_i32 = arith.constant 0 : i32
    %c0_i32_0 = arith.constant 0 : i32
    %c0_i32_1 = arith.constant 0 : i32
    return %arg0, %c0_i32, %c0_i32_0 : i32, i32, i32
  }
  func.func @transform_5(%arg0: i32, %arg1: i32) -> (i32, i32, i32) {
    %c0_i32 = arith.constant 0 : i32
    %c0_i32_0 = arith.constant 0 : i32
    return %arg0, %arg1, %c0_i32 : i32, i32, i32
  }
}

</mosaic_0001>

<llo_original>
// kernel: _lambda_.4
$region0: #{_lambda_.4}
  #allocation0 [shape = 'u32[]', space=smem, size = 0x4, offset = 0x4, fixed_abs, tag = 'smem constant byte address 0x4 - core index']
  #allocation1 [shape = 'u32[144,128]{1,0:T(1,128)}', space=vmem, size = 0x12000, scoped, tag = 'internal scratch']
  %s0 = inlined_call_operand.vmem [shape: bf16[400,256], index: 0, kind: input, shape index: {}]
  %s1 = inlined_call_operand.vmem [shape: bf16[256,32], index: 1, kind: input, shape index: {}]
  %s2 = inlined_call_operand.vmem [shape: f32[1,32], index: 2, kind: input, shape index: {}]
  %s3 = inlined_call_operand.vmem [shape: bf16[400,32], index: 3, kind: output, shape index: {}]
  %s4 = sld [smem:[#allocation0]]
  $region45: #{_lambda_.4} parent=0
    _
  %s6 = ssub.s32 1, %s4
  %s7 = scalar_select 0, %s6, %s4
  loop: start=0, step=1, limit=4
  $region2: #{_lambda_.4} parent=0 // loop_pre_header
    _
  $region3: #{_lambda_.4} parent=0 // loop_header
    %s9 = sphi 0, %s13
    %p10 = scmp.ge.s32.totalorder %s9, 4
    %s19 = sphi 0, %s21
    %s22 = sphi 0, %s19
    %s23 = sphi 0, %s22
    %s39 = sphi 0, %s23
    %s43 = sphi 0, %s43
    %s45 = sphi 0, %s43
    %s46 = sphi 0, %s45
    %s60 = sphi 0, %s46
    %s64 = sphi 0, %s64
    %s66 = sphi 0, %s64
    %s67 = sphi 0, %s66
    %s81 = sphi 0, %s67
    %s87 = sphi 0, %s89
    %s90 = sphi 0, %s87
    %s91 = sphi 0, %s90
    %s107 = sphi 0, %s91
  $region4: #{_lambda_.4} parent=0 // loop_header_branch
    %12 = sbr.rel (%p10) target = $region8
  $region5: #{_lambda_.4} parent=0 // loop_body
    %s14 = ssub.s32 %s9, 1
    %s15 = ssub.s32 %s9, 2
    %s16 = sadd.s32 %s9, 1
    %s17 = ssub.s32 %s9, %s16
    %p18 = scmp.eq.s32.totalorder %s17, 0
    %s20 = sadd.s32 %s19, 1
    %s21 = scalar_select %p18, %s19, %s20
    %p24 = pneg %p18
    %p25 = scmp.eq.s32.totalorder %s9, 1
    %p26 = por %p24, %p25
    %p27 = scmp.ne.s32.totalorder %s19, %s22
    %p28 = scmp.eq.s32.totalorder %s9, 0
    %p29 = por %p27, %p28
    %p30 = scmp.ne.s32.totalorder %s19, %s22
    %p31 = scmp.eq.s32.totalorder %s14, 1
    %p32 = por %p30, %p31
    %p33 = scmp.ne.s32.totalorder %s22, %s23
    %p34 = scmp.eq.s32.totalorder %s14, 0
    %p35 = por %p33, %p34
    %p36 = scmp.ne.s32.totalorder %s22, %s23
    %p37 = scmp.eq.s32.totalorder %s15, 1
    %p38 = por %p36, %p37
    %p40 = scmp.ne.s32.totalorder %s23, %s39
    %p41 = scmp.eq.s32.totalorder %s15, 0
    %p42 = por %p40, %p41
    %s44 = sadd.s32 %s43, 1
    %p47 = scmp.eq.s32.totalorder %s9, 1
    %p48 = scmp.ne.s32.totalorder %s43, %s45
    %p49 = scmp.eq.s32.totalorder %s9, 0
    %p50 = por %p48, %p49
    %p51 = scmp.ne.s32.totalorder %s43, %s45
    %p52 = scmp.eq.s32.totalorder %s14, 1
    %p53 = por %p51, %p52
    %p54 = scmp.ne.s32.totalorder %s45, %s46
    %p55 = scmp.eq.s32.totalorder %s14, 0
    %p56 = por %p54, %p55
    %p57 = scmp.ne.s32.totalorder %s45, %s46
    %p58 = scmp.eq.s32.totalorder %s15, 1
    %p59 = por %p57, %p58
    %p61 = scmp.ne.s32.totalorder %s46, %s60
    %p62 = scmp.eq.s32.totalorder %s15, 0
    %p63 = por %p61, %p62
    %s65 = sadd.s32 %s64, 1
    %p68 = scmp.eq.s32.totalorder %s9, 1
    %p69 = scmp.ne.s32.totalorder %s64, %s66
    %p70 = scmp.eq.s32.totalorder %s9, 0
    %p71 = por %p69, %p70
    %p72 = scmp.ne.s32.totalorder %s64, %s66
    %p73 = scmp.eq.s32.totalorder %s14, 1
    %p74 = por %p72, %p73
    %p75 = scmp.ne.s32.totalorder %s66, %s67
    %p76 = scmp.eq.s32.totalorder %s14, 0
    %p77 = por %p75, %p76
    %p78 = scmp.ne.s32.totalorder %s66, %s67
    %p79 = scmp.eq.s32.totalorder %s15, 1
    %p80 = por %p78, %p79
    %p82 = scmp.ne.s32.totalorder %s67, %s81
    %p83 = scmp.eq.s32.totalorder %s15, 0
    %p84 = por %p82, %p83
    %s85 = ssub.s32 %s9, %s16
    %p86 = scmp.eq.s32.totalorder %s85, 0
    %s88 = sadd.s32 %s87, 1
    %s89 = scalar_select %p86, %s87, %s88
    %p92 = pneg %p86
    %p93 = scmp.eq.s32.totalorder %s9, 1
    %p94 = por %p92, %p93
    %p95 = scmp.ne.s32.totalorder %s87, %s90
    %p96 = scmp.eq.s32.totalorder %s9, 0
    %p97 = por %p95, %p96
    %p98 = scmp.ne.s32.totalorder %s87, %s90
    %p99 = scmp.eq.s32.totalorder %s14, 1
    %p100 = por %p98, %p99
    %p101 = scmp.ne.s32.totalorder %s90, %s91
    %p102 = scmp.eq.s32.totalorder %s14, 0
    %p103 = por %p101, %p102
    %p104 = scmp.ne.s32.totalorder %s90, %s91
    %p105 = scmp.eq.s32.totalorder %s15, 1
    %p106 = por %p104, %p105
    %p108 = scmp.ne.s32.totalorder %s91, %s107
    %p109 = scmp.eq.s32.totalorder %s15, 0
    %p110 = por %p108, %p109
    %p111 = scmp.le.s32.totalorder 1, %s9
    %p112 = scmp.lt.s32.totalorder %s9, 3
    %p113 = pnand %p111, %p112
    %p114 = pneg %p113
    // Predicated region
    $region9: #{_lambda_.4} parent=5 // pred_check
      _
    $region10: #{_lambda_.4} parent=5 // pred_check_branch
      %116 = sbr.rel (%p113) target = $region12
    $region11: #{_lambda_.4} parent=5 // pred_region
      %s117 = ssub.s32 %s9, 1
      // Predicated region
      $region13: #{_lambda_.4} parent=11 // pred_check
        %p118 = pneg %p56
      $region14: #{_lambda_.4} parent=11 // pred_check_branch
        %120 = sbr.rel (%p118) target = $region16
      $region15: #{_lambda_.4} parent=11 // pred_region
        _
      $region16: #{_lambda_.4} parent=11 // pred_fallthru
        _
      // Predicated region
      $region17: #{_lambda_.4} parent=11 // pred_check
        %p121 = pneg %p77
      $region18: #{_lambda_.4} parent=11 // pred_check_branch
        %123 = sbr.rel (%p121) target = $region20
      $region19: #{_lambda_.4} parent=11 // pred_region
        _
      $region20: #{_lambda_.4} parent=11 // pred_fallthru
        _
    $region12: #{_lambda_.4} parent=5 // pred_fallthru
      _
    %p124 = scmp.lt.s32.totalorder %s9, 2
    // Predicated region
    $region21: #{_lambda_.4} parent=5 // pred_check
      %p125 = pneg %p124
    $region22: #{_lambda_.4} parent=5 // pred_check_branch
      %127 = sbr.rel (%p125) target = $region24
    $region23: #{_lambda_.4} parent=5 // pred_region
      // Predicated region
      $region25: #{_lambda_.4} parent=23 // pred_check
        %p128 = pneg %p29
      $region26: #{_lambda_.4} parent=23 // pred_check_branch
        %130 = sbr.rel (%p128) target = $region28
      $region27: #{_lambda_.4} parent=23 // pred_region
        %s131 = smul.u32 25, %s9
        %p132 = scmp.lt.s32.totalorder %s131, 49
        %s133 = scalar_select %p132, %s131, 49
        %s134 = smul.addr %s133, 2
        %s135 = smul.addr %s134, 4
        %s136 = scalar_lea.vmem %s0, %s135
        %s137 = smul.u32 25, %s9
      $region28: #{_lambda_.4} parent=23 // pred_fallthru
        _
    $region24: #{_lambda_.4} parent=5 // pred_fallthru
      _
    %p138 = scmp.le.s32.totalorder 1, %s9
    %p139 = scmp.lt.s32.totalorder %s9, 3
    %p140 = pnand %p138, %p139
    %p141 = pneg %p140
    // Predicated region
    $region29: #{_lambda_.4} parent=5 // pred_check
      _
    $region30: #{_lambda_.4} parent=5 // pred_check_branch
      %143 = sbr.rel (%p140) target = $region32
    $region31: #{_lambda_.4} parent=5 // pred_region
      %s144 = ssub.s32 %s9, 1
      %s145 = smul.u32 25, %s14
      %p146 = scmp.lt.s32.totalorder %s145, 49
      %s147 = scalar_select %p146, %s145, 49
      %s148 = smul.addr %s147, 2
      %s149 = smul.addr %s148, 4
      %s150 = scalar_lea.vmem %s0, %s149
      %p151 = pneg %p35
      %p152 = pneg %p32
      %p153 = pneg %p56
      %p154 = pneg %p53
      %p155 = pneg %p77
      %p156 = pneg %p74
      %p157 = pneg %p103
      %p158 = pneg %p100
      %s159 = smul.u32 25, %s14
      %p160 = scmp.lt.s32.totalorder %s159, 49
      %s161 = scalar_select %p160, %s159, 49
      %s162 = smul.addr %s161, 4
      %s163 = scalar_lea.vmem %s3, %s162
      %s164 = smul.u32 25, %s14
      %p165 = scmp.lt.s32.totalorder %s164, 49
      %s166 = scalar_select %p165, %s164, 49
      %s167 = smul.addr %s166, 2
      %s168 = smul.addr %s167, 4
      %s169 = scalar_lea.vmem %s0, %s168
      %s170 = smul.u32 25, %s14
      %s171 = smul.u32 25, %s14
      %p172 = scmp.lt.s32.totalorder %s171, 49
      %s173 = scalar_select %p172, %s171, 49
      %s174 = smul.addr %s173, 4
      %s175 = scalar_lea.vmem %s3, %s174
      %s176 = smul.u32 25, %s14
      %v178 = vld [vmem:[%s169] sm:$0xff]
      %v179 = vld [vmem:[%s169 + $0x8] sm:$0xff]
      %v180 = vld [vmem:[%s169 + $0x10] sm:$0xff]
      %v181 = vld [vmem:[%s169 + $0x18] sm:$0xff]
      %v182 = vld [vmem:[%s169 + $0x20] sm:$0xff]
      %v183 = vld [vmem:[%s169 + $0x28] sm:$0xff]
      %v184 = vld [vmem:[%s169 + $0x30] sm:$0xff]
      %v185 = vld [vmem:[%s169 + $0x38] sm:$0xff]
      %v186 = vld [vmem:[%s169 + $0x40] sm:$0xff]
      %v187 = vld [vmem:[%s169 + $0x48] sm:$0xff]
      %v188 = vld [vmem:[%s169 + $0x50] sm:$0xff]
      %v189 = vld [vmem:[%s169 + $0x58] sm:$0xff]
      %v190 = vld [vmem:[%s169 + $0x60] sm:$0xff]
      %v191 = vld [vmem:[%s169 + $0x68] sm:$0xff]
      %v192 = vld [vmem:[%s169 + $0x70] sm:$0xff]
      %v193 = vld [vmem:[%s169 + $0x78] sm:$0xff]
      %v194 = vld [vmem:[%s169 + $0x80] sm:$0xff]
      %v195 = vld [vmem:[%s169 + $0x88] sm:$0xff]
      %v196 = vld [vmem:[%s169 + $0x90] sm:$0xff]
      %v197 = vld [vmem:[%s169 + $0x98] sm:$0xff]
      %v198 = vld [vmem:[%s169 + $0xa0] sm:$0xff]
      %v199 = vld [vmem:[%s169 + $0xa8] sm:$0xff]
      %v200 = vld [vmem:[%s169 + $0xb0] sm:$0xff]
      %v201 = vld [vmem:[%s169 + $0xb8] sm:$0xff]
      %v202 = vld [vmem:[%s169 + $0xc0] sm:$0xff]
      %v203 = vld [vmem:[%s1] sm:$0xf]
      %v204 = vld [vmem:[%s1 + $0x4] sm:$0xf]
      %v205 = vld [vmem:[%s1 + $0x8] sm:$0xf]
      %v206 = vld [vmem:[%s1 + $0xc] sm:$0xf]
      %v207 = vld [vmem:[%s1 + $0x10] sm:$0xf]
      %v208 = vld [vmem:[%s1 + $0x14] sm:$0xf]
      %v209 = vld [vmem:[%s1 + $0x18] sm:$0xf]
      %v210 = vld [vmem:[%s1 + $0x1c] sm:$0xf]
      %v211 = vld [vmem:[%s1 + $0x20] sm:$0xf]
      %v212 = vld [vmem:[%s1 + $0x24] sm:$0xf]
      %v213 = vld [vmem:[%s1 + $0x28] sm:$0xf]
      %v214 = vld [vmem:[%s1 + $0x2c] sm:$0xf]
      %v215 = vld [vmem:[%s1 + $0x30] sm:$0xf]
      %v216 = vld [vmem:[%s1 + $0x34] sm:$0xf]
      %v217 = vld [vmem:[%s1 + $0x38] sm:$0xf]
      %v218 = vld [vmem:[%s1 + $0x3c] sm:$0xf]
      %v219 = vld [vmem:[%s1 + $0x40] sm:$0xf]
      %v220 = vld [vmem:[%s1 + $0x44] sm:$0xf]
      %v221 = vld [vmem:[%s1 + $0x48] sm:$0xf]
      %v222 = vld [vmem:[%s1 + $0x4c] sm:$0xf]
      %v223 = vld [vmem:[%s1 + $0x50] sm:$0xf]
      %v224 = vld [vmem:[%s1 + $0x54] sm:$0xf]
      %v225 = vld [vmem:[%s1 + $0x58] sm:$0xf]
      %v226 = vld [vmem:[%s1 + $0x5c] sm:$0xf]
      %v227 = vld [vmem:[%s1 + $0x60] sm:$0xf]
      %v228 = vld [vmem:[%s1 + $0x64] sm:$0xf]
      %v229 = vld [vmem:[%s1 + $0x68] sm:$0xf]
      %v230 = vld [vmem:[%s1 + $0x6c] sm:$0xf]
      %v231 = vld [vmem:[%s1 + $0x70] sm:$0xf]
      %v232 = vld [vmem:[%s1 + $0x74] sm:$0xf]
      %v233 = vld [vmem:[%s1 + $0x78] sm:$0xf]
      %v234 = vld [vmem:[%s1 + $0x7c] sm:$0xf]
      %v235 = vld [vmem:[%s2] sm:$0x1]
      %v237 = vlaneseq
      %v238 = vshrl.u32 %v237, 7
      %v239 = vsub.s32 0, %v238
      %v240 = vrot.slane %v235, %v239
      %v267 = vunpack.c.l.b16 %v178
      %v268 = vunpack.c.h.b16 %v178
      %v269 = vunpack.c.l.b16 %v179
      %v270 = vunpack.c.h.b16 %v179
      %v271 = vunpack.c.l.b16 %v180
      %v272 = vunpack.c.h.b16 %v180
      %v273 = vunpack.c.l.b16 %v181
      %v274 = vunpack.c.h.b16 %v181
      %v275 = vunpack.c.l.b16 %v182
      %v276 = vunpack.c.h.b16 %v182
      %v277 = vunpack.c.l.b16 %v183
      %v278 = vunpack.c.h.b16 %v183
      %v279 = vunpack.c.l.b16 %v184
      %v280 = vunpack.c.h.b16 %v184
      %v281 = vunpack.c.l.b16 %v185
      %v282 = vunpack.c.h.b16 %v185
      %v283 = vunpack.c.l.b16 %v186
      %v284 = vunpack.c.h.b16 %v186
      %v285 = vunpack.c.l.b16 %v187
      %v286 = vunpack.c.h.b16 %v187
      %v287 = vunpack.c.l.b16 %v188
      %v288 = vunpack.c.h.b16 %v188
      %v289 = vunpack.c.l.b16 %v189
      %v290 = vunpack.c.h.b16 %v189
      %v291 = vunpack.c.l.b16 %v190
      %v292 = vunpack.c.h.b16 %v190
      %v293 = vunpack.c.l.b16 %v191
      %v294 = vunpack.c.h.b16 %v191
      %v295 = vunpack.c.l.b16 %v192
      %v296 = vunpack.c.h.b16 %v192
      %v297 = vunpack.c.l.b16 %v193
      %v298 = vunpack.c.h.b16 %v193
      %v299 = vunpack.c.l.b16 %v194
      %v300 = vunpack.c.h.b16 %v194
      %v301 = vunpack.c.l.b16 %v195
      %v302 = vunpack.c.h.b16 %v195
      %v303 = vunpack.c.l.b16 %v196
      %v304 = vunpack.c.h.b16 %v196
      %v305 = vunpack.c.l.b16 %v197
      %v306 = vunpack.c.h.b16 %v197
      %v307 = vunpack.c.l.b16 %v198
      %v308 = vunpack.c.h.b16 %v198
      %v309 = vunpack.c.l.b16 %v199
      %v310 = vunpack.c.h.b16 %v199
      %v311 = vunpack.c.l.b16 %v200
      %v312 = vunpack.c.h.b16 %v200
      %v313 = vunpack.c.l.b16 %v201
      %v314 = vunpack.c.h.b16 %v201
      %v315 = vunpack.c.l.b16 %v202
      %v316 = vunpack.c.h.b16 %v202
      %v317 = vpack.c.b16 %v269, %v267
      %v318 = vpack.c.b16 %v270, %v268
      %v319 = vpack.c.b16 %v273, %v271
      %v320 = vpack.c.b16 %v274, %v272
      %v321 = vpack.c.b16 %v277, %v275
      %v322 = vpack.c.b16 %v278, %v276
      %v323 = vpack.c.b16 %v281, %v279
      %v324 = vpack.c.b16 %v282, %v280
      %v325 = vpack.c.b16 %v285, %v283
      %v326 = vpack.c.b16 %v286, %v284
      %v327 = vpack.c.b16 %v289, %v287
      %v328 = vpack.c.b16 %v290, %v288
      %v329 = vpack.c.b16 %v293, %v291
      %v330 = vpack.c.b16 %v294, %v292
      %v331 = vpack.c.b16 %v297, %v295
      %v332 = vpack.c.b16 %v298, %v296
      %v333 = vpack.c.b16 %v301, %v299
      %v334 = vpack.c.b16 %v302, %v300
      %v335 = vpack.c.b16 %v305, %v303
      %v336 = vpack.c.b16 %v306, %v304
      %v337 = vpack.c.b16 %v309, %v307
      %v338 = vpack.c.b16 %v310, %v308
      %v339 = vpack.c.b16 %v313, %v311
      %v340 = vpack.c.b16 %v314, %v312
      %v341 = vpack.c.b16 %v315, %v315
      %v342 = vpack.c.b16 %v316, %v316
      %v401 = vunpack.c.l.b16 %v203
      %v402 = vunpack.c.l.b16 %v204
      %v403 = vunpack.c.l.b16 %v205
      %v404 = vunpack.c.l.b16 %v206
      %v405 = vunpack.c.l.b16 %v207
      %v406 = vunpack.c.l.b16 %v208
      %v407 = vunpack.c.l.b16 %v209
      %v408 = vunpack.c.l.b16 %v210
      %v409 = vunpack.c.l.b16 %v211
      %v410 = vunpack.c.l.b16 %v212
      %v411 = vunpack.c.l.b16 %v213
      %v412 = vunpack.c.l.b16 %v214
      %v413 = vunpack.c.l.b16 %v215
      %v414 = vunpack.c.l.b16 %v216
      %v415 = vunpack.c.l.b16 %v217
      %v416 = vunpack.c.l.b16 %v218
      %v417 = vunpack.c.l.b16 %v219
      %v418 = vunpack.c.l.b16 %v220
      %v419 = vunpack.c.l.b16 %v221
      %v420 = vunpack.c.l.b16 %v222
      %v421 = vunpack.c.l.b16 %v223
      %v422 = vunpack.c.l.b16 %v224
      %v423 = vunpack.c.l.b16 %v225
      %v424 = vunpack.c.l.b16 %v226
      %v425 = vunpack.c.l.b16 %v227
      %v426 = vunpack.c.l.b16 %v228
      %v427 = vunpack.c.l.b16 %v229
      %v428 = vunpack.c.l.b16 %v230
      %v429 = vunpack.c.l.b16 %v231
      %v430 = vunpack.c.l.b16 %v232
      %v431 = vunpack.c.l.b16 %v233
      %v432 = vunpack.c.l.b16 %v234
      %v433 = vpack.c.b16 %v402, %v401
      %v434 = vpack.c.b16 %v404, %v403
      %v435 = vpack.c.b16 %v406, %v405
      %v436 = vpack.c.b16 %v408, %v407
      %v437 = vpack.c.b16 %v410, %v409
      %v438 = vpack.c.b16 %v412, %v411
      %v439 = vpack.c.b16 %v414, %v413
      %v440 = vpack.c.b16 %v416, %v415
      %v441 = vpack.c.b16 %v418, %v417
      %v442 = vpack.c.b16 %v420, %v419
      %v443 = vpack.c.b16 %v422, %v421
      %v444 = vpack.c.b16 %v424, %v423
      %v445 = vpack.c.b16 %v426, %v425
      %v446 = vpack.c.b16 %v428, %v427
      %v447 = vpack.c.b16 %v430, %v429
      %v448 = vpack.c.b16 %v432, %v431
      %465 = vmatprep.subr.bf16.mxu0 0
      %466 = vmatpush1.bf16.msra.mxu0 %v433
      %467 = vmatprep.subr.bf16.mxu0 0
      %468 = vmatpush1.bf16.msra.mxu0 %v434
      %469 = vmatprep.subr.bf16.mxu0 0
      %470 = vmatpush1.bf16.msra.mxu0 %v435
      %471 = vmatprep.subr.bf16.mxu0 0
      %472 = vmatpush1.bf16.msra.mxu0 %v436
      %473 = vmatprep.subr.bf16.mxu0 0
      %474 = vmatpush1.bf16.msra.mxu0 %v437
      %475 = vmatprep.subr.bf16.mxu0 0
      %476 = vmatpush1.bf16.msra.mxu0 %v438
      %477 = vmatprep.subr.bf16.mxu0 0
      %478 = vmatpush1.bf16.msra.mxu0 %v439
      %479 = vmatprep.subr.bf16.mxu0 0
      %480 = vmatpush1.bf16.msra.mxu0 %v440
      %481 = vmatprep.subr.bf16.mxu0 0
      %482 = vmatpush1.bf16.msra.mxu0 %v441
      %483 = vmatprep.subr.bf16.mxu0 0
      %484 = vmatpush1.bf16.msra.mxu0 %v442
      %485 = vmatprep.subr.bf16.mxu0 0
      %486 = vmatpush1.bf16.msra.mxu0 %v443
      %487 = vmatprep.subr.bf16.mxu0 0
      %488 = vmatpush1.bf16.msra.mxu0 %v444
      %489 = vmatprep.subr.bf16.mxu0 0
      %490 = vmatpush1.bf16.msra.mxu0 %v445
      %491 = vmatprep.subr.bf16.mxu0 0
      %492 = vmatpush1.bf16.msra.mxu0 %v446
      %493 = vmatprep.subr.bf16.mxu0 0
      %494 = vmatpush1.bf16.msra.mxu0 %v447
      %495 = vmatprep.subr.bf16.mxu0 0
      %496 = vmatpush1.bf16.msra.mxu0 %v448
      %497 = vmatprep.mubr.bf16.mxu0 %v318
      %498 = vmatmul.mubr.bf16.gmra.mrb[0].mxu0 %v317
      %v499 = vpop.f32.mrb[0].mxu0
      %v500 = vadd.f32 %v240, %v499
      %v501 = vpop.f32.mrb[0].mxu0
      %v502 = vpop.f32.mrb[0].mxu0
      %v503 = vadd.f32 %v240, %v502
      %v504 = vpop.f32.mrb[0].mxu0
      %505 = vmatprep.mubr.bf16.mxu0 %v320
      %506 = vmatmul.mubr.bf16.gmra.mrb[0].mxu0 %v319
      %v507 = vpop.f32.mrb[0].mxu0
      %v508 = vadd.f32 %v240, %v507
      %v509 = vpop.f32.mrb[0].mxu0
      %v510 = vpop.f32.mrb[0].mxu0
      %v511 = vadd.f32 %v240, %v510
      %v512 = vpop.f32.mrb[0].mxu0
      %513 = vmatprep.mubr.bf16.mxu0 %v322
      %514 = vmatmul.mubr.bf16.gmra.mrb[0].mxu0 %v321
      %v515 = vpop.f32.mrb[0].mxu0
      %v516 = vadd.f32 %v240, %v515
      %v517 = vpop.f32.mrb[0].mxu0
      %v518 = vpop.f32.mrb[0].mxu0
      %v519 = vadd.f32 %v240, %v518
      %v520 = vpop.f32.mrb[0].mxu0
      %521 = vmatprep.mubr.bf16.mxu0 %v324
      %522 = vmatmul.mubr.bf16.gmra.mrb[0].mxu0 %v323
      %v523 = vpop.f32.mrb[0].mxu0
      %v524 = vadd.f32 %v240, %v523
      %v525 = vpop.f32.mrb[0].mxu0
      %v526 = vpop.f32.mrb[0].mxu0
      %v527 = vadd.f32 %v240, %v526
      %v528 = vpop.f32.mrb[0].mxu0
      %529 = vmatprep.mubr.bf16.mxu0 %v326
      %530 = vmatmul.mubr.bf16.gmra.mrb[0].mxu0 %v325
      %v531 = vpop.f32.mrb[0].mxu0
      %v532 = vadd.f32 %v240, %v531
      %v533 = vpop.f32.mrb[0].mxu0
      %v534 = vpop.f32.mrb[0].mxu0
      %v535 = vadd.f32 %v240, %v534
      %v536 = vpop.f32.mrb[0].mxu0
      %537 = vmatprep.mubr.bf16.mxu0 %v328
      %538 = vmatmul.mubr.bf16.gmra.mrb[0].mxu0 %v327
      %v539 = vpop.f32.mrb[0].mxu0
      %v540 = vadd.f32 %v240, %v539
      %v541 = vpop.f32.mrb[0].mxu0
      %v542 = vpop.f32.mrb[0].mxu0
      %v543 = vadd.f32 %v240, %v542
      %v544 = vpop.f32.mrb[0].mxu0
      %545 = vmatprep.mubr.bf16.mxu0 %v330
      %546 = vmatmul.mubr.bf16.gmra.mrb[0].mxu0 %v329
      %v547 = vpop.f32.mrb[0].mxu0
      %v548 = vadd.f32 %v240, %v547
      %v549 = vpop.f32.mrb[0].mxu0
      %v550 = vpop.f32.mrb[0].mxu0
      %v551 = vadd.f32 %v240, %v550
      %v552 = vpop.f32.mrb[0].mxu0
      %553 = vmatprep.mubr.bf16.mxu0 %v332
      %554 = vmatmul.mubr.bf16.gmra.mrb[0].mxu0 %v331
      %v555 = vpop.f32.mrb[0].mxu0
      %v556 = vadd.f32 %v240, %v555
      %v557 = vpop.f32.mrb[0].mxu0
      %v558 = vpop.f32.mrb[0].mxu0
      %v559 = vadd.f32 %v240, %v558
      %v560 = vpop.f32.mrb[0].mxu0
      %561 = vmatprep.mubr.bf16.mxu0 %v334
      %562 = vmatmul.mubr.bf16.gmra.mrb[0].mxu0 %v333
      %v563 = vpop.f32.mrb[0].mxu0
      %v564 = vadd.f32 %v240, %v563
      %v565 = vpop.f32.mrb[0].mxu0
      %v566 = vpop.f32.mrb[0].mxu0
      %v567 = vadd.f32 %v240, %v566
      %v568 = vpop.f32.mrb[0].mxu0
      %569 = vmatprep.mubr.bf16.mxu0 %v336
      %570 = vmatmul.mubr.bf16.gmra.mrb[0].mxu0 %v335
      %v571 = vpop.f32.mrb[0].mxu0
      %v572 = vadd.f32 %v240, %v571
      %v573 = vpop.f32.mrb[0].mxu0
      %v574 = vpop.f32.mrb[0].mxu0
      %v575 = vadd.f32 %v240, %v574
      %v576 = vpop.f32.mrb[0].mxu0
      %577 = vmatprep.mubr.bf16.mxu0 %v338
      %578 = vmatmul.mubr.bf16.gmra.mrb[0].mxu0 %v337
      %v579 = vpop.f32.mrb[0].mxu0
      %v580 = vadd.f32 %v240, %v579
      %v581 = vpop.f32.mrb[0].mxu0
      %v582 = vpop.f32.mrb[0].mxu0
      %v583 = vadd.f32 %v240, %v582
      %v584 = vpop.f32.mrb[0].mxu0
      %585 = vmatprep.mubr.bf16.mxu0 %v340
      %586 = vmatmul.mubr.bf16.gmra.mrb[0].mxu0 %v339
      %v587 = vpop.f32.mrb[0].mxu0
      %v588 = vadd.f32 %v240, %v587
      %v589 = vpop.f32.mrb[0].mxu0
      %v590 = vpop.f32.mrb[0].mxu0
      %v591 = vadd.f32 %v240, %v590
      %v592 = vpop.f32.mrb[0].mxu0
      %593 = vmatprep.mubr.bf16.mxu0 %v342
      %594 = vmatmul.mubr.bf16.gmra.mrb[0].mxu0 %v341
      %v595 = vpop.f32.mrb[0].mxu0
      %v596 = vadd.f32 %v240, %v595
      %v597 = vpop.f32.mrb[0].mxu0
      %v598 = vpop.f32.mrb[0].mxu0
      %v599 = vpop.f32.mrb[0].mxu0
      %600 = vdwg.mxu0
      %v601 = vmax.f32 %v500, 0.0
      %v602 = vmax.f32 %v503, 0.0
      %v603 = vmax.f32 %v508, 0.0
      %v604 = vmax.f32 %v511, 0.0
      %v605 = vmax.f32 %v516, 0.0
      %v606 = vmax.f32 %v519, 0.0
      %v607 = vmax.f32 %v524, 0.0
      %v608 = vmax.f32 %v527, 0.0
      %v609 = vmax.f32 %v532, 0.0
      %v610 = vmax.f32 %v535, 0.0
      %v611 = vmax.f32 %v540, 0.0
      %v612 = vmax.f32 %v543, 0.0
      %v613 = vmax.f32 %v548, 0.0
      %v614 = vmax.f32 %v551, 0.0
      %v615 = vmax.f32 %v556, 0.0
      %v616 = vmax.f32 %v559, 0.0
      %v617 = vmax.f32 %v564, 0.0
      %v618 = vmax.f32 %v567, 0.0
      %v619 = vmax.f32 %v572, 0.0
      %v620 = vmax.f32 %v575, 0.0
      %v621 = vmax.f32 %v580, 0.0
      %v622 = vmax.f32 %v583, 0.0
      %v623 = vmax.f32 %v588, 0.0
      %v624 = vmax.f32 %v591, 0.0
      %v625 = vmax.f32 %v596, 0.0
      %v626 = vpack.c.bf16 %v602, %v601
      %v627 = vpack.c.bf16 %v604, %v603
      %v628 = vpack.c.bf16 %v606, %v605
      %v629 = vpack.c.bf16 %v608, %v607
      %v630 = vpack.c.bf16 %v610, %v609
      %v631 = vpack.c.bf16 %v612, %v611
      %v632 = vpack.c.bf16 %v614, %v613
      %v633 = vpack.c.bf16 %v616, %v615
      %v634 = vpack.c.bf16 %v618, %v617
      %v635 = vpack.c.bf16 %v620, %v619
      %v636 = vpack.c.bf16 %v622, %v621
      %v637 = vpack.c.bf16 %v624, %v623
      %v638 = vpack.c.bf16 %v625, %v625
      %v652 = vunpack.c.l.b16 %v626
      %v653 = vunpack.c.h.b16 %v626
      %v654 = vunpack.c.l.b16 %v627
      %v655 = vunpack.c.h.b16 %v627
      %v656 = vunpack.c.l.b16 %v628
      %v657 = vunpack.c.h.b16 %v628
      %v658 = vunpack.c.l.b16 %v629
      %v659 = vunpack.c.h.b16 %v629
      %v660 = vunpack.c.l.b16 %v630
      %v661 = vunpack.c.h.b16 %v630
      %v662 = vunpack.c.l.b16 %v631
      %v663 = vunpack.c.h.b16 %v631
      %v664 = vunpack.c.l.b16 %v632
      %v665 = vunpack.c.h.b16 %v632
      %v666 = vunpack.c.l.b16 %v633
      %v667 = vunpack.c.h.b16 %v633
      %v668 = vunpack.c.l.b16 %v634
      %v669 = vunpack.c.h.b16 %v634
      %v670 = vunpack.c.l.b16 %v635
      %v671 = vunpack.c.h.b16 %v635
      %v672 = vunpack.c.l.b16 %v636
      %v673 = vunpack.c.h.b16 %v636
      %v674 = vunpack.c.l.b16 %v637
      %v675 = vunpack.c.h.b16 %v637
      %v676 = vunpack.c.l.b16 %v638
      %v677 = vpack.c.b16 %v652, %v652
      %v678 = vpack.c.b16 %v653, %v653
      %v679 = vpack.c.b16 %v654, %v654
      %v680 = vpack.c.b16 %v655, %v655
      %v681 = vpack.c.b16 %v656, %v656
      %v682 = vpack.c.b16 %v657, %v657
      %v683 = vpack.c.b16 %v658, %v658
      %v684 = vpack.c.b16 %v659, %v659
      %v685 = vpack.c.b16 %v660, %v660
      %v686 = vpack.c.b16 %v661, %v661
      %v687 = vpack.c.b16 %v662, %v662
      %v688 = vpack.c.b16 %v663, %v663
      %v689 = vpack.c.b16 %v664, %v664
      %v690 = vpack.c.b16 %v665, %v665
      %v691 = vpack.c.b16 %v666, %v666
      %v692 = vpack.c.b16 %v667, %v667
      %v693 = vpack.c.b16 %v668, %v668
      %v694 = vpack.c.b16 %v669, %v669
      %v695 = vpack.c.b16 %v670, %v670
      %v696 = vpack.c.b16 %v671, %v671
      %v697 = vpack.c.b16 %v672, %v672
      %v698 = vpack.c.b16 %v673, %v673
      %v699 = vpack.c.b16 %v674, %v674
      %v700 = vpack.c.b16 %v675, %v675
      %v701 = vpack.c.b16 %v676, %v676
      %vm727 = vcmask 257024
      %728 = vst.msk [vmem:[%s175] sm:$0xf] %vm727, %v677
      %729 = vst.msk [vmem:[%s175 + $0x4] sm:$0xf] %vm727, %v678
      %730 = vst.msk [vmem:[%s175 + $0x8] sm:$0xf] %vm727, %v679
      %731 = vst.msk [vmem:[%s175 + $0xc] sm:$0xf] %vm727, %v680
      %732 = vst.msk [vmem:[%s175 + $0x10] sm:$0xf] %vm727, %v681
      %733 = vst.msk [vmem:[%s175 + $0x14] sm:$0xf] %vm727, %v682
      %734 = vst.msk [vmem:[%s175 + $0x18] sm:$0xf] %vm727, %v683
      %735 = vst.msk [vmem:[%s175 + $0x1c] sm:$0xf] %vm727, %v684
      %736 = vst.msk [vmem:[%s175 + $0x20] sm:$0xf] %vm727, %v685
      %737 = vst.msk [vmem:[%s175 + $0x24] sm:$0xf] %vm727, %v686
      %738 = vst.msk [vmem:[%s175 + $0x28] sm:$0xf] %vm727, %v687
      %739 = vst.msk [vmem:[%s175 + $0x2c] sm:$0xf] %vm727, %v688
      %740 = vst.msk [vmem:[%s175 + $0x30] sm:$0xf] %vm727, %v689
      %741 = vst.msk [vmem:[%s175 + $0x34] sm:$0xf] %vm727, %v690
      %742 = vst.msk [vmem:[%s175 + $0x38] sm:$0xf] %vm727, %v691
      %743 = vst.msk [vmem:[%s175 + $0x3c] sm:$0xf] %vm727, %v692
      %744 = vst.msk [vmem:[%s175 + $0x40] sm:$0xf] %vm727, %v693
      %745 = vst.msk [vmem:[%s175 + $0x44] sm:$0xf] %vm727, %v694
      %746 = vst.msk [vmem:[%s175 + $0x48] sm:$0xf] %vm727, %v695
      %747 = vst.msk [vmem:[%s175 + $0x4c] sm:$0xf] %vm727, %v696
      %748 = vst.msk [vmem:[%s175 + $0x50] sm:$0xf] %vm727, %v697
      %749 = vst.msk [vmem:[%s175 + $0x54] sm:$0xf] %vm727, %v698
      %750 = vst.msk [vmem:[%s175 + $0x58] sm:$0xf] %vm727, %v699
      %751 = vst.msk [vmem:[%s175 + $0x5c] sm:$0xf] %vm727, %v700
      %752 = vst.msk [vmem:[%s175 + $0x60] sm:$0xf] %vm727, %v701
      %s753 = smul.u32 25, %s14
      %p754 = scmp.lt.s32.totalorder %s753, 49
      %s755 = scalar_select %p754, %s753, 49
      %s756 = smul.addr %s755, 4
      %s757 = scalar_lea.vmem %s3, %s756
      // Predicated region
      $region33: #{_lambda_.4} parent=31 // pred_check
        %p758 = pneg %p100
      $region34: #{_lambda_.4} parent=31 // pred_check_branch
        %760 = sbr.rel (%p758) target = $region36
      $region35: #{_lambda_.4} parent=31 // pred_region
        %s761 = smul.u32 25, %s14
      $region36: #{_lambda_.4} parent=31 // pred_fallthru
        _
    $region32: #{_lambda_.4} parent=5 // pred_fallthru
      _
    %p762 = scmp.le.s32.totalorder 2, %s9
    // Predicated region
    $region37: #{_lambda_.4} parent=5 // pred_check
      %p763 = pneg %p762
    $region38: #{_lambda_.4} parent=5 // pred_check_branch
      %765 = sbr.rel (%p763) target = $region40
    $region39: #{_lambda_.4} parent=5 // pred_region
      %s766 = ssub.s32 %s9, 2
      // Predicated region
      $region41: #{_lambda_.4} parent=39 // pred_check
        %p767 = pneg %p106
      $region42: #{_lambda_.4} parent=39 // pred_check_branch
        %769 = sbr.rel (%p767) target = $region44
      $region43: #{_lambda_.4} parent=39 // pred_region
        %s770 = smul.u32 25, %s15
        %p771 = scmp.lt.s32.totalorder %s770, 49
        %s772 = scalar_select %p771, %s770, 49
        %s773 = smul.addr %s772, 4
        %s774 = scalar_lea.vmem %s3, %s773
      $region44: #{_lambda_.4} parent=39 // pred_fallthru
        _
    $region40: #{_lambda_.4} parent=5 // pred_fallthru
      _
  $region6: #{_lambda_.4} parent=0 // loop_footer
    %s13 = sadd.s32 1, %s9
  $region7: #{_lambda_.4} parent=0 // loop_footer_branch
    %8 = sbr.rel target = $region3
  $region8: #{_lambda_.4} parent=0 // loop_exit
    _

// kernel: _lambda_.5
$region0: #{_lambda_.5}
  #allocation0 [shape = 'u32[]', space=smem, size = 0x4, offset = 0x4, fixed_abs, tag = 'smem constant byte address 0x4 - core index']
  #allocation1 [shape = 'u32[144,128]{1,0:T(1,128)}', space=vmem, size = 0x12000, scoped, tag = 'internal scratch']
  %s0 = inlined_call_operand.vmem [shape: bf16[80,512], index: 0, kind: input, shape index: {}]
  %s1 = inlined_call_operand.vmem [shape: bf16[512,64], index: 1, kind: input, shape index: {}]
  %s2 = inlined_call_operand.vmem [shape: f32[1,64], index: 2, kind: input, shape index: {}]
  %s3 = inlined_call_operand.vmem [shape: bf16[80,64], index: 3, kind: output, shape index: {}]
  %s4 = sld [smem:[#allocation0]]
  $region45: #{_lambda_.5} parent=0
    _
  %s6 = ssub.s32 1, %s4
  %s7 = scalar_select 0, %s6, %s4
  loop: start=0, step=1, limit=4
  $region2: #{_lambda_.5} parent=0 // loop_pre_header
    _
  $region3: #{_lambda_.5} parent=0 // loop_header
    %s9 = sphi 0, %s13
    %p10 = scmp.ge.s32.totalorder %s9, 4
    %s19 = sphi 0, %s21
    %s22 = sphi 0, %s19
    %s23 = sphi 0, %s22
    %s39 = sphi 0, %s23
    %s43 = sphi 0, %s43
    %s45 = sphi 0, %s43
    %s46 = sphi 0, %s45
    %s60 = sphi 0, %s46
    %s64 = sphi 0, %s64
    %s66 = sphi 0, %s64
    %s67 = sphi 0, %s66
    %s81 = sphi 0, %s67
    %s87 = sphi 0, %s89
    %s90 = sphi 0, %s87
    %s91 = sphi 0, %s90
    %s107 = sphi 0, %s91
  $region4: #{_lambda_.5} parent=0 // loop_header_branch
    %12 = sbr.rel (%p10) target = $region8
  $region5: #{_lambda_.5} parent=0 // loop_body
    %s14 = ssub.s32 %s9, 1
    %s15 = ssub.s32 %s9, 2
    %s16 = sadd.s32 %s9, 1
    %s17 = ssub.s32 %s9, %s16
    %p18 = scmp.eq.s32.totalorder %s17, 0
    %s20 = sadd.s32 %s19, 1
    %s21 = scalar_select %p18, %s19, %s20
    %p24 = pneg %p18
    %p25 = scmp.eq.s32.totalorder %s9, 1
    %p26 = por %p24, %p25
    %p27 = scmp.ne.s32.totalorder %s19, %s22
    %p28 = scmp.eq.s32.totalorder %s9, 0
    %p29 = por %p27, %p28
    %p30 = scmp.ne.s32.totalorder %s19, %s22
    %p31 = scmp.eq.s32.totalorder %s14, 1
    %p32 = por %p30, %p31
    %p33 = scmp.ne.s32.totalorder %s22, %s23
    %p34 = scmp.eq.s32.totalorder %s14, 0
    %p35 = por %p33, %p34
    %p36 = scmp.ne.s32.totalorder %s22, %s23
    %p37 = scmp.eq.s32.totalorder %s15, 1
    %p38 = por %p36, %p37
    %p40 = scmp.ne.s32.totalorder %s23, %s39
    %p41 = scmp.eq.s32.totalorder %s15, 0
    %p42 = por %p40, %p41
    %s44 = sadd.s32 %s43, 1
    %p47 = scmp.eq.s32.totalorder %s9, 1
    %p48 = scmp.ne.s32.totalorder %s43, %s45
    %p49 = scmp.eq.s32.totalorder %s9, 0
    %p50 = por %p48, %p49
    %p51 = scmp.ne.s32.totalorder %s43, %s45
    %p52 = scmp.eq.s32.totalorder %s14, 1
    %p53 = por %p51, %p52
    %p54 = scmp.ne.s32.totalorder %s45, %s46
    %p55 = scmp.eq.s32.totalorder %s14, 0
    %p56 = por %p54, %p55
    %p57 = scmp.ne.s32.totalorder %s45, %s46
    %p58 = scmp.eq.s32.totalorder %s15, 1
    %p59 = por %p57, %p58
    %p61 = scmp.ne.s32.totalorder %s46, %s60
    %p62 = scmp.eq.s32.totalorder %s15, 0
    %p63 = por %p61, %p62
    %s65 = sadd.s32 %s64, 1
    %p68 = scmp.eq.s32.totalorder %s9, 1
    %p69 = scmp.ne.s32.totalorder %s64, %s66
    %p70 = scmp.eq.s32.totalorder %s9, 0
    %p71 = por %p69, %p70
    %p72 = scmp.ne.s32.totalorder %s64, %s66
    %p73 = scmp.eq.s32.totalorder %s14, 1
    %p74 = por %p72, %p73
    %p75 = scmp.ne.s32.totalorder %s66, %s67
    %p76 = scmp.eq.s32.totalorder %s14, 0
    %p77 = por %p75, %p76
    %p78 = scmp.ne.s32.totalorder %s66, %s67
    %p79 = scmp.eq.s32.totalorder %s15, 1
    %p80 = por %p78, %p79
    %p82 = scmp.ne.s32.totalorder %s67, %s81
    %p83 = scmp.eq.s32.totalorder %s15, 0
    %p84 = por %p82, %p83
    %s85 = ssub.s32 %s9, %s16
    %p86 = scmp.eq.s32.totalorder %s85, 0
    %s88 = sadd.s32 %s87, 1
    %s89 = scalar_select %p86, %s87, %s88
    %p92 = pneg %p86
    %p93 = scmp.eq.s32.totalorder %s9, 1
    %p94 = por %p92, %p93
    %p95 = scmp.ne.s32.totalorder %s87, %s90
    %p96 = scmp.eq.s32.totalorder %s9, 0
    %p97 = por %p95, %p96
    %p98 = scmp.ne.s32.totalorder %s87, %s90
    %p99 = scmp.eq.s32.totalorder %s14, 1
    %p100 = por %p98, %p99
    %p101 = scmp.ne.s32.totalorder %s90, %s91
    %p102 = scmp.eq.s32.totalorder %s14, 0
    %p103 = por %p101, %p102
    %p104 = scmp.ne.s32.totalorder %s90, %s91
    %p105 = scmp.eq.s32.totalorder %s15, 1
    %p106 = por %p104, %p105
    %p108 = scmp.ne.s32.totalorder %s91, %s107
    %p109 = scmp.eq.s32.totalorder %s15, 0
    %p110 = por %p108, %p109
    %p111 = scmp.le.s32.totalorder 1, %s9
    %p112 = scmp.lt.s32.totalorder %s9, 3
    %p113 = pnand %p111, %p112
    %p114 = pneg %p113
    // Predicated region
    $region9: #{_lambda_.5} parent=5 // pred_check
      _
    $region10: #{_lambda_.5} parent=5 // pred_check_branch
      %116 = sbr.rel (%p113) target = $region12
    $region11: #{_lambda_.5} parent=5 // pred_region
      %s117 = ssub.s32 %s9, 1
      // Predicated region
      $region13: #{_lambda_.5} parent=11 // pred_check
        %p118 = pneg %p56
      $region14: #{_lambda_.5} parent=11 // pred_check_branch
        %120 = sbr.rel (%p118) target = $region16
      $region15: #{_lambda_.5} parent=11 // pred_region
        _
      $region16: #{_lambda_.5} parent=11 // pred_fallthru
        _
      // Predicated region
      $region17: #{_lambda_.5} parent=11 // pred_check
        %p121 = pneg %p77
      $region18: #{_lambda_.5} parent=11 // pred_check_branch
        %123 = sbr.rel (%p121) target = $region20
      $region19: #{_lambda_.5} parent=11 // pred_region
        _
      $region20: #{_lambda_.5} parent=11 // pred_fallthru
        _
    $region12: #{_lambda_.5} parent=5 // pred_fallthru
      _
    %p124 = scmp.lt.s32.totalorder %s9, 2
    // Predicated region
    $region21: #{_lambda_.5} parent=5 // pred_check
      %p125 = pneg %p124
    $region22: #{_lambda_.5} parent=5 // pred_check_branch
      %127 = sbr.rel (%p125) target = $region24
    $region23: #{_lambda_.5} parent=5 // pred_region
      // Predicated region
      $region25: #{_lambda_.5} parent=23 // pred_check
        %p128 = pneg %p29
      $region26: #{_lambda_.5} parent=23 // pred_check_branch
        %130 = sbr.rel (%p128) target = $region28
      $region27: #{_lambda_.5} parent=23 // pred_region
        %s131 = smul.u32 5, %s9
        %p132 = scmp.lt.s32.totalorder %s131, 9
        %s133 = scalar_select %p132, %s131, 9
        %s134 = smul.addr %s133, 4
        %s135 = smul.addr %s134, 4
        %s136 = scalar_lea.vmem %s0, %s135
        %s137 = smul.u32 5, %s9
      $region28: #{_lambda_.5} parent=23 // pred_fallthru
        _
    $region24: #{_lambda_.5} parent=5 // pred_fallthru
      _
    %p138 = scmp.le.s32.totalorder 1, %s9
    %p139 = scmp.lt.s32.totalorder %s9, 3
    %p140 = pnand %p138, %p139
    %p141 = pneg %p140
    // Predicated region
    $region29: #{_lambda_.5} parent=5 // pred_check
      _
    $region30: #{_lambda_.5} parent=5 // pred_check_branch
      %143 = sbr.rel (%p140) target = $region32
    $region31: #{_lambda_.5} parent=5 // pred_region
      %s144 = ssub.s32 %s9, 1
      %s145 = smul.u32 5, %s14
      %p146 = scmp.lt.s32.totalorder %s145, 9
      %s147 = scalar_select %p146, %s145, 9
      %s148 = smul.addr %s147, 4
      %s149 = smul.addr %s148, 4
      %s150 = scalar_lea.vmem %s0, %s149
      %p151 = pneg %p35
      %p152 = pneg %p32
      %p153 = pneg %p56
      %p154 = pneg %p53
      %p155 = pneg %p77
      %p156 = pneg %p74
      %p157 = pneg %p103
      %p158 = pneg %p100
      %s159 = smul.u32 5, %s14
      %p160 = scmp.lt.s32.totalorder %s159, 9
      %s161 = scalar_select %p160, %s159, 9
      %s162 = smul.addr %s161, 4
      %s163 = scalar_lea.vmem %s3, %s162
      %s164 = smul.u32 5, %s14
      %p165 = scmp.lt.s32.totalorder %s164, 9
      %s166 = scalar_select %p165, %s164, 9
      %s167 = smul.addr %s166, 4
      %s168 = smul.addr %s167, 4
      %s169 = scalar_lea.vmem %s0, %s168
      %s170 = smul.u32 5, %s14
      %s171 = smul.u32 5, %s14
      %p172 = scmp.lt.s32.totalorder %s171, 9
      %s173 = scalar_select %p172, %s171, 9
      %s174 = smul.addr %s173, 4
      %s175 = scalar_lea.vmem %s3, %s174
      %s176 = smul.u32 5, %s14
      %v178 = vld [vmem:[%s169] sm:$0xff]
      %v179 = vld [vmem:[%s169 + $0x8] sm:$0xff]
      %v180 = vld [vmem:[%s169 + $0x10] sm:$0xff]
      %v181 = vld [vmem:[%s169 + $0x18] sm:$0xff]
      %v182 = vld [vmem:[%s169 + $0x20] sm:$0xff]
      %v183 = vld [vmem:[%s169 + $0x28] sm:$0xff]
      %v184 = vld [vmem:[%s169 + $0x30] sm:$0xff]
      %v185 = vld [vmem:[%s169 + $0x38] sm:$0xff]
      %v186 = vld [vmem:[%s169 + $0x40] sm:$0xff]
      %v187 = vld [vmem:[%s169 + $0x48] sm:$0xff]
      %v188 = vld [vmem:[%s1] sm:$0xf]
      %v189 = vld [vmem:[%s1 + $0x4] sm:$0xf]
      %v190 = vld [vmem:[%s1 + $0x8] sm:$0xf]
      %v191 = vld [vmem:[%s1 + $0xc] sm:$0xf]
      %v192 = vld [vmem:[%s1 + $0x10] sm:$0xf]
      %v193 = vld [vmem:[%s1 + $0x14] sm:$0xf]
      %v194 = vld [vmem:[%s1 + $0x18] sm:$0xf]
      %v195 = vld [vmem:[%s1 + $0x1c] sm:$0xf]
      %v196 = vld [vmem:[%s1 + $0x20] sm:$0xf]
      %v197 = vld [vmem:[%s1 + $0x24] sm:$0xf]
      %v198 = vld [vmem:[%s1 + $0x28] sm:$0xf]
      %v199 = vld [vmem:[%s1 + $0x2c] sm:$0xf]
      %v200 = vld [vmem:[%s1 + $0x30] sm:$0xf]
      %v201 = vld [vmem:[%s1 + $0x34] sm:$0xf]
      %v202 = vld [vmem:[%s1 + $0x38] sm:$0xf]
      %v203 = vld [vmem:[%s1 + $0x3c] sm:$0xf]
      %v204 = vld [vmem:[%s1 + $0x40] sm:$0xf]
      %v205 = vld [vmem:[%s1 + $0x44] sm:$0xf]
      %v206 = vld [vmem:[%s1 + $0x48] sm:$0xf]
      %v207 = vld [vmem:[%s1 + $0x4c] sm:$0xf]
      %v208 = vld [vmem:[%s1 + $0x50] sm:$0xf]
      %v209 = vld [vmem:[%s1 + $0x54] sm:$0xf]
      %v210 = vld [vmem:[%s1 + $0x58] sm:$0xf]
      %v211 = vld [vmem:[%s1 + $0x5c] sm:$0xf]
      %v212 = vld [vmem:[%s1 + $0x60] sm:$0xf]
      %v213 = vld [vmem:[%s1 + $0x64] sm:$0xf]
      %v214 = vld [vmem:[%s1 + $0x68] sm:$0xf]
      %v215 = vld [vmem:[%s1 + $0x6c] sm:$0xf]
      %v216 = vld [vmem:[%s1 + $0x70] sm:$0xf]
      %v217 = vld [vmem:[%s1 + $0x74] sm:$0xf]
      %v218 = vld [vmem:[%s1 + $0x78] sm:$0xf]
      %v219 = vld [vmem:[%s1 + $0x7c] sm:$0xf]
      %v220 = vld [vmem:[%s1 + $0x80] sm:$0xf]
      %v221 = vld [vmem:[%s1 + $0x84] sm:$0xf]
      %v222 = vld [vmem:[%s1 + $0x88] sm:$0xf]
      %v223 = vld [vmem:[%s1 + $0x8c] sm:$0xf]
      %v224 = vld [vmem:[%s1 + $0x90] sm:$0xf]
      %v225 = vld [vmem:[%s1 + $0x94] sm:$0xf]
      %v226 = vld [vmem:[%s1 + $0x98] sm:$0xf]
      %v227 = vld [vmem:[%s1 + $0x9c] sm:$0xf]
      %v228 = vld [vmem:[%s1 + $0xa0] sm:$0xf]
      %v229 = vld [vmem:[%s1 + $0xa4] sm:$0xf]
      %v230 = vld [vmem:[%s1 + $0xa8] sm:$0xf]
      %v231 = vld [vmem:[%s1 + $0xac] sm:$0xf]
      %v232 = vld [vmem:[%s1 + $0xb0] sm:$0xf]
      %v233 = vld [vmem:[%s1 + $0xb4] sm:$0xf]
      %v234 = vld [vmem:[%s1 + $0xb8] sm:$0xf]
      %v235 = vld [vmem:[%s1 + $0xbc] sm:$0xf]
      %v236 = vld [vmem:[%s1 + $0xc0] sm:$0xf]
      %v237 = vld [vmem:[%s1 + $0xc4] sm:$0xf]
      %v238 = vld [vmem:[%s1 + $0xc8] sm:$0xf]
      %v239 = vld [vmem:[%s1 + $0xcc] sm:$0xf]
      %v240 = vld [vmem:[%s1 + $0xd0] sm:$0xf]
      %v241 = vld [vmem:[%s1 + $0xd4] sm:$0xf]
      %v242 = vld [vmem:[%s1 + $0xd8] sm:$0xf]
      %v243 = vld [vmem:[%s1 + $0xdc] sm:$0xf]
      %v244 = vld [vmem:[%s1 + $0xe0] sm:$0xf]
      %v245 = vld [vmem:[%s1 + $0xe4] sm:$0xf]
      %v246 = vld [vmem:[%s1 + $0xe8] sm:$0xf]
      %v247 = vld [vmem:[%s1 + $0xec] sm:$0xf]
      %v248 = vld [vmem:[%s1 + $0xf0] sm:$0xf]
      %v249 = vld [vmem:[%s1 + $0xf4] sm:$0xf]
      %v250 = vld [vmem:[%s1 + $0xf8] sm:$0xf]
      %v251 = vld [vmem:[%s1 + $0xfc] sm:$0xf]
      %v252 = vld [vmem:[%s2] sm:$0x1]
      %v254 = vlaneseq
      %v255 = vshrl.u32 %v254, 7
      %v256 = vsub.s32 0, %v255
      %v257 = vrot.slane %v252, %v256
      %v269 = vunpack.c.l.b16 %v178
      %v270 = vunpack.c.h.b16 %v178
      %v271 = vunpack.c.l.b16 %v179
      %v272 = vunpack.c.h.b16 %v179
      %v273 = vunpack.c.l.b16 %v180
      %v274 = vunpack.c.h.b16 %v180
      %v275 = vunpack.c.l.b16 %v181
      %v276 = vunpack.c.h.b16 %v181
      %v277 = vunpack.c.l.b16 %v182
      %v278 = vunpack.c.h.b16 %v182
      %v279 = vunpack.c.l.b16 %v183
      %v280 = vunpack.c.h.b16 %v183
      %v281 = vunpack.c.l.b16 %v184
      %v282 = vunpack.c.h.b16 %v184
      %v283 = vunpack.c.l.b16 %v185
      %v284 = vunpack.c.h.b16 %v185
      %v285 = vunpack.c.l.b16 %v186
      %v286 = vunpack.c.h.b16 %v186
      %v287 = vunpack.c.l.b16 %v187
      %v288 = vunpack.c.h.b16 %v187
      %v289 = vpack.c.b16 %v273, %v269
      %v290 = vpack.c.b16 %v274, %v270
      %v291 = vpack.c.b16 %v275, %v271
      %v292 = vpack.c.b16 %v276, %v272
      %v293 = vpack.c.b16 %v281, %v277
      %v294 = vpack.c.b16 %v282, %v278
      %v295 = vpack.c.b16 %v283, %v279
      %v296 = vpack.c.b16 %v284, %v280
      %v297 = vpack.c.b16 %v285, %v285
      %v298 = vpack.c.b16 %v286, %v286
      %v299 = vpack.c.b16 %v287, %v287
      %v300 = vpack.c.b16 %v288, %v288
      %v377 = vunpack.c.l.b16 %v188
      %v378 = vunpack.c.l.b16 %v189
      %v379 = vunpack.c.l.b16 %v190
      %v380 = vunpack.c.l.b16 %v191
      %v381 = vunpack.c.l.b16 %v192
      %v382 = vunpack.c.l.b16 %v193
      %v383 = vunpack.c.l.b16 %v194
      %v384 = vunpack.c.l.b16 %v195
      %v385 = vunpack.c.l.b16 %v196
      %v386 = vunpack.c.l.b16 %v197
      %v387 = vunpack.c.l.b16 %v198
      %v388 = vunpack.c.l.b16 %v199
      %v389 = vunpack.c.l.b16 %v200
      %v390 = vunpack.c.l.b16 %v201
      %v391 = vunpack.c.l.b16 %v202
      %v392 = vunpack.c.l.b16 %v203
      %v393 = vunpack.c.l.b16 %v204
      %v394 = vunpack.c.l.b16 %v205
      %v395 = vunpack.c.l.b16 %v206
      %v396 = vunpack.c.l.b16 %v207
      %v397 = vunpack.c.l.b16 %v208
      %v398 = vunpack.c.l.b16 %v209
      %v399 = vunpack.c.l.b16 %v210
      %v400 = vunpack.c.l.b16 %v211
      %v401 = vunpack.c.l.b16 %v212
      %v402 = vunpack.c.l.b16 %v213
      %v403 = vunpack.c.l.b16 %v214
      %v404 = vunpack.c.l.b16 %v215
      %v405 = vunpack.c.l.b16 %v216
      %v406 = vunpack.c.l.b16 %v217
      %v407 = vunpack.c.l.b16 %v218
      %v408 = vunpack.c.l.b16 %v219
      %v409 = vunpack.c.l.b16 %v220
      %v410 = vunpack.c.l.b16 %v221
      %v411 = vunpack.c.l.b16 %v222
      %v412 = vunpack.c.l.b16 %v223
      %v413 = vunpack.c.l.b16 %v224
      %v414 = vunpack.c.l.b16 %v225
      %v415 = vunpack.c.l.b16 %v226
      %v416 = vunpack.c.l.b16 %v227
      %v417 = vunpack.c.l.b16 %v228
      %v418 = vunpack.c.l.b16 %v229
      %v419 = vunpack.c.l.b16 %v230
      %v420 = vunpack.c.l.b16 %v231
      %v421 = vunpack.c.l.b16 %v232
      %v422 = vunpack.c.l.b16 %v233
      %v423 = vunpack.c.l.b16 %v234
      %v424 = vunpack.c.l.b16 %v235
      %v425 = vunpack.c.l.b16 %v236
      %v426 = vunpack.c.l.b16 %v237
      %v427 = vunpack.c.l.b16 %v238
      %v428 = vunpack.c.l.b16 %v239
      %v429 = vunpack.c.l.b16 %v240
      %v430 = vunpack.c.l.b16 %v241
      %v431 = vunpack.c.l.b16 %v242
      %v432 = vunpack.c.l.b16 %v243
      %v433 = vunpack.c.l.b16 %v244
      %v434 = vunpack.c.l.b16 %v245
      %v435 = vunpack.c.l.b16 %v246
      %v436 = vunpack.c.l.b16 %v247
      %v437 = vunpack.c.l.b16 %v248
      %v438 = vunpack.c.l.b16 %v249
      %v439 = vunpack.c.l.b16 %v250
      %v440 = vunpack.c.l.b16 %v251
      %v441 = vpack.c.b16 %v378, %v377
      %v442 = vpack.c.b16 %v380, %v379
      %v443 = vpack.c.b16 %v382, %v381
      %v444 = vpack.c.b16 %v384, %v383
      %v445 = vpack.c.b16 %v386, %v385
      %v446 = vpack.c.b16 %v388, %v387
      %v447 = vpack.c.b16 %v390, %v389
      %v448 = vpack.c.b16 %v392, %v391
      %v449 = vpack.c.b16 %v394, %v393
      %v450 = vpack.c.b16 %v396, %v395
      %v451 = vpack.c.b16 %v398, %v397
      %v452 = vpack.c.b16 %v400, %v399
      %v453 = vpack.c.b16 %v402, %v401
      %v454 = vpack.c.b16 %v404, %v403
      %v455 = vpack.c.b16 %v406, %v405
      %v456 = vpack.c.b16 %v408, %v407
      %v457 = vpack.c.b16 %v410, %v409
      %v458 = vpack.c.b16 %v412, %v411
      %v459 = vpack.c.b16 %v414, %v413
      %v460 = vpack.c.b16 %v416, %v415
      %v461 = vpack.c.b16 %v418, %v417
      %v462 = vpack.c.b16 %v420, %v419
      %v463 = vpack.c.b16 %v422, %v421
      %v464 = vpack.c.b16 %v424, %v423
      %v465 = vpack.c.b16 %v426, %v425
      %v466 = vpack.c.b16 %v428, %v427
      %v467 = vpack.c.b16 %v430, %v429
      %v468 = vpack.c.b16 %v432, %v431
      %v469 = vpack.c.b16 %v434, %v433
      %v470 = vpack.c.b16 %v436, %v435
      %v471 = vpack.c.b16 %v438, %v437
      %v472 = vpack.c.b16 %v440, %v439
      %505 = vmatprep.subr.bf16.mxu0 0
      %506 = vmatpush1.bf16.msra.mxu0 %v441
      %507 = vmatprep.subr.bf16.mxu0 0
      %508 = vmatpush1.bf16.msra.mxu0 %v442
      %509 = vmatprep.subr.bf16.mxu0 0
      %510 = vmatpush1.bf16.msra.mxu0 %v443
      %511 = vmatprep.subr.bf16.mxu0 0
      %512 = vmatpush1.bf16.msra.mxu0 %v444
      %513 = vmatprep.subr.bf16.mxu0 0
      %514 = vmatpush1.bf16.msra.mxu0 %v445
      %515 = vmatprep.subr.bf16.mxu0 0
      %516 = vmatpush1.bf16.msra.mxu0 %v446
      %517 = vmatprep.subr.bf16.mxu0 0
      %518 = vmatpush1.bf16.msra.mxu0 %v447
      %519 = vmatprep.subr.bf16.mxu0 0
      %520 = vmatpush1.bf16.msra.mxu0 %v448
      %521 = vmatprep.subr.bf16.mxu0 0
      %522 = vmatpush1.bf16.msra.mxu0 %v449
      %523 = vmatprep.subr.bf16.mxu0 0
      %524 = vmatpush1.bf16.msra.mxu0 %v450
      %525 = vmatprep.subr.bf16.mxu0 0
      %526 = vmatpush1.bf16.msra.mxu0 %v451
      %527 = vmatprep.subr.bf16.mxu0 0
      %528 = vmatpush1.bf16.msra.mxu0 %v452
      %529 = vmatprep.subr.bf16.mxu0 0
      %530 = vmatpush1.bf16.msra.mxu0 %v453
      %531 = vmatprep.subr.bf16.mxu0 0
      %532 = vmatpush1.bf16.msra.mxu0 %v454
      %533 = vmatprep.subr.bf16.mxu0 0
      %534 = vmatpush1.bf16.msra.mxu0 %v455
      %535 = vmatprep.subr.bf16.mxu0 0
      %536 = vmatpush1.bf16.msra.mxu0 %v456
      %537 = vmatprep.mubr.bf16.mxu0 %v290
      %538 = vmatmul.mubr.bf16.gmra.mrb[0].mxu0 %v289
      %v539 = vpop.f32.mrb[0].mxu0
      %v540 = vadd.f32 %v257, %v539
      %v541 = vpop.f32.mrb[0].mxu0
      %v542 = vpop.f32.mrb[0].mxu0
      %v543 = vadd.f32 %v257, %v542
      %v544 = vpop.f32.mrb[0].mxu0
      %545 = vmatprep.mubr.bf16.mxu0 %v294
      %546 = vmatmul.mubr.bf16.gmra.mrb[0].mxu0 %v293
      %v547 = vpop.f32.mrb[0].mxu0
      %v548 = vadd.f32 %v257, %v547
      %v549 = vpop.f32.mrb[0].mxu0
      %v550 = vpop.f32.mrb[0].mxu0
      %v551 = vadd.f32 %v257, %v550
      %v552 = vpop.f32.mrb[0].mxu0
      %553 = vmatprep.mubr.bf16.mxu0 %v298
      %554 = vmatmul.mubr.bf16.gmra.mrb[0].mxu0 %v297
      %v555 = vpop.f32.mrb[0].mxu0
      %v556 = vadd.f32 %v257, %v555
      %v557 = vpop.f32.mrb[0].mxu0
      %v558 = vpop.f32.mrb[0].mxu0
      %v559 = vpop.f32.mrb[0].mxu0
      %560 = vdwg.mxu0
      %561 = vmatprep.subr.bf16.mxu0 0
      %562 = vmatpush1.bf16.msra.mxu0 %v457
      %563 = vmatprep.subr.bf16.mxu0 0
      %564 = vmatpush1.bf16.msra.mxu0 %v458
      %565 = vmatprep.subr.bf16.mxu0 0
      %566 = vmatpush1.bf16.msra.mxu0 %v459
      %567 = vmatprep.subr.bf16.mxu0 0
      %568 = vmatpush1.bf16.msra.mxu0 %v460
      %569 = vmatprep.subr.bf16.mxu0 0
      %570 = vmatpush1.bf16.msra.mxu0 %v461
      %571 = vmatprep.subr.bf16.mxu0 0
      %572 = vmatpush1.bf16.msra.mxu0 %v462
      %573 = vmatprep.subr.bf16.mxu0 0
      %574 = vmatpush1.bf16.msra.mxu0 %v463
      %575 = vmatprep.subr.bf16.mxu0 0
      %576 = vmatpush1.bf16.msra.mxu0 %v464
      %577 = vmatprep.subr.bf16.mxu0 0
      %578 = vmatpush1.bf16.msra.mxu0 %v465
      %579 = vmatprep.subr.bf16.mxu0 0
      %580 = vmatpush1.bf16.msra.mxu0 %v466
      %581 = vmatprep.subr.bf16.mxu0 0
      %582 = vmatpush1.bf16.msra.mxu0 %v467
      %583 = vmatprep.subr.bf16.mxu0 0
      %584 = vmatpush1.bf16.msra.mxu0 %v468
      %585 = vmatprep.subr.bf16.mxu0 0
      %586 = vmatpush1.bf16.msra.mxu0 %v469
      %587 = vmatprep.subr.bf16.mxu0 0
      %588 = vmatpush1.bf16.msra.mxu0 %v470
      %589 = vmatprep.subr.bf16.mxu0 0
      %590 = vmatpush1.bf16.msra.mxu0 %v471
      %591 = vmatprep.subr.bf16.mxu0 0
      %592 = vmatpush1.bf16.msra.mxu0 %v472
      %593 = vmatprep.mubr.bf16.mxu0 %v292
      %594 = vmatmul.mubr.bf16.gmra.mrb[0].mxu0 %v291
      %v595 = vpop.f32.mrb[0].mxu0
      %v596 = vadd.f32 %v540, %v595
      %v597 = vpop.f32.mrb[0].mxu0
      %v598 = vpop.f32.mrb[0].mxu0
      %v599 = vadd.f32 %v543, %v598
      %v600 = vpop.f32.mrb[0].mxu0
      %601 = vmatprep.mubr.bf16.mxu0 %v296
      %602 = vmatmul.mubr.bf16.gmra.mrb[0].mxu0 %v295
      %v603 = vpop.f32.mrb[0].mxu0
      %v604 = vadd.f32 %v548, %v603
      %v605 = vpop.f32.mrb[0].mxu0
      %v606 = vpop.f32.mrb[0].mxu0
      %v607 = vadd.f32 %v551, %v606
      %v608 = vpop.f32.mrb[0].mxu0
      %609 = vmatprep.mubr.bf16.mxu0 %v300
      %610 = vmatmul.mubr.bf16.gmra.mrb[0].mxu0 %v299
      %v611 = vpop.f32.mrb[0].mxu0
      %v612 = vadd.f32 %v556, %v611
      %v613 = vpop.f32.mrb[0].mxu0
      %v614 = vpop.f32.mrb[0].mxu0
      %v615 = vpop.f32.mrb[0].mxu0
      %616 = vdwg.mxu0
      %v617 = vmax.f32 %v596, 0.0
      %v618 = vmax.f32 %v599, 0.0
      %v619 = vmax.f32 %v604, 0.0
      %v620 = vmax.f32 %v607, 0.0
      %v621 = vmax.f32 %v612, 0.0
      %v622 = vpack.c.bf16 %v618, %v617
      %v623 = vpack.c.bf16 %v620, %v619
      %v624 = vpack.c.bf16 %v621, %v621
      %v628 = vunpack.c.l.b16 %v622
      %v629 = vunpack.c.h.b16 %v622
      %v630 = vunpack.c.l.b16 %v623
      %v631 = vunpack.c.h.b16 %v623
      %v632 = vunpack.c.l.b16 %v624
      %v633 = vpack.c.b16 %v628, %v628
      %v634 = vpack.c.b16 %v629, %v629
      %v635 = vpack.c.b16 %v630, %v630
      %v636 = vpack.c.b16 %v631, %v631
      %v637 = vpack.c.b16 %v632, %v632
      %vm643 = vcmask 519168
      %644 = vst.msk [vmem:[%s175] sm:$0xf] %vm643, %v633
      %645 = vst.msk [vmem:[%s175 + $0x4] sm:$0xf] %vm643, %v634
      %646 = vst.msk [vmem:[%s175 + $0x8] sm:$0xf] %vm643, %v635
      %647 = vst.msk [vmem:[%s175 + $0xc] sm:$0xf] %vm643, %v636
      %648 = vst.msk [vmem:[%s175 + $0x10] sm:$0xf] %vm643, %v637
      %s649 = smul.u32 5, %s14
      %p650 = scmp.lt.s32.totalorder %s649, 9
      %s651 = scalar_select %p650, %s649, 9
      %s652 = smul.addr %s651, 4
      %s653 = scalar_lea.vmem %s3, %s652
      // Predicated region
      $region33: #{_lambda_.5} parent=31 // pred_check
        %p654 = pneg %p100
      $region34: #{_lambda_.5} parent=31 // pred_check_branch
        %656 = sbr.rel (%p654) target = $region36
      $region35: #{_lambda_.5} parent=31 // pred_region
        %s657 = smul.u32 5, %s14
      $region36: #{_lambda_.5} parent=31 // pred_fallthru
        _
    $region32: #{_lambda_.5} parent=5 // pred_fallthru
      _
    %p658 = scmp.le.s32.totalorder 2, %s9
    // Predicated region
    $region37: #{_lambda_.5} parent=5 // pred_check
      %p659 = pneg %p658
    $region38: #{_lambda_.5} parent=5 // pred_check_branch
      %661 = sbr.rel (%p659) target = $region40
    $region39: #{_lambda_.5} parent=5 // pred_region
      %s662 = ssub.s32 %s9, 2
      // Predicated region
      $region41: #{_lambda_.5} parent=39 // pred_check
        %p663 = pneg %p106
      $region42: #{_lambda_.5} parent=39 // pred_check_branch
        %665 = sbr.rel (%p663) target = $region44
      $region43: #{_lambda_.5} parent=39 // pred_region
        %s666 = smul.u32 5, %s15
        %p667 = scmp.lt.s32.totalorder %s666, 9
        %s668 = scalar_select %p667, %s666, 9
        %s669 = smul.addr %s668, 4
        %s670 = scalar_lea.vmem %s3, %s669
      $region44: #{_lambda_.5} parent=39 // pred_fallthru
        _
    $region40: #{_lambda_.5} parent=5 // pred_fallthru
      _
  $region6: #{_lambda_.5} parent=0 // loop_footer
    %s13 = sadd.s32 1, %s9
  $region7: #{_lambda_.5} parent=0 // loop_footer_branch
    %8 = sbr.rel target = $region3
  $region8: #{_lambda_.5} parent=0 // loop_exit
    _

// kernel: _lambda_.6
$region0: #{_lambda_.6}
  #allocation0 [shape = 'u32[]', space=smem, size = 0x4, offset = 0x4, fixed_abs, tag = 'smem constant byte address 0x4 - core index']
  #allocation1 [shape = 'u32[144,128]{1,0:T(1,128)}', space=vmem, size = 0x12000, scoped, tag = 'internal scratch']
  %s0 = inlined_call_operand.vmem [shape: bf16[32,640], index: 0, kind: input, shape index: {}]
  %s1 = inlined_call_operand.vmem [shape: bf16[640,64], index: 1, kind: input, shape index: {}]
  %s2 = inlined_call_operand.vmem [shape: f32[1,64], index: 2, kind: input, shape index: {}]
  %s3 = inlined_call_operand.vmem [shape: bf16[32,64], index: 3, kind: output, shape index: {}]
  %s4 = sld [smem:[#allocation0]]
  $region45: #{_lambda_.6} parent=0
    _
  %s6 = ssub.s32 1, %s4
  %s7 = scalar_select 0, %s6, %s4
  loop: start=0, step=1, limit=4
  $region2: #{_lambda_.6} parent=0 // loop_pre_header
    _
  $region3: #{_lambda_.6} parent=0 // loop_header
    %s9 = sphi 0, %s13
    %p10 = scmp.ge.s32.totalorder %s9, 4
    %s19 = sphi 0, %s21
    %s22 = sphi 0, %s19
    %s23 = sphi 0, %s22
    %s39 = sphi 0, %s23
    %s43 = sphi 0, %s43
    %s45 = sphi 0, %s43
    %s46 = sphi 0, %s45
    %s60 = sphi 0, %s46
    %s64 = sphi 0, %s64
    %s66 = sphi 0, %s64
    %s67 = sphi 0, %s66
    %s81 = sphi 0, %s67
    %s87 = sphi 0, %s89
    %s90 = sphi 0, %s87
    %s91 = sphi 0, %s90
    %s107 = sphi 0, %s91
  $region4: #{_lambda_.6} parent=0 // loop_header_branch
    %12 = sbr.rel (%p10) target = $region8
  $region5: #{_lambda_.6} parent=0 // loop_body
    %s14 = ssub.s32 %s9, 1
    %s15 = ssub.s32 %s9, 2
    %s16 = sadd.s32 %s9, 1
    %s17 = ssub.s32 %s9, %s16
    %p18 = scmp.eq.s32.totalorder %s17, 0
    %s20 = sadd.s32 %s19, 1
    %s21 = scalar_select %p18, %s19, %s20
    %p24 = pneg %p18
    %p25 = scmp.eq.s32.totalorder %s9, 1
    %p26 = por %p24, %p25
    %p27 = scmp.ne.s32.totalorder %s19, %s22
    %p28 = scmp.eq.s32.totalorder %s9, 0
    %p29 = por %p27, %p28
    %p30 = scmp.ne.s32.totalorder %s19, %s22
    %p31 = scmp.eq.s32.totalorder %s14, 1
    %p32 = por %p30, %p31
    %p33 = scmp.ne.s32.totalorder %s22, %s23
    %p34 = scmp.eq.s32.totalorder %s14, 0
    %p35 = por %p33, %p34
    %p36 = scmp.ne.s32.totalorder %s22, %s23
    %p37 = scmp.eq.s32.totalorder %s15, 1
    %p38 = por %p36, %p37
    %p40 = scmp.ne.s32.totalorder %s23, %s39
    %p41 = scmp.eq.s32.totalorder %s15, 0
    %p42 = por %p40, %p41
    %s44 = sadd.s32 %s43, 1
    %p47 = scmp.eq.s32.totalorder %s9, 1
    %p48 = scmp.ne.s32.totalorder %s43, %s45
    %p49 = scmp.eq.s32.totalorder %s9, 0
    %p50 = por %p48, %p49
    %p51 = scmp.ne.s32.totalorder %s43, %s45
    %p52 = scmp.eq.s32.totalorder %s14, 1
    %p53 = por %p51, %p52
    %p54 = scmp.ne.s32.totalorder %s45, %s46
    %p55 = scmp.eq.s32.totalorder %s14, 0
    %p56 = por %p54, %p55
    %p57 = scmp.ne.s32.totalorder %s45, %s46
    %p58 = scmp.eq.s32.totalorder %s15, 1
    %p59 = por %p57, %p58
    %p61 = scmp.ne.s32.totalorder %s46, %s60
    %p62 = scmp.eq.s32.totalorder %s15, 0
    %p63 = por %p61, %p62
    %s65 = sadd.s32 %s64, 1
    %p68 = scmp.eq.s32.totalorder %s9, 1
    %p69 = scmp.ne.s32.totalorder %s64, %s66
    %p70 = scmp.eq.s32.totalorder %s9, 0
    %p71 = por %p69, %p70
    %p72 = scmp.ne.s32.totalorder %s64, %s66
    %p73 = scmp.eq.s32.totalorder %s14, 1
    %p74 = por %p72, %p73
    %p75 = scmp.ne.s32.totalorder %s66, %s67
    %p76 = scmp.eq.s32.totalorder %s14, 0
    %p77 = por %p75, %p76
    %p78 = scmp.ne.s32.totalorder %s66, %s67
    %p79 = scmp.eq.s32.totalorder %s15, 1
    %p80 = por %p78, %p79
    %p82 = scmp.ne.s32.totalorder %s67, %s81
    %p83 = scmp.eq.s32.totalorder %s15, 0
    %p84 = por %p82, %p83
    %s85 = ssub.s32 %s9, %s16
    %p86 = scmp.eq.s32.totalorder %s85, 0
    %s88 = sadd.s32 %s87, 1
    %s89 = scalar_select %p86, %s87, %s88
    %p92 = pneg %p86
    %p93 = scmp.eq.s32.totalorder %s9, 1
    %p94 = por %p92, %p93
    %p95 = scmp.ne.s32.totalorder %s87, %s90
    %p96 = scmp.eq.s32.totalorder %s9, 0
    %p97 = por %p95, %p96
    %p98 = scmp.ne.s32.totalorder %s87, %s90
    %p99 = scmp.eq.s32.totalorder %s14, 1
    %p100 = por %p98, %p99
    %p101 = scmp.ne.s32.totalorder %s90, %s91
    %p102 = scmp.eq.s32.totalorder %s14, 0
    %p103 = por %p101, %p102
    %p104 = scmp.ne.s32.totalorder %s90, %s91
    %p105 = scmp.eq.s32.totalorder %s15, 1
    %p106 = por %p104, %p105
    %p108 = scmp.ne.s32.totalorder %s91, %s107
    %p109 = scmp.eq.s32.totalorder %s15, 0
    %p110 = por %p108, %p109
    %p111 = scmp.le.s32.totalorder 1, %s9
    %p112 = scmp.lt.s32.totalorder %s9, 3
    %p113 = pnand %p111, %p112
    %p114 = pneg %p113
    // Predicated region
    $region9: #{_lambda_.6} parent=5 // pred_check
      _
    $region10: #{_lambda_.6} parent=5 // pred_check_branch
      %116 = sbr.rel (%p113) target = $region12
    $region11: #{_lambda_.6} parent=5 // pred_region
      %s117 = ssub.s32 %s9, 1
      // Predicated region
      $region13: #{_lambda_.6} parent=11 // pred_check
        %p118 = pneg %p56
      $region14: #{_lambda_.6} parent=11 // pred_check_branch
        %120 = sbr.rel (%p118) target = $region16
      $region15: #{_lambda_.6} parent=11 // pred_region
        _
      $region16: #{_lambda_.6} parent=11 // pred_fallthru
        _
      // Predicated region
      $region17: #{_lambda_.6} parent=11 // pred_check
        %p121 = pneg %p77
      $region18: #{_lambda_.6} parent=11 // pred_check_branch
        %123 = sbr.rel (%p121) target = $region20
      $region19: #{_lambda_.6} parent=11 // pred_region
        _
      $region20: #{_lambda_.6} parent=11 // pred_fallthru
        _
    $region12: #{_lambda_.6} parent=5 // pred_fallthru
      _
    %p124 = scmp.lt.s32.totalorder %s9, 2
    // Predicated region
    $region21: #{_lambda_.6} parent=5 // pred_check
      %p125 = pneg %p124
    $region22: #{_lambda_.6} parent=5 // pred_check_branch
      %127 = sbr.rel (%p125) target = $region24
    $region23: #{_lambda_.6} parent=5 // pred_region
      // Predicated region
      $region25: #{_lambda_.6} parent=23 // pred_check
        %p128 = pneg %p29
      $region26: #{_lambda_.6} parent=23 // pred_check_branch
        %130 = sbr.rel (%p128) target = $region28
      $region27: #{_lambda_.6} parent=23 // pred_region
        %s131 = smul.u32 2, %s9
        %p132 = scmp.lt.s32.totalorder %s131, 3
        %s133 = scalar_select %p132, %s131, 3
        %s134 = smul.addr %s133, 5
        %s135 = smul.addr %s134, 4
        %s136 = scalar_lea.vmem %s0, %s135
        %s137 = smul.u32 2, %s9
      $region28: #{_lambda_.6} parent=23 // pred_fallthru
        _
    $region24: #{_lambda_.6} parent=5 // pred_fallthru
      _
    %p138 = scmp.le.s32.totalorder 1, %s9
    %p139 = scmp.lt.s32.totalorder %s9, 3
    %p140 = pnand %p138, %p139
    %p141 = pneg %p140
    // Predicated region
    $region29: #{_lambda_.6} parent=5 // pred_check
      _
    $region30: #{_lambda_.6} parent=5 // pred_check_branch
      %143 = sbr.rel (%p140) target = $region32
    $region31: #{_lambda_.6} parent=5 // pred_region
      %s144 = ssub.s32 %s9, 1
      %s145 = smul.u32 2, %s14
      %p146 = scmp.lt.s32.totalorder %s145, 3
      %s147 = scalar_select %p146, %s145, 3
      %s148 = smul.addr %s147, 5
      %s149 = smul.addr %s148, 4
      %s150 = scalar_lea.vmem %s0, %s149
      %p151 = pneg %p35
      %p152 = pneg %p32
      %p153 = pneg %p56
      %p154 = pneg %p53
      %p155 = pneg %p77
      %p156 = pneg %p74
      %p157 = pneg %p103
      %p158 = pneg %p100
      %s159 = smul.u32 2, %s14
      %p160 = scmp.lt.s32.totalorder %s159, 3
      %s161 = scalar_select %p160, %s159, 3
      %s162 = smul.addr %s161, 4
      %s163 = scalar_lea.vmem %s3, %s162
      %s164 = smul.u32 2, %s14
      %p165 = scmp.lt.s32.totalorder %s164, 3
      %s166 = scalar_select %p165, %s164, 3
      %s167 = smul.addr %s166, 5
      %s168 = smul.addr %s167, 4
      %s169 = scalar_lea.vmem %s0, %s168
      %s170 = smul.u32 2, %s14
      %s171 = smul.u32 2, %s14
      %p172 = scmp.lt.s32.totalorder %s171, 3
      %s173 = scalar_select %p172, %s171, 3
      %s174 = smul.addr %s173, 4
      %s175 = scalar_lea.vmem %s3, %s174
      %s176 = smul.u32 2, %s14
      %v178 = vld [vmem:[%s169] sm:$0xff]
      %v179 = vld [vmem:[%s169 + $0x8] sm:$0xff]
      %v180 = vld [vmem:[%s169 + $0x10] sm:$0xf]
      %v181 = vld [vmem:[%s169 + $0x14] sm:$0xff]
      %v182 = vld [vmem:[%s169 + $0x1c] sm:$0xff]
      %v183 = vld [vmem:[%s169 + $0x24] sm:$0xf]
      %v184 = vld [vmem:[%s1] sm:$0xf]
      %v185 = vld [vmem:[%s1 + $0x4] sm:$0xf]
      %v186 = vld [vmem:[%s1 + $0x8] sm:$0xf]
      %v187 = vld [vmem:[%s1 + $0xc] sm:$0xf]
      %v188 = vld [vmem:[%s1 + $0x10] sm:$0xf]
      %v189 = vld [vmem:[%s1 + $0x14] sm:$0xf]
      %v190 = vld [vmem:[%s1 + $0x18] sm:$0xf]
      %v191 = vld [vmem:[%s1 + $0x1c] sm:$0xf]
      %v192 = vld [vmem:[%s1 + $0x20] sm:$0xf]
      %v193 = vld [vmem:[%s1 + $0x24] sm:$0xf]
      %v194 = vld [vmem:[%s1 + $0x28] sm:$0xf]
      %v195 = vld [vmem:[%s1 + $0x2c] sm:$0xf]
      %v196 = vld [vmem:[%s1 + $0x30] sm:$0xf]
      %v197 = vld [vmem:[%s1 + $0x34] sm:$0xf]
      %v198 = vld [vmem:[%s1 + $0x38] sm:$0xf]
      %v199 = vld [vmem:[%s1 + $0x3c] sm:$0xf]
      %v200 = vld [vmem:[%s1 + $0x40] sm:$0xf]
      %v201 = vld [vmem:[%s1 + $0x44] sm:$0xf]
      %v202 = vld [vmem:[%s1 + $0x48] sm:$0xf]
      %v203 = vld [vmem:[%s1 + $0x4c] sm:$0xf]
      %v204 = vld [vmem:[%s1 + $0x50] sm:$0xf]
      %v205 = vld [vmem:[%s1 + $0x54] sm:$0xf]
      %v206 = vld [vmem:[%s1 + $0x58] sm:$0xf]
      %v207 = vld [vmem:[%s1 + $0x5c] sm:$0xf]
      %v208 = vld [vmem:[%s1 + $0x60] sm:$0xf]
      %v209 = vld [vmem:[%s1 + $0x64] sm:$0xf]
      %v210 = vld [vmem:[%s1 + $0x68] sm:$0xf]
      %v211 = vld [vmem:[%s1 + $0x6c] sm:$0xf]
      %v212 = vld [vmem:[%s1 + $0x70] sm:$0xf]
      %v213 = vld [vmem:[%s1 + $0x74] sm:$0xf]
      %v214 = vld [vmem:[%s1 + $0x78] sm:$0xf]
      %v215 = vld [vmem:[%s1 + $0x7c] sm:$0xf]
      %v216 = vld [vmem:[%s1 + $0x80] sm:$0xf]
      %v217 = vld [vmem:[%s1 + $0x84] sm:$0xf]
      %v218 = vld [vmem:[%s1 + $0x88] sm:$0xf]
      %v219 = vld [vmem:[%s1 + $0x8c] sm:$0xf]
      %v220 = vld [vmem:[%s1 + $0x90] sm:$0xf]
      %v221 = vld [vmem:[%s1 + $0x94] sm:$0xf]
      %v222 = vld [vmem:[%s1 + $0x98] sm:$0xf]
      %v223 = vld [vmem:[%s1 + $0x9c] sm:$0xf]
      %v224 = vld [vmem:[%s1 + $0xa0] sm:$0xf]
      %v225 = vld [vmem:[%s1 + $0xa4] sm:$0xf]
      %v226 = vld [vmem:[%s1 + $0xa8] sm:$0xf]
      %v227 = vld [vmem:[%s1 + $0xac] sm:$0xf]
      %v228 = vld [vmem:[%s1 + $0xb0] sm:$0xf]
      %v229 = vld [vmem:[%s1 + $0xb4] sm:$0xf]
      %v230 = vld [vmem:[%s1 + $0xb8] sm:$0xf]
      %v231 = vld [vmem:[%s1 + $0xbc] sm:$0xf]
      %v232 = vld [vmem:[%s1 + $0xc0] sm:$0xf]
      %v233 = vld [vmem:[%s1 + $0xc4] sm:$0xf]
      %v234 = vld [vmem:[%s1 + $0xc8] sm:$0xf]
      %v235 = vld [vmem:[%s1 + $0xcc] sm:$0xf]
      %v236 = vld [vmem:[%s1 + $0xd0] sm:$0xf]
      %v237 = vld [vmem:[%s1 + $0xd4] sm:$0xf]
      %v238 = vld [vmem:[%s1 + $0xd8] sm:$0xf]
      %v239 = vld [vmem:[%s1 + $0xdc] sm:$0xf]
      %v240 = vld [vmem:[%s1 + $0xe0] sm:$0xf]
      %v241 = vld [vmem:[%s1 + $0xe4] sm:$0xf]
      %v242 = vld [vmem:[%s1 + $0xe8] sm:$0xf]
      %v243 = vld [vmem:[%s1 + $0xec] sm:$0xf]
      %v244 = vld [vmem:[%s1 + $0xf0] sm:$0xf]
      %v245 = vld [vmem:[%s1 + $0xf4] sm:$0xf]
      %v246 = vld [vmem:[%s1 + $0xf8] sm:$0xf]
      %v247 = vld [vmem:[%s1 + $0xfc] sm:$0xf]
      %v248 = vld [vmem:[%s1 + $0x100] sm:$0xf]
      %v249 = vld [vmem:[%s1 + $0x104] sm:$0xf]
      %v250 = vld [vmem:[%s1 + $0x108] sm:$0xf]
      %v251 = vld [vmem:[%s1 + $0x10c] sm:$0xf]
      %v252 = vld [vmem:[%s1 + $0x110] sm:$0xf]
      %v253 = vld [vmem:[%s1 + $0x114] sm:$0xf]
      %v254 = vld [vmem:[%s1 + $0x118] sm:$0xf]
      %v255 = vld [vmem:[%s1 + $0x11c] sm:$0xf]
      %v256 = vld [vmem:[%s1 + $0x120] sm:$0xf]
      %v257 = vld [vmem:[%s1 + $0x124] sm:$0xf]
      %v258 = vld [vmem:[%s1 + $0x128] sm:$0xf]
      %v259 = vld [vmem:[%s1 + $0x12c] sm:$0xf]
      %v260 = vld [vmem:[%s1 + $0x130] sm:$0xf]
      %v261 = vld [vmem:[%s1 + $0x134] sm:$0xf]
      %v262 = vld [vmem:[%s1 + $0x138] sm:$0xf]
      %v263 = vld [vmem:[%s1 + $0x13c] sm:$0xf]
      %v264 = vld [vmem:[%s2] sm:$0x1]
      %v266 = vlaneseq
      %v267 = vshrl.u32 %v266, 7
      %v268 = vsub.s32 0, %v267
      %v269 = vrot.slane %v264, %v268
      %v277 = vunpack.c.l.b16 %v178
      %v278 = vunpack.c.h.b16 %v178
      %v279 = vunpack.c.l.b16 %v179
      %v280 = vunpack.c.h.b16 %v179
      %v281 = vunpack.c.l.b16 %v180
      %v282 = vunpack.c.l.b16 %v181
      %v283 = vunpack.c.h.b16 %v181
      %v284 = vunpack.c.l.b16 %v182
      %v285 = vunpack.c.h.b16 %v182
      %v286 = vunpack.c.l.b16 %v183
      %v287 = vpack.c.b16 %v282, %v277
      %v288 = vpack.c.b16 %v283, %v278
      %v289 = vpack.c.b16 %v284, %v279
      %v290 = vpack.c.b16 %v285, %v280
      %v291 = vpack.c.b16 %v286, %v281
      %v377 = vunpack.c.l.b16 %v184
      %v378 = vunpack.c.l.b16 %v185
      %v379 = vunpack.c.l.b16 %v186
      %v380 = vunpack.c.l.b16 %v187
      %v381 = vunpack.c.l.b16 %v188
      %v382 = vunpack.c.l.b16 %v189
      %v383 = vunpack.c.l.b16 %v190
      %v384 = vunpack.c.l.b16 %v191
      %v385 = vunpack.c.l.b16 %v192
      %v386 = vunpack.c.l.b16 %v193
      %v387 = vunpack.c.l.b16 %v194
      %v388 = vunpack.c.l.b16 %v195
      %v389 = vunpack.c.l.b16 %v196
      %v390 = vunpack.c.l.b16 %v197
      %v391 = vunpack.c.l.b16 %v198
      %v392 = vunpack.c.l.b16 %v199
      %v393 = vunpack.c.l.b16 %v200
      %v394 = vunpack.c.l.b16 %v201
      %v395 = vunpack.c.l.b16 %v202
      %v396 = vunpack.c.l.b16 %v203
      %v397 = vunpack.c.l.b16 %v204
      %v398 = vunpack.c.l.b16 %v205
      %v399 = vunpack.c.l.b16 %v206
      %v400 = vunpack.c.l.b16 %v207
      %v401 = vunpack.c.l.b16 %v208
      %v402 = vunpack.c.l.b16 %v209
      %v403 = vunpack.c.l.b16 %v210
      %v404 = vunpack.c.l.b16 %v211
      %v405 = vunpack.c.l.b16 %v212
      %v406 = vunpack.c.l.b16 %v213
      %v407 = vunpack.c.l.b16 %v214
      %v408 = vunpack.c.l.b16 %v215
      %v409 = vunpack.c.l.b16 %v216
      %v410 = vunpack.c.l.b16 %v217
      %v411 = vunpack.c.l.b16 %v218
      %v412 = vunpack.c.l.b16 %v219
      %v413 = vunpack.c.l.b16 %v220
      %v414 = vunpack.c.l.b16 %v221
      %v415 = vunpack.c.l.b16 %v222
      %v416 = vunpack.c.l.b16 %v223
      %v417 = vunpack.c.l.b16 %v224
      %v418 = vunpack.c.l.b16 %v225
      %v419 = vunpack.c.l.b16 %v226
      %v420 = vunpack.c.l.b16 %v227
      %v421 = vunpack.c.l.b16 %v228
      %v422 = vunpack.c.l.b16 %v229
      %v423 = vunpack.c.l.b16 %v230
      %v424 = vunpack.c.l.b16 %v231
      %v425 = vunpack.c.l.b16 %v232
      %v426 = vunpack.c.l.b16 %v233
      %v427 = vunpack.c.l.b16 %v234
      %v428 = vunpack.c.l.b16 %v235
      %v429 = vunpack.c.l.b16 %v236
      %v430 = vunpack.c.l.b16 %v237
      %v431 = vunpack.c.l.b16 %v238
      %v432 = vunpack.c.l.b16 %v239
      %v433 = vunpack.c.l.b16 %v240
      %v434 = vunpack.c.l.b16 %v241
      %v435 = vunpack.c.l.b16 %v242
      %v436 = vunpack.c.l.b16 %v243
      %v437 = vunpack.c.l.b16 %v244
      %v438 = vunpack.c.l.b16 %v245
      %v439 = vunpack.c.l.b16 %v246
      %v440 = vunpack.c.l.b16 %v247
      %v441 = vunpack.c.l.b16 %v248
      %v442 = vunpack.c.l.b16 %v249
      %v443 = vunpack.c.l.b16 %v250
      %v444 = vunpack.c.l.b16 %v251
      %v445 = vunpack.c.l.b16 %v252
      %v446 = vunpack.c.l.b16 %v253
      %v447 = vunpack.c.l.b16 %v254
      %v448 = vunpack.c.l.b16 %v255
      %v449 = vunpack.c.l.b16 %v256
      %v450 = vunpack.c.l.b16 %v257
      %v451 = vunpack.c.l.b16 %v258
      %v452 = vunpack.c.l.b16 %v259
      %v453 = vunpack.c.l.b16 %v260
      %v454 = vunpack.c.l.b16 %v261
      %v455 = vunpack.c.l.b16 %v262
      %v456 = vunpack.c.l.b16 %v263
      %v457 = vpack.c.b16 %v378, %v377
      %v458 = vpack.c.b16 %v380, %v379
      %v459 = vpack.c.b16 %v382, %v381
      %v460 = vpack.c.b16 %v384, %v383
      %v461 = vpack.c.b16 %v386, %v385
      %v462 = vpack.c.b16 %v388, %v387
      %v463 = vpack.c.b16 %v390, %v389
      %v464 = vpack.c.b16 %v392, %v391
      %v465 = vpack.c.b16 %v394, %v393
      %v466 = vpack.c.b16 %v396, %v395
      %v467 = vpack.c.b16 %v398, %v397
      %v468 = vpack.c.b16 %v400, %v399
      %v469 = vpack.c.b16 %v402, %v401
      %v470 = vpack.c.b16 %v404, %v403
      %v471 = vpack.c.b16 %v406, %v405
      %v472 = vpack.c.b16 %v408, %v407
      %v473 = vpack.c.b16 %v410, %v409
      %v474 = vpack.c.b16 %v412, %v411
      %v475 = vpack.c.b16 %v414, %v413
      %v476 = vpack.c.b16 %v416, %v415
      %v477 = vpack.c.b16 %v418, %v417
      %v478 = vpack.c.b16 %v420, %v419
      %v479 = vpack.c.b16 %v422, %v421
      %v480 = vpack.c.b16 %v424, %v423
      %v481 = vpack.c.b16 %v426, %v425
      %v482 = vpack.c.b16 %v428, %v427
      %v483 = vpack.c.b16 %v430, %v429
      %v484 = vpack.c.b16 %v432, %v431
      %v485 = vpack.c.b16 %v434, %v433
      %v486 = vpack.c.b16 %v436, %v435
      %v487 = vpack.c.b16 %v438, %v437
      %v488 = vpack.c.b16 %v440, %v439
      %v489 = vpack.c.b16 %v442, %v441
      %v490 = vpack.c.b16 %v444, %v443
      %v491 = vpack.c.b16 %v446, %v445
      %v492 = vpack.c.b16 %v448, %v447
      %v493 = vpack.c.b16 %v450, %v449
      %v494 = vpack.c.b16 %v452, %v451
      %v495 = vpack.c.b16 %v454, %v453
      %v496 = vpack.c.b16 %v456, %v455
      %537 = vmatprep.subr.bf16.mxu0 0
      %538 = vmatpush1.bf16.msra.mxu0 %v457
      %539 = vmatprep.subr.bf16.mxu0 0
      %540 = vmatpush1.bf16.msra.mxu0 %v458
      %541 = vmatprep.subr.bf16.mxu0 0
      %542 = vmatpush1.bf16.msra.mxu0 %v459
      %543 = vmatprep.subr.bf16.mxu0 0
      %544 = vmatpush1.bf16.msra.mxu0 %v460
      %545 = vmatprep.subr.bf16.mxu0 0
      %546 = vmatpush1.bf16.msra.mxu0 %v461
      %547 = vmatprep.subr.bf16.mxu0 0
      %548 = vmatpush1.bf16.msra.mxu0 %v462
      %549 = vmatprep.subr.bf16.mxu0 0
      %550 = vmatpush1.bf16.msra.mxu0 %v463
      %551 = vmatprep.subr.bf16.mxu0 0
      %552 = vmatpush1.bf16.msra.mxu0 %v464
      %553 = vmatprep.subr.bf16.mxu0 0
      %554 = vmatpush1.bf16.msra.mxu0 %v465
      %555 = vmatprep.subr.bf16.mxu0 0
      %556 = vmatpush1.bf16.msra.mxu0 %v466
      %557 = vmatprep.subr.bf16.mxu0 0
      %558 = vmatpush1.bf16.msra.mxu0 %v467
      %559 = vmatprep.subr.bf16.mxu0 0
      %560 = vmatpush1.bf16.msra.mxu0 %v468
      %561 = vmatprep.subr.bf16.mxu0 0
      %562 = vmatpush1.bf16.msra.mxu0 %v469
      %563 = vmatprep.subr.bf16.mxu0 0
      %564 = vmatpush1.bf16.msra.mxu0 %v470
      %565 = vmatprep.subr.bf16.mxu0 0
      %566 = vmatpush1.bf16.msra.mxu0 %v471
      %567 = vmatprep.subr.bf16.mxu0 0
      %568 = vmatpush1.bf16.msra.mxu0 %v472
      %569 = vmatprep.mubr.bf16.mxu0 %v288
      %570 = vmatmul.mubr.bf16.gmra.mrb[0].mxu0 %v287
      %v571 = vpop.f32.mrb[0].mxu0
      %v572 = vadd.f32 %v269, %v571
      %v573 = vpop.f32.mrb[0].mxu0
      %v574 = vpop.f32.mrb[0].mxu0
      %v575 = vadd.f32 %v269, %v574
      %v576 = vpop.f32.mrb[0].mxu0
      %577 = vdwg.mxu0
      %578 = vmatprep.subr.bf16.mxu0 0
      %579 = vmatpush1.bf16.msra.mxu0 %v473
      %580 = vmatprep.subr.bf16.mxu0 0
      %581 = vmatpush1.bf16.msra.mxu0 %v474
      %582 = vmatprep.subr.bf16.mxu0 0
      %583 = vmatpush1.bf16.msra.mxu0 %v475
      %584 = vmatprep.subr.bf16.mxu0 0
      %585 = vmatpush1.bf16.msra.mxu0 %v476
      %586 = vmatprep.subr.bf16.mxu0 0
      %587 = vmatpush1.bf16.msra.mxu0 %v477
      %588 = vmatprep.subr.bf16.mxu0 0
      %589 = vmatpush1.bf16.msra.mxu0 %v478
      %590 = vmatprep.subr.bf16.mxu0 0
      %591 = vmatpush1.bf16.msra.mxu0 %v479
      %592 = vmatprep.subr.bf16.mxu0 0
      %593 = vmatpush1.bf16.msra.mxu0 %v480
      %594 = vmatprep.subr.bf16.mxu0 0
      %595 = vmatpush1.bf16.msra.mxu0 %v481
      %596 = vmatprep.subr.bf16.mxu0 0
      %597 = vmatpush1.bf16.msra.mxu0 %v482
      %598 = vmatprep.subr.bf16.mxu0 0
      %599 = vmatpush1.bf16.msra.mxu0 %v483
      %600 = vmatprep.subr.bf16.mxu0 0
      %601 = vmatpush1.bf16.msra.mxu0 %v484
      %602 = vmatprep.subr.bf16.mxu0 0
      %603 = vmatpush1.bf16.msra.mxu0 %v485
      %604 = vmatprep.subr.bf16.mxu0 0
      %605 = vmatpush1.bf16.msra.mxu0 %v486
      %606 = vmatprep.subr.bf16.mxu0 0
      %607 = vmatpush1.bf16.msra.mxu0 %v487
      %608 = vmatprep.subr.bf16.mxu0 0
      %609 = vmatpush1.bf16.msra.mxu0 %v488
      %610 = vmatprep.mubr.bf16.mxu0 %v290
      %611 = vmatmul.mubr.bf16.gmra.mrb[0].mxu0 %v289
      %v612 = vpop.f32.mrb[0].mxu0
      %v613 = vadd.f32 %v572, %v612
      %v614 = vpop.f32.mrb[0].mxu0
      %v615 = vpop.f32.mrb[0].mxu0
      %v616 = vadd.f32 %v575, %v615
      %v617 = vpop.f32.mrb[0].mxu0
      %618 = vdwg.mxu0
      %619 = vmatprep.subr.bf16.mxu0 0
      %620 = vmatpush1.bf16.msra.mxu0 %v489
      %621 = vmatprep.subr.bf16.mxu0 0
      %622 = vmatpush1.bf16.msra.mxu0 %v490
      %623 = vmatprep.subr.bf16.mxu0 0
      %624 = vmatpush1.bf16.msra.mxu0 %v491
      %625 = vmatprep.subr.bf16.mxu0 0
      %626 = vmatpush1.bf16.msra.mxu0 %v492
      %627 = vmatprep.subr.bf16.mxu0 0
      %628 = vmatpush1.bf16.msra.mxu0 %v493
      %629 = vmatprep.subr.bf16.mxu0 0
      %630 = vmatpush1.bf16.msra.mxu0 %v494
      %631 = vmatprep.subr.bf16.mxu0 0
      %632 = vmatpush1.bf16.msra.mxu0 %v495
      %633 = vmatprep.subr.bf16.mxu0 0
      %634 = vmatpush1.bf16.msra.mxu0 %v496
      %635 = vmatprep.subr.bf16.mxu0 0
      %636 = vmatpush1.bf16.msra.mxu0 0
      %637 = vmatprep.subr.bf16.mxu0 0
      %638 = vmatpush1.bf16.msra.mxu0 0
      %639 = vmatprep.subr.bf16.mxu0 0
      %640 = vmatpush1.bf16.msra.mxu0 0
      %641 = vmatprep.subr.bf16.mxu0 0
      %642 = vmatpush1.bf16.msra.mxu0 0
      %643 = vmatprep.subr.bf16.mxu0 0
      %644 = vmatpush1.bf16.msra.mxu0 0
      %645 = vmatprep.subr.bf16.mxu0 0
      %646 = vmatpush1.bf16.msra.mxu0 0
      %647 = vmatprep.subr.bf16.mxu0 0
      %648 = vmatpush1.bf16.msra.mxu0 0
      %649 = vmatprep.subr.bf16.mxu0 0
      %650 = vmatpush1.bf16.msra.mxu0 0
      %651 = vmatprep.mubr.bf16.mxu0 0
      %652 = vmatmul.mubr.bf16.gmra.mrb[0].mxu0 %v291
      %v653 = vpop.f32.mrb[0].mxu0
      %v654 = vadd.f32 %v613, %v653
      %v655 = vpop.f32.mrb[0].mxu0
      %v656 = vpop.f32.mrb[0].mxu0
      %v657 = vadd.f32 %v616, %v656
      %v658 = vpop.f32.mrb[0].mxu0
      %659 = vdwg.mxu0
      %v660 = vmax.f32 %v654, 0.0
      %v661 = vmax.f32 %v657, 0.0
      %v662 = vpack.c.bf16 %v661, %v660
      %v664 = vunpack.c.l.b16 %v662
      %v665 = vunpack.c.h.b16 %v662
      %v666 = vpack.c.b16 %v664, %v664
      %v667 = vpack.c.b16 %v665, %v665
      %vm670 = vcmask 519168
      %671 = vst.msk [vmem:[%s175] sm:$0xf] %vm670, %v666
      %672 = vst.msk [vmem:[%s175 + $0x4] sm:$0xf] %vm670, %v667
      %s673 = smul.u32 2, %s14
      %p674 = scmp.lt.s32.totalorder %s673, 3
      %s675 = scalar_select %p674, %s673, 3
      %s676 = smul.addr %s675, 4
      %s677 = scalar_lea.vmem %s3, %s676
      // Predicated region
      $region33: #{_lambda_.6} parent=31 // pred_check
        %p678 = pneg %p100
      $region34: #{_lambda_.6} parent=31 // pred_check_branch
        %680 = sbr.rel (%p678) target = $region36
      $region35: #{_lambda_.6} parent=31 // pred_region
        %s681 = smul.u32 2, %s14
      $region36: #{_lambda_.6} parent=31 // pred_fallthru
        _
    $region32: #{_lambda_.6} parent=5 // pred_fallthru
      _
    %p682 = scmp.le.s32.totalorder 2, %s9
    // Predicated region
    $region37: #{_lambda_.6} parent=5 // pred_check
      %p683 = pneg %p682
    $region38: #{_lambda_.6} parent=5 // pred_check_branch
      %685 = sbr.rel (%p683) target = $region40
    $region39: #{_lambda_.6} parent=5 // pred_region
      %s686 = ssub.s32 %s9, 2
      // Predicated region
      $region41: #{_lambda_.6} parent=39 // pred_check
        %p687 = pneg %p106
      $region42: #{_lambda_.6} parent=39 // pred_check_branch
        %689 = sbr.rel (%p687) target = $region44
      $region43: #{_lambda_.6} parent=39 // pred_region
        %s690 = smul.u32 2, %s15
        %p691 = scmp.lt.s32.totalorder %s690, 3
        %s692 = scalar_select %p691, %s690, 3
        %s693 = smul.addr %s692, 4
        %s694 = scalar_lea.vmem %s3, %s693
      $region44: #{_lambda_.6} parent=39 // pred_fallthru
        _
    $region40: #{_lambda_.6} parent=5 // pred_fallthru
      _
  $region6: #{_lambda_.6} parent=0 // loop_footer
    %s13 = sadd.s32 1, %s9
  $region7: #{_lambda_.6} parent=0 // loop_footer_branch
    %8 = sbr.rel target = $region3
  $region8: #{_lambda_.6} parent=0 // loop_exit
    _

// kernel: _lambda_.7
$region0: #{_lambda_.7}
  #allocation0 [shape = 'u32[]', space=smem, size = 0x4, offset = 0x4, fixed_abs, tag = 'smem constant byte address 0x4 - core index']
  #allocation1 [shape = 'u32[144,128]{1,0:T(1,128)}', space=vmem, size = 0x12000, scoped, tag = 'internal scratch']
  %s0 = inlined_call_operand.vmem [shape: bf16[8,1024], index: 0, kind: input, shape index: {}]
  %s1 = inlined_call_operand.vmem [shape: bf16[3,1024,1024], index: 1, kind: input, shape index: {}]
  %s2 = inlined_call_operand.vmem [shape: f32[3,1,1024], index: 2, kind: input, shape index: {}]
  %s3 = inlined_call_operand.vmem [shape: bf16[3,1024,128], index: 3, kind: input, shape index: {}]
  %s4 = inlined_call_operand.vmem [shape: f32[3,1,128], index: 4, kind: input, shape index: {}]
  %s5 = inlined_call_operand.vmem [shape: f32[3,8,128], index: 5, kind: output, shape index: {}]
  %s6 = sld [smem:[#allocation0]]
  $region53: #{_lambda_.7} parent=0
    _
  %s8 = ssub.s32 1, %s6
  %s9 = scalar_select 0, %s8, %s6
  loop: start=0, step=1, limit=5
  $region2: #{_lambda_.7} parent=0 // loop_pre_header
    _
  $region3: #{_lambda_.7} parent=0 // loop_header
    %s11 = sphi 0, %s15
    %p12 = scmp.ge.s32.totalorder %s11, 5
    %s18 = sphi 0, %s30
    %s19 = sphi 0, %s26
    %s20 = sphi 0, %s18
    %s21 = sphi 0, %s19
    %s22 = sphi 0, %s20
    %s23 = sphi 0, %s21
    %s33 = sphi 0, %s35
    %s36 = sphi 0, %s33
    %s37 = sphi 0, %s36
    %s53 = sphi 0, %s37
    %s59 = sphi 0, %s61
    %s62 = sphi 0, %s59
    %s63 = sphi 0, %s62
    %s79 = sphi 0, %s63
    %s85 = sphi 0, %s87
    %s88 = sphi 0, %s85
    %s89 = sphi 0, %s88
    %s105 = sphi 0, %s89
    %s111 = sphi 0, %s113
    %s114 = sphi 0, %s111
    %s115 = sphi 0, %s114
    %s131 = sphi 0, %s115
    %s137 = sphi 0, %s139
    %s140 = sphi 0, %s137
    %s141 = sphi 0, %s140
    %s157 = sphi 0, %s141
    %s165 = sphi 0, %s167
    %s168 = sphi 0, %s165
    %s169 = sphi 0, %s168
    %s185 = sphi 0, %s169
  $region4: #{_lambda_.7} parent=0 // loop_header_branch
    %14 = sbr.rel (%p12) target = $region8
  $region5: #{_lambda_.7} parent=0 // loop_body
    %s16 = ssub.s32 %s11, 1
    %s17 = ssub.s32 %s11, 2
    %s24 = sadd.s32 1, %s19
    %p25 = scmp.ge.s32.totalorder %s24, 1
    %s26 = scalar_select %p25, 0, %s24
    %s27 = sadd.s32 1, %s18
    %s28 = scalar_select %p25, %s27, %s18
    %p29 = scmp.ge.s32.totalorder %s28, 3
    %s30 = scalar_select %p29, 0, %s28
    %s31 = ssub.s32 %s19, %s26
    %p32 = scmp.eq.s32.totalorder %s31, 0
    %s34 = sadd.s32 %s33, 1
    %s35 = scalar_select %p32, %s33, %s34
    %p38 = pneg %p32
    %p39 = scmp.eq.s32.totalorder %s11, 2
    %p40 = por %p38, %p39
    %p41 = scmp.ne.s32.totalorder %s33, %s36
    %p42 = scmp.eq.s32.totalorder %s11, 0
    %p43 = por %p41, %p42
    %p44 = scmp.ne.s32.totalorder %s33, %s36
    %p45 = scmp.eq.s32.totalorder %s16, 2
    %p46 = por %p44, %p45
    %p47 = scmp.ne.s32.totalorder %s36, %s37
    %p48 = scmp.eq.s32.totalorder %s16, 0
    %p49 = por %p47, %p48
    %p50 = scmp.ne.s32.totalorder %s36, %s37
    %p51 = scmp.eq.s32.totalorder %s17, 2
    %p52 = por %p50, %p51
    %p54 = scmp.ne.s32.totalorder %s37, %s53
    %p55 = scmp.eq.s32.totalorder %s17, 0
    %p56 = por %p54, %p55
    %s57 = ssub.s32 %s18, %s30
    %p58 = scmp.eq.s32.totalorder %s57, 0
    %s60 = sadd.s32 %s59, 1
    %s61 = scalar_select %p58, %s59, %s60
    %p64 = pneg %p58
    %p65 = scmp.eq.s32.totalorder %s11, 2
    %p66 = por %p64, %p65
    %p67 = scmp.ne.s32.totalorder %s59, %s62
    %p68 = scmp.eq.s32.totalorder %s11, 0
    %p69 = por %p67, %p68
    %p70 = scmp.ne.s32.totalorder %s59, %s62
    %p71 = scmp.eq.s32.totalorder %s16, 2
    %p72 = por %p70, %p71
    %p73 = scmp.ne.s32.totalorder %s62, %s63
    %p74 = scmp.eq.s32.totalorder %s16, 0
    %p75 = por %p73, %p74
    %p76 = scmp.ne.s32.totalorder %s62, %s63
    %p77 = scmp.eq.s32.totalorder %s17, 2
    %p78 = por %p76, %p77
    %p80 = scmp.ne.s32.totalorder %s63, %s79
    %p81 = scmp.eq.s32.totalorder %s17, 0
    %p82 = por %p80, %p81
    %s83 = ssub.s32 %s18, %s30
    %p84 = scmp.eq.s32.totalorder %s83, 0
    %s86 = sadd.s32 %s85, 1
    %s87 = scalar_select %p84, %s85, %s86
    %p90 = pneg %p84
    %p91 = scmp.eq.s32.totalorder %s11, 2
    %p92 = por %p90, %p91
    %p93 = scmp.ne.s32.totalorder %s85, %s88
    %p94 = scmp.eq.s32.totalorder %s11, 0
    %p95 = por %p93, %p94
    %p96 = scmp.ne.s32.totalorder %s85, %s88
    %p97 = scmp.eq.s32.totalorder %s16, 2
    %p98 = por %p96, %p97
    %p99 = scmp.ne.s32.totalorder %s88, %s89
    %p100 = scmp.eq.s32.totalorder %s16, 0
    %p101 = por %p99, %p100
    %p102 = scmp.ne.s32.totalorder %s88, %s89
    %p103 = scmp.eq.s32.totalorder %s17, 2
    %p104 = por %p102, %p103
    %p106 = scmp.ne.s32.totalorder %s89, %s105
    %p107 = scmp.eq.s32.totalorder %s17, 0
    %p108 = por %p106, %p107
    %s109 = ssub.s32 %s18, %s30
    %p110 = scmp.eq.s32.totalorder %s109, 0
    %s112 = sadd.s32 %s111, 1
    %s113 = scalar_select %p110, %s111, %s112
    %p116 = pneg %p110
    %p117 = scmp.eq.s32.totalorder %s11, 2
    %p118 = por %p116, %p117
    %p119 = scmp.ne.s32.totalorder %s111, %s114
    %p120 = scmp.eq.s32.totalorder %s11, 0
    %p121 = por %p119, %p120
    %p122 = scmp.ne.s32.totalorder %s111, %s114
    %p123 = scmp.eq.s32.totalorder %s16, 2
    %p124 = por %p122, %p123
    %p125 = scmp.ne.s32.totalorder %s114, %s115
    %p126 = scmp.eq.s32.totalorder %s16, 0
    %p127 = por %p125, %p126
    %p128 = scmp.ne.s32.totalorder %s114, %s115
    %p129 = scmp.eq.s32.totalorder %s17, 2
    %p130 = por %p128, %p129
    %p132 = scmp.ne.s32.totalorder %s115, %s131
    %p133 = scmp.eq.s32.totalorder %s17, 0
    %p134 = por %p132, %p133
    %s135 = ssub.s32 %s18, %s30
    %p136 = scmp.eq.s32.totalorder %s135, 0
    %s138 = sadd.s32 %s137, 1
    %s139 = scalar_select %p136, %s137, %s138
    %p142 = pneg %p136
    %p143 = scmp.eq.s32.totalorder %s11, 2
    %p144 = por %p142, %p143
    %p145 = scmp.ne.s32.totalorder %s137, %s140
    %p146 = scmp.eq.s32.totalorder %s11, 0
    %p147 = por %p145, %p146
    %p148 = scmp.ne.s32.totalorder %s137, %s140
    %p149 = scmp.eq.s32.totalorder %s16, 2
    %p150 = por %p148, %p149
    %p151 = scmp.ne.s32.totalorder %s140, %s141
    %p152 = scmp.eq.s32.totalorder %s16, 0
    %p153 = por %p151, %p152
    %p154 = scmp.ne.s32.totalorder %s140, %s141
    %p155 = scmp.eq.s32.totalorder %s17, 2
    %p156 = por %p154, %p155
    %p158 = scmp.ne.s32.totalorder %s141, %s157
    %p159 = scmp.eq.s32.totalorder %s17, 0
    %p160 = por %p158, %p159
    %s161 = ssub.s32 %s18, %s30
    %s162 = ssub.s32 %s19, %s26
    %s163 = sor.u32 %s161, %s162
    %p164 = scmp.eq.s32.totalorder %s163, 0
    %s166 = sadd.s32 %s165, 1
    %s167 = scalar_select %p164, %s165, %s166
    %p170 = pneg %p164
    %p171 = scmp.eq.s32.totalorder %s11, 2
    %p172 = por %p170, %p171
    %p173 = scmp.ne.s32.totalorder %s165, %s168
    %p174 = scmp.eq.s32.totalorder %s11, 0
    %p175 = por %p173, %p174
    %p176 = scmp.ne.s32.totalorder %s165, %s168
    %p177 = scmp.eq.s32.totalorder %s16, 2
    %p178 = por %p176, %p177
    %p179 = scmp.ne.s32.totalorder %s168, %s169
    %p180 = scmp.eq.s32.totalorder %s16, 0
    %p181 = por %p179, %p180
    %p182 = scmp.ne.s32.totalorder %s168, %s169
    %p183 = scmp.eq.s32.totalorder %s17, 2
    %p184 = por %p182, %p183
    %p186 = scmp.ne.s32.totalorder %s169, %s185
    %p187 = scmp.eq.s32.totalorder %s17, 0
    %p188 = por %p186, %p187
    %p189 = scmp.le.s32.totalorder 1, %s11
    %p190 = scmp.lt.s32.totalorder %s11, 4
    %p191 = pnand %p189, %p190
    %p192 = pneg %p191
    // Predicated region
    $region9: #{_lambda_.7} parent=5 // pred_check
      _
    $region10: #{_lambda_.7} parent=5 // pred_check_branch
      %194 = sbr.rel (%p191) target = $region12
    $region11: #{_lambda_.7} parent=5 // pred_region
      %s195 = ssub.s32 %s11, 1
      // Predicated region
      $region13: #{_lambda_.7} parent=11 // pred_check
        %p196 = pneg %p49
      $region14: #{_lambda_.7} parent=11 // pred_check_branch
        %198 = sbr.rel (%p196) target = $region16
      $region15: #{_lambda_.7} parent=11 // pred_region
        %p199 = scmp.lt.s32.totalorder %s21, 0
        %s200 = scalar_select %p199, %s21, 0
        %s201 = smul.addr %s200, 8
        %s202 = smul.addr %s201, 4
        %s203 = scalar_lea.vmem %s0, %s202
      $region16: #{_lambda_.7} parent=11 // pred_fallthru
        _
    $region12: #{_lambda_.7} parent=5 // pred_fallthru
      _
    %p204 = scmp.lt.s32.totalorder %s11, 3
    // Predicated region
    $region17: #{_lambda_.7} parent=5 // pred_check
      %p205 = pneg %p204
    $region18: #{_lambda_.7} parent=5 // pred_check_branch
      %207 = sbr.rel (%p205) target = $region20
    $region19: #{_lambda_.7} parent=5 // pred_region
      // Predicated region
      $region21: #{_lambda_.7} parent=19 // pred_check
        %p208 = pneg %p69
      $region22: #{_lambda_.7} parent=19 // pred_check_branch
        %210 = sbr.rel (%p208) target = $region24
      $region23: #{_lambda_.7} parent=19 // pred_region
        %p211 = scmp.lt.s32.totalorder %s18, 2
        %s212 = scalar_select %p211, %s18, 2
        %s213 = smul.addr %s212, 1024
        %s214 = smul.addr %s213, 4
        %s215 = scalar_lea.vmem %s1, %s214
      $region24: #{_lambda_.7} parent=19 // pred_fallthru
        _
      // Predicated region
      $region25: #{_lambda_.7} parent=19 // pred_check
        %p216 = pneg %p95
      $region26: #{_lambda_.7} parent=19 // pred_check_branch
        %218 = sbr.rel (%p216) target = $region28
      $region27: #{_lambda_.7} parent=19 // pred_region
        %p219 = scmp.lt.s32.totalorder %s18, 2
        %s220 = scalar_select %p219, %s18, 2
        %s221 = smul.addr %s220, 8
        %s222 = scalar_lea.vmem %s2, %s221
      $region28: #{_lambda_.7} parent=19 // pred_fallthru
        _
      // Predicated region
      $region29: #{_lambda_.7} parent=19 // pred_check
        %p223 = pneg %p121
      $region30: #{_lambda_.7} parent=19 // pred_check_branch
        %225 = sbr.rel (%p223) target = $region32
      $region31: #{_lambda_.7} parent=19 // pred_region
        %p226 = scmp.lt.s32.totalorder %s18, 2
        %s227 = scalar_select %p226, %s18, 2
        %s228 = smul.addr %s227, 128
        %s229 = smul.addr %s228, 4
        %s230 = scalar_lea.vmem %s3, %s229
      $region32: #{_lambda_.7} parent=19 // pred_fallthru
        _
      // Predicated region
      $region33: #{_lambda_.7} parent=19 // pred_check
        %p231 = pneg %p147
      $region34: #{_lambda_.7} parent=19 // pred_check_branch
        %233 = sbr.rel (%p231) target = $region36
      $region35: #{_lambda_.7} parent=19 // pred_region
        %p234 = scmp.lt.s32.totalorder %s18, 2
        %s235 = scalar_select %p234, %s18, 2
        %s236 = scalar_lea.vmem %s4, %s235
      $region36: #{_lambda_.7} parent=19 // pred_fallthru
        _
    $region20: #{_lambda_.7} parent=5 // pred_fallthru
      _
    %p237 = scmp.le.s32.totalorder 1, %s11
    %p238 = scmp.lt.s32.totalorder %s11, 4
    %p239 = pnand %p237, %p238
    %p240 = pneg %p239
    // Predicated region
    $region37: #{_lambda_.7} parent=5 // pred_check
      _
    $region38: #{_lambda_.7} parent=5 // pred_check_branch
      %242 = sbr.rel (%p239) target = $region40
    $region39: #{_lambda_.7} parent=5 // pred_region
      %s243 = ssub.s32 %s11, 1
      %p244 = scmp.lt.s32.totalorder %s21, 0
      %s245 = scalar_select %p244, %s21, 0
      %s246 = smul.addr %s245, 8
      %s247 = smul.addr %s246, 4
      %s248 = scalar_lea.vmem %s0, %s247
      %p249 = pneg %p49
      %p250 = pneg %p46
      %p251 = scmp.lt.s32.totalorder %s20, 2
      %s252 = scalar_select %p251, %s20, 2
      %s253 = smul.addr %s252, 1024
      %s254 = smul.addr %s253, 4
      %s255 = scalar_lea.vmem %s1, %s254
      %p256 = pneg %p75
      %p257 = pneg %p72
      %p258 = scmp.lt.s32.totalorder %s20, 2
      %s259 = scalar_select %p258, %s20, 2
      %s260 = smul.addr %s259, 8
      %s261 = scalar_lea.vmem %s2, %s260
      %p262 = pneg %p101
      %p263 = pneg %p98
      %p264 = scmp.lt.s32.totalorder %s20, 2
      %s265 = scalar_select %p264, %s20, 2
      %s266 = smul.addr %s265, 128
      %s267 = smul.addr %s266, 4
      %s268 = scalar_lea.vmem %s3, %s267
      %p269 = pneg %p127
      %p270 = pneg %p124
      %p271 = scmp.lt.s32.totalorder %s20, 2
      %s272 = scalar_select %p271, %s20, 2
      %s273 = scalar_lea.vmem %s4, %s272
      %p274 = pneg %p153
      %p275 = pneg %p150
      %p276 = pneg %p181
      %p277 = pneg %p178
      %p278 = scmp.lt.s32.totalorder %s20, 2
      %s279 = scalar_select %p278, %s20, 2
      %p280 = scmp.lt.s32.totalorder %s21, 0
      %s281 = scalar_select %p280, %s21, 0
      %s282 = sadd.s32 %s281, %s279
      %s283 = smul.addr %s282, 8
      %s284 = scalar_lea.vmem %s5, %s283
      %p285 = scmp.lt.s32.totalorder %s21, 0
      %s286 = scalar_select %p285, %s21, 0
      %s287 = smul.addr %s286, 8
      %s288 = smul.addr %s287, 4
      %s289 = scalar_lea.vmem %s0, %s288
      %p290 = scmp.lt.s32.totalorder %s20, 2
      %s291 = scalar_select %p290, %s20, 2
      %s292 = smul.addr %s291, 1024
      %s293 = smul.addr %s292, 4
      %s294 = scalar_lea.vmem %s1, %s293
      %p295 = scmp.lt.s32.totalorder %s20, 2
      %s296 = scalar_select %p295, %s20, 2
      %s297 = smul.addr %s296, 8
      %s298 = scalar_lea.vmem %s2, %s297
      %p299 = scmp.lt.s32.totalorder %s20, 2
      %s300 = scalar_select %p299, %s20, 2
      %s301 = smul.addr %s300, 128
      %s302 = smul.addr %s301, 4
      %s303 = scalar_lea.vmem %s3, %s302
      %p304 = scmp.lt.s32.totalorder %s20, 2
      %s305 = scalar_select %p304, %s20, 2
      %s306 = scalar_lea.vmem %s4, %s305
      %p307 = scmp.lt.s32.totalorder %s20, 2
      %s308 = scalar_select %p307, %s20, 2
      %p309 = scmp.lt.s32.totalorder %s21, 0
      %s310 = scalar_select %p309, %s21, 0
      %s311 = sadd.s32 %s310, %s308
      %s312 = smul.addr %s311, 8
      %s313 = scalar_lea.vmem %s5, %s312
      %v315 = vld [vmem:[%s289] sm:$0xff]
      %v316 = vld [vmem:[%s289 + $0x8] sm:$0xff]
      %v317 = vld [vmem:[%s289 + $0x10] sm:$0xff]
      %v318 = vld [vmem:[%s289 + $0x18] sm:$0xff]
      %v319 = vld [vmem:[%s294] sm:$0xff]
      %v320 = vld [vmem:[%s294 + $0x8] sm:$0xff]
      %v321 = vld [vmem:[%s294 + $0x10] sm:$0xff]
      %v322 = vld [vmem:[%s294 + $0x18] sm:$0xff]
      %v323 = vld [vmem:[%s294 + $0x20] sm:$0xff]
      %v324 = vld [vmem:[%s294 + $0x28] sm:$0xff]
      %v325 = vld [vmem:[%s294 + $0x30] sm:$0xff]
      %v326 = vld [vmem:[%s294 + $0x38] sm:$0xff]
      %v327 = vld [vmem:[%s294 + $0x40] sm:$0xff]
      %v328 = vld [vmem:[%s294 + $0x48] sm:$0xff]
      %v329 = vld [vmem:[%s294 + $0x50] sm:$0xff]
      %v330 = vld [vmem:[%s294 + $0x58] sm:$0xff]
      %v331 = vld [vmem:[%s294 + $0x60] sm:$0xff]
      %v332 = vld [vmem:[%s294 + $0x68] sm:$0xff]
      %v333 = vld [vmem:[%s294 + $0x70] sm:$0xff]
      %v334 = vld [vmem:[%s294 + $0x78] sm:$0xff]
      %v335 = vld [vmem:[%s294 + $0x80] sm:$0xff]
      %v336 = vld [vmem:[%s294 + $0x88] sm:$0xff]
      %v337 = vld [vmem:[%s294 + $0x90] sm:$0xff]
      %v338 = vld [vmem:[%s294 + $0x98] sm:$0xff]
      %v339 = vld [vmem:[%s294 + $0xa0] sm:$0xff]
      %v340 = vld [vmem:[%s294 + $0xa8] sm:$0xff]
      %v341 = vld [vmem:[%s294 + $0xb0] sm:$0xff]
      %v342 = vld [vmem:[%s294 + $0xb8] sm:$0xff]
      %v343 = vld [vmem:[%s294 + $0xc0] sm:$0xff]
      %v344 = vld [vmem:[%s294 + $0xc8] sm:$0xff]
      %v345 = vld [vmem:[%s294 + $0xd0] sm:$0xff]
      %v346 = vld [vmem:[%s294 + $0xd8] sm:$0xff]
      %v347 = vld [vmem:[%s294 + $0xe0] sm:$0xff]
      %v348 = vld [vmem:[%s294 + $0xe8] sm:$0xff]
      %v349 = vld [vmem:[%s294 + $0xf0] sm:$0xff]
      %v350 = vld [vmem:[%s294 + $0xf8] sm:$0xff]
      %v351 = vld [vmem:[%s294 + $0x100] sm:$0xff]
      %v352 = vld [vmem:[%s294 + $0x108] sm:$0xff]
      %v353 = vld [vmem:[%s294 + $0x110] sm:$0xff]
      %v354 = vld [vmem:[%s294 + $0x118] sm:$0xff]
      %v355 = vld [vmem:[%s294 + $0x120] sm:$0xff]
      %v356 = vld [vmem:[%s294 + $0x128] sm:$0xff]
      %v357 = vld [vmem:[%s294 + $0x130] sm:$0xff]
      %v358 = vld [vmem:[%s294 + $0x138] sm:$0xff]
      %v359 = vld [vmem:[%s294 + $0x140] sm:$0xff]
      %v360 = vld [vmem:[%s294 + $0x148] sm:$0xff]
      %v361 = vld [vmem:[%s294 + $0x150] sm:$0xff]
      %v362 = vld [vmem:[%s294 + $0x158] sm:$0xff]
      %v363 = vld [vmem:[%s294 + $0x160] sm:$0xff]
      %v364 = vld [vmem:[%s294 + $0x168] sm:$0xff]
      %v365 = vld [vmem:[%s294 + $0x170] sm:$0xff]
      %v366 = vld [vmem:[%s294 + $0x178] sm:$0xff]
      %v367 = vld [vmem:[%s294 + $0x180] sm:$0xff]
      %v368 = vld [vmem:[%s294 + $0x188] sm:$0xff]
      %v369 = vld [vmem:[%s294 + $0x190] sm:$0xff]
      %v370 = vld [vmem:[%s294 + $0x198] sm:$0xff]
      %v371 = vld [vmem:[%s294 + $0x1a0] sm:$0xff]
      %v372 = vld [vmem:[%s294 + $0x1a8] sm:$0xff]
      %v373 = vld [vmem:[%s294 + $0x1b0] sm:$0xff]
      %v374 = vld [vmem:[%s294 + $0x1b8] sm:$0xff]
      %v375 = vld [vmem:[%s294 + $0x1c0] sm:$0xff]
      %v376 = vld [vmem:[%s294 + $0x1c8] sm:$0xff]
      %v377 = vld [vmem:[%s294 + $0x1d0] sm:$0xff]
      %v378 = vld [vmem:[%s294 + $0x1d8] sm:$0xff]
      %v379 = vld [vmem:[%s294 + $0x1e0] sm:$0xff]
      %v380 = vld [vmem:[%s294 + $0x1e8] sm:$0xff]
      %v381 = vld [vmem:[%s294 + $0x1f0] sm:$0xff]
      %v382 = vld [vmem:[%s294 + $0x1f8] sm:$0xff]
      %v383 = vld [vmem:[%s294 + $0x200] sm:$0xff]
      %v384 = vld [vmem:[%s294 + $0x208] sm:$0xff]
      %v385 = vld [vmem:[%s294 + $0x210] sm:$0xff]
      %v386 = vld [vmem:[%s294 + $0x218] sm:$0xff]
      %v387 = vld [vmem:[%s294 + $0x220] sm:$0xff]
      %v388 = vld [vmem:[%s294 + $0x228] sm:$0xff]
      %v389 = vld [vmem:[%s294 + $0x230] sm:$0xff]
      %v390 = vld [vmem:[%s294 + $0x238] sm:$0xff]
      %v391 = vld [vmem:[%s294 + $0x240] sm:$0xff]
      %v392 = vld [vmem:[%s294 + $0x248] sm:$0xff]
      %v393 = vld [vmem:[%s294 + $0x250] sm:$0xff]
      %v394 = vld [vmem:[%s294 + $0x258] sm:$0xff]
      %v395 = vld [vmem:[%s294 + $0x260] sm:$0xff]
      %v396 = vld [vmem:[%s294 + $0x268] sm:$0xff]
      %v397 = vld [vmem:[%s294 + $0x270] sm:$0xff]
      %v398 = vld [vmem:[%s294 + $0x278] sm:$0xff]
      %v399 = vld [vmem:[%s294 + $0x280] sm:$0xff]
      %v400 = vld [vmem:[%s294 + $0x288] sm:$0xff]
      %v401 = vld [vmem:[%s294 + $0x290] sm:$0xff]
      %v402 = vld [vmem:[%s294 + $0x298] sm:$0xff]
      %v403 = vld [vmem:[%s294 + $0x2a0] sm:$0xff]
      %v404 = vld [vmem:[%s294 + $0x2a8] sm:$0xff]
      %v405 = vld [vmem:[%s294 + $0x2b0] sm:$0xff]
      %v406 = vld [vmem:[%s294 + $0x2b8] sm:$0xff]
      %v407 = vld [vmem:[%s294 + $0x2c0] sm:$0xff]
      %v408 = vld [vmem:[%s294 + $0x2c8] sm:$0xff]
      %v409 = vld [vmem:[%s294 + $0x2d0] sm:$0xff]
      %v410 = vld [vmem:[%s294 + $0x2d8] sm:$0xff]
      %v411 = vld [vmem:[%s294 + $0x2e0] sm:$0xff]
      %v412 = vld [vmem:[%s294 + $0x2e8] sm:$0xff]
      %v413 = vld [vmem:[%s294 + $0x2f0] sm:$0xff]
      %v414 = vld [vmem:[%s294 + $0x2f8] sm:$0xff]
      %v415 = vld [vmem:[%s294 + $0x300] sm:$0xff]
      %v416 = vld [vmem:[%s294 + $0x308] sm:$0xff]
      %v417 = vld [vmem:[%s294 + $0x310] sm:$0xff]
      %v418 = vld [vmem:[%s294 + $0x318] sm:$0xff]
      %v419 = vld [vmem:[%s294 + $0x320] sm:$0xff]
      %v420 = vld [vmem:[%s294 + $0x328] sm:$0xff]
      %v421 = vld [vmem:[%s294 + $0x330] sm:$0xff]
      %v422 = vld [vmem:[%s294 + $0x338] sm:$0xff]
      %v423 = vld [vmem:[%s294 + $0x340] sm:$0xff]
      %v424 = vld [vmem:[%s294 + $0x348] sm:$0xff]
      %v425 = vld [vmem:[%s294 + $0x350] sm:$0xff]
      %v426 = vld [vmem:[%s294 + $0x358] sm:$0xff]
      %v427 = vld [vmem:[%s294 + $0x360] sm:$0xff]
      %v428 = vld [vmem:[%s294 + $0x368] sm:$0xff]
      %v429 = vld [vmem:[%s294 + $0x370] sm:$0xff]
      %v430 = vld [vmem:[%s294 + $0x378] sm:$0xff]
      %v431 = vld [vmem:[%s294 + $0x380] sm:$0xff]
      %v432 = vld [vmem:[%s294 + $0x388] sm:$0xff]
      %v433 = vld [vmem:[%s294 + $0x390] sm:$0xff]
      %v434 = vld [vmem:[%s294 + $0x398] sm:$0xff]
      %v435 = vld [vmem:[%s294 + $0x3a0] sm:$0xff]
      %v436 = vld [vmem:[%s294 + $0x3a8] sm:$0xff]
      %v437 = vld [vmem:[%s294 + $0x3b0] sm:$0xff]
      %v438 = vld [vmem:[%s294 + $0x3b8] sm:$0xff]
      %v439 = vld [vmem:[%s294 + $0x3c0] sm:$0xff]
      %v440 = vld [vmem:[%s294 + $0x3c8] sm:$0xff]
      %v441 = vld [vmem:[%s294 + $0x3d0] sm:$0xff]
      %v442 = vld [vmem:[%s294 + $0x3d8] sm:$0xff]
      %v443 = vld [vmem:[%s294 + $0x3e0] sm:$0xff]
      %v444 = vld [vmem:[%s294 + $0x3e8] sm:$0xff]
      %v445 = vld [vmem:[%s294 + $0x3f0] sm:$0xff]
      %v446 = vld [vmem:[%s294 + $0x3f8] sm:$0xff]
      %v447 = vld [vmem:[%s294 + $0x400] sm:$0xff]
      %v448 = vld [vmem:[%s294 + $0x408] sm:$0xff]
      %v449 = vld [vmem:[%s294 + $0x410] sm:$0xff]
      %v450 = vld [vmem:[%s294 + $0x418] sm:$0xff]
      %v451 = vld [vmem:[%s294 + $0x420] sm:$0xff]
      %v452 = vld [vmem:[%s294 + $0x428] sm:$0xff]
      %v453 = vld [vmem:[%s294 + $0x430] sm:$0xff]
      %v454 = vld [vmem:[%s294 + $0x438] sm:$0xff]
      %v455 = vld [vmem:[%s294 + $0x440] sm:$0xff]
      %v456 = vld [vmem:[%s294 + $0x448] sm:$0xff]
      %v457 = vld [vmem:[%s294 + $0x450] sm:$0xff]
      %v458 = vld [vmem:[%s294 + $0x458] sm:$0xff]
      %v459 = vld [vmem:[%s294 + $0x460] sm:$0xff]
      %v460 = vld [vmem:[%s294 + $0x468] sm:$0xff]
      %v461 = vld [vmem:[%s294 + $0x470] sm:$0xff]
      %v462 = vld [vmem:[%s294 + $0x478] sm:$0xff]
      %v463 = vld [vmem:[%s294 + $0x480] sm:$0xff]
      %v464 = vld [vmem:[%s294 + $0x488] sm:$0xff]
      %v465 = vld [vmem:[%s294 + $0x490] sm:$0xff]
      %v466 = vld [vmem:[%s294 + $0x498] sm:$0xff]
      %v467 = vld [vmem:[%s294 + $0x4a0] sm:$0xff]
      %v468 = vld [vmem:[%s294 + $0x4a8] sm:$0xff]
      %v469 = vld [vmem:[%s294 + $0x4b0] sm:$0xff]
      %v470 = vld [vmem:[%s294 + $0x4b8] sm:$0xff]
      %v471 = vld [vmem:[%s294 + $0x4c0] sm:$0xff]
      %v472 = vld [vmem:[%s294 + $0x4c8] sm:$0xff]
      %v473 = vld [vmem:[%s294 + $0x4d0] sm:$0xff]
      %v474 = vld [vmem:[%s294 + $0x4d8] sm:$0xff]
      %v475 = vld [vmem:[%s294 + $0x4e0] sm:$0xff]
      %v476 = vld [vmem:[%s294 + $0x4e8] sm:$0xff]
      %v477 = vld [vmem:[%s294 + $0x4f0] sm:$0xff]
      %v478 = vld [vmem:[%s294 + $0x4f8] sm:$0xff]
      %v479 = vld [vmem:[%s294 + $0x500] sm:$0xff]
      %v480 = vld [vmem:[%s294 + $0x508] sm:$0xff]
      %v481 = vld [vmem:[%s294 + $0x510] sm:$0xff]
      %v482 = vld [vmem:[%s294 + $0x518] sm:$0xff]
      %v483 = vld [vmem:[%s294 + $0x520] sm:$0xff]
      %v484 = vld [vmem:[%s294 + $0x528] sm:$0xff]
      %v485 = vld [vmem:[%s294 + $0x530] sm:$0xff]
      %v486 = vld [vmem:[%s294 + $0x538] sm:$0xff]
      %v487 = vld [vmem:[%s294 + $0x540] sm:$0xff]
      %v488 = vld [vmem:[%s294 + $0x548] sm:$0xff]
      %v489 = vld [vmem:[%s294 + $0x550] sm:$0xff]
      %v490 = vld [vmem:[%s294 + $0x558] sm:$0xff]
      %v491 = vld [vmem:[%s294 + $0x560] sm:$0xff]
      %v492 = vld [vmem:[%s294 + $0x568] sm:$0xff]
      %v493 = vld [vmem:[%s294 + $0x570] sm:$0xff]
      %v494 = vld [vmem:[%s294 + $0x578] sm:$0xff]
      %v495 = vld [vmem:[%s294 + $0x580] sm:$0xff]
      %v496 = vld [vmem:[%s294 + $0x588] sm:$0xff]
      %v497 = vld [vmem:[%s294 + $0x590] sm:$0xff]
      %v498 = vld [vmem:[%s294 + $0x598] sm:$0xff]
      %v499 = vld [vmem:[%s294 + $0x5a0] sm:$0xff]
      %v500 = vld [vmem:[%s294 + $0x5a8] sm:$0xff]
      %v501 = vld [vmem:[%s294 + $0x5b0] sm:$0xff]
      %v502 = vld [vmem:[%s294 + $0x5b8] sm:$0xff]
      %v503 = vld [vmem:[%s294 + $0x5c0] sm:$0xff]
      %v504 = vld [vmem:[%s294 + $0x5c8] sm:$0xff]
      %v505 = vld [vmem:[%s294 + $0x5d0] sm:$0xff]
      %v506 = vld [vmem:[%s294 + $0x5d8] sm:$0xff]
      %v507 = vld [vmem:[%s294 + $0x5e0] sm:$0xff]
      %v508 = vld [vmem:[%s294 + $0x5e8] sm:$0xff]
      %v509 = vld [vmem:[%s294 + $0x5f0] sm:$0xff]
      %v510 = vld [vmem:[%s294 + $0x5f8] sm:$0xff]
      %v511 = vld [vmem:[%s294 + $0x600] sm:$0xff]
      %v512 = vld [vmem:[%s294 + $0x608] sm:$0xff]
      %v513 = vld [vmem:[%s294 + $0x610] sm:$0xff]
      %v514 = vld [vmem:[%s294 + $0x618] sm:$0xff]
      %v515 = vld [vmem:[%s294 + $0x620] sm:$0xff]
      %v516 = vld [vmem:[%s294 + $0x628] sm:$0xff]
      %v517 = vld [vmem:[%s294 + $0x630] sm:$0xff]
      %v518 = vld [vmem:[%s294 + $0x638] sm:$0xff]
      %v519 = vld [vmem:[%s294 + $0x640] sm:$0xff]
      %v520 = vld [vmem:[%s294 + $0x648] sm:$0xff]
      %v521 = vld [vmem:[%s294 + $0x650] sm:$0xff]
      %v522 = vld [vmem:[%s294 + $0x658] sm:$0xff]
      %v523 = vld [vmem:[%s294 + $0x660] sm:$0xff]
      %v524 = vld [vmem:[%s294 + $0x668] sm:$0xff]
      %v525 = vld [vmem:[%s294 + $0x670] sm:$0xff]
      %v526 = vld [vmem:[%s294 + $0x678] sm:$0xff]
      %v527 = vld [vmem:[%s294 + $0x680] sm:$0xff]
      %v528 = vld [vmem:[%s294 + $0x688] sm:$0xff]
      %v529 = vld [vmem:[%s294 + $0x690] sm:$0xff]
      %v530 = vld [vmem:[%s294 + $0x698] sm:$0xff]
      %v531 = vld [vmem:[%s294 + $0x6a0] sm:$0xff]
      %v532 = vld [vmem:[%s294 + $0x6a8] sm:$0xff]
      %v533 = vld [vmem:[%s294 + $0x6b0] sm:$0xff]
      %v534 = vld [vmem:[%s294 + $0x6b8] sm:$0xff]
      %v535 = vld [vmem:[%s294 + $0x6c0] sm:$0xff]
      %v536 = vld [vmem:[%s294 + $0x6c8] sm:$0xff]
      %v537 = vld [vmem:[%s294 + $0x6d0] sm:$0xff]
      %v538 = vld [vmem:[%s294 + $0x6d8] sm:$0xff]
      %v539 = vld [vmem:[%s294 + $0x6e0] sm:$0xff]
      %v540 = vld [vmem:[%s294 + $0x6e8] sm:$0xff]
      %v541 = vld [vmem:[%s294 + $0x6f0] sm:$0xff]
      %v542 = vld [vmem:[%s294 + $0x6f8] sm:$0xff]
      %v543 = vld [vmem:[%s294 + $0x700] sm:$0xff]
      %v544 = vld [vmem:[%s294 + $0x708] sm:$0xff]
      %v545 = vld [vmem:[%s294 + $0x710] sm:$0xff]
      %v546 = vld [vmem:[%s294 + $0x718] sm:$0xff]
      %v547 = vld [vmem:[%s294 + $0x720] sm:$0xff]
      %v548 = vld [vmem:[%s294 + $0x728] sm:$0xff]
      %v549 = vld [vmem:[%s294 + $0x730] sm:$0xff]
      %v550 = vld [vmem:[%s294 + $0x738] sm:$0xff]
      %v551 = vld [vmem:[%s294 + $0x740] sm:$0xff]
      %v552 = vld [vmem:[%s294 + $0x748] sm:$0xff]
      %v553 = vld [vmem:[%s294 + $0x750] sm:$0xff]
      %v554 = vld [vmem:[%s294 + $0x758] sm:$0xff]
      %v555 = vld [vmem:[%s294 + $0x760] sm:$0xff]
      %v556 = vld [vmem:[%s294 + $0x768] sm:$0xff]
      %v557 = vld [vmem:[%s294 + $0x770] sm:$0xff]
      %v558 = vld [vmem:[%s294 + $0x778] sm:$0xff]
      %v559 = vld [vmem:[%s294 + $0x780] sm:$0xff]
      %v560 = vld [vmem:[%s294 + $0x788] sm:$0xff]
      %v561 = vld [vmem:[%s294 + $0x790] sm:$0xff]
      %v562 = vld [vmem:[%s294 + $0x798] sm:$0xff]
      %v563 = vld [vmem:[%s294 + $0x7a0] sm:$0xff]
      %v564 = vld [vmem:[%s294 + $0x7a8] sm:$0xff]
      %v565 = vld [vmem:[%s294 + $0x7b0] sm:$0xff]
      %v566 = vld [vmem:[%s294 + $0x7b8] sm:$0xff]
      %v567 = vld [vmem:[%s294 + $0x7c0] sm:$0xff]
      %v568 = vld [vmem:[%s294 + $0x7c8] sm:$0xff]
      %v569 = vld [vmem:[%s294 + $0x7d0] sm:$0xff]
      %v570 = vld [vmem:[%s294 + $0x7d8] sm:$0xff]
      %v571 = vld [vmem:[%s294 + $0x7e0] sm:$0xff]
      %v572 = vld [vmem:[%s294 + $0x7e8] sm:$0xff]
      %v573 = vld [vmem:[%s294 + $0x7f0] sm:$0xff]
      %v574 = vld [vmem:[%s294 + $0x7f8] sm:$0xff]
      %v575 = vld [vmem:[%s294 + $0x800] sm:$0xff]
      %v576 = vld [vmem:[%s294 + $0x808] sm:$0xff]
      %v577 = vld [vmem:[%s294 + $0x810] sm:$0xff]
      %v578 = vld [vmem:[%s294 + $0x818] sm:$0xff]
      %v579 = vld [vmem:[%s294 + $0x820] sm:$0xff]
      %v580 = vld [vmem:[%s294 + $0x828] sm:$0xff]
      %v581 = vld [vmem:[%s294 + $0x830] sm:$0xff]
      %v582 = vld [vmem:[%s294 + $0x838] sm:$0xff]
      %v583 = vld [vmem:[%s294 + $0x840] sm:$0xff]
      %v584 = vld [vmem:[%s294 + $0x848] sm:$0xff]
      %v585 = vld [vmem:[%s294 + $0x850] sm:$0xff]
      %v586 = vld [vmem:[%s294 + $0x858] sm:$0xff]
      %v587 = vld [vmem:[%s294 + $0x860] sm:$0xff]
      %v588 = vld [vmem:[%s294 + $0x868] sm:$0xff]
      %v589 = vld [vmem:[%s294 + $0x870] sm:$0xff]
      %v590 = vld [vmem:[%s294 + $0x878] sm:$0xff]
      %v591 = vld [vmem:[%s294 + $0x880] sm:$0xff]
      %v592 = vld [vmem:[%s294 + $0x888] sm:$0xff]
      %v593 = vld [vmem:[%s294 + $0x890] sm:$0xff]
      %v594 = vld [vmem:[%s294 + $0x898] sm:$0xff]
      %v595 = vld [vmem:[%s294 + $0x8a0] sm:$0xff]
      %v596 = vld [vmem:[%s294 + $0x8a8] sm:$0xff]
      %v597 = vld [vmem:[%s294 + $0x8b0] sm:$0xff]
      %v598 = vld [vmem:[%s294 + $0x8b8] sm:$0xff]
      %v599 = vld [vmem:[%s294 + $0x8c0] sm:$0xff]
      %v600 = vld [vmem:[%s294 + $0x8c8] sm:$0xff]
      %v601 = vld [vmem:[%s294 + $0x8d0] sm:$0xff]
      %v602 = vld [vmem:[%s294 + $0x8d8] sm:$0xff]
      %v603 = vld [vmem:[%s294 + $0x8e0] sm:$0xff]
      %v604 = vld [vmem:[%s294 + $0x8e8] sm:$0xff]
      %v605 = vld [vmem:[%s294 + $0x8f0] sm:$0xff]
      %v606 = vld [vmem:[%s294 + $0x8f8] sm:$0xff]
      %v607 = vld [vmem:[%s294 + $0x900] sm:$0xff]
      %v608 = vld [vmem:[%s294 + $0x908] sm:$0xff]
      %v609 = vld [vmem:[%s294 + $0x910] sm:$0xff]
      %v610 = vld [vmem:[%s294 + $0x918] sm:$0xff]
      %v611 = vld [vmem:[%s294 + $0x920] sm:$0xff]
      %v612 = vld [vmem:[%s294 + $0x928] sm:$0xff]
      %v613 = vld [vmem:[%s294 + $0x930] sm:$0xff]
      %v614 = vld [vmem:[%s294 + $0x938] sm:$0xff]
      %v615 = vld [vmem:[%s294 + $0x940] sm:$0xff]
      %v616 = vld [vmem:[%s294 + $0x948] sm:$0xff]
      %v617 = vld [vmem:[%s294 + $0x950] sm:$0xff]
      %v618 = vld [vmem:[%s294 + $0x958] sm:$0xff]
      %v619 = vld [vmem:[%s294 + $0x960] sm:$0xff]
      %v620 = vld [vmem:[%s294 + $0x968] sm:$0xff]
      %v621 = vld [vmem:[%s294 + $0x970] sm:$0xff]
      %v622 = vld [vmem:[%s294 + $0x978] sm:$0xff]
      %v623 = vld [vmem:[%s294 + $0x980] sm:$0xff]
      %v624 = vld [vmem:[%s294 + $0x988] sm:$0xff]
      %v625 = vld [vmem:[%s294 + $0x990] sm:$0xff]
      %v626 = vld [vmem:[%s294 + $0x998] sm:$0xff]
      %v627 = vld [vmem:[%s294 + $0x9a0] sm:$0xff]
      %v628 = vld [vmem:[%s294 + $0x9a8] sm:$0xff]
      %v629 = vld [vmem:[%s294 + $0x9b0] sm:$0xff]
      %v630 = vld [vmem:[%s294 + $0x9b8] sm:$0xff]
      %v631 = vld [vmem:[%s294 + $0x9c0] sm:$0xff]
      %v632 = vld [vmem:[%s294 + $0x9c8] sm:$0xff]
      %v633 = vld [vmem:[%s294 + $0x9d0] sm:$0xff]
      %v634 = vld [vmem:[%s294 + $0x9d8] sm:$0xff]
      %v635 = vld [vmem:[%s294 + $0x9e0] sm:$0xff]
      %v636 = vld [vmem:[%s294 + $0x9e8] sm:$0xff]
      %v637 = vld [vmem:[%s294 + $0x9f0] sm:$0xff]
      %v638 = vld [vmem:[%s294 + $0x9f8] sm:$0xff]
      %v639 = vld [vmem:[%s294 + $0xa00] sm:$0xff]
      %v640 = vld [vmem:[%s294 + $0xa08] sm:$0xff]
      %v641 = vld [vmem:[%s294 + $0xa10] sm:$0xff]
      %v642 = vld [vmem:[%s294 + $0xa18] sm:$0xff]
      %v643 = vld [vmem:[%s294 + $0xa20] sm:$0xff]
      %v644 = vld [vmem:[%s294 + $0xa28] sm:$0xff]
      %v645 = vld [vmem:[%s294 + $0xa30] sm:$0xff]
      %v646 = vld [vmem:[%s294 + $0xa38] sm:$0xff]
      %v647 = vld [vmem:[%s294 + $0xa40] sm:$0xff]
      %v648 = vld [vmem:[%s294 + $0xa48] sm:$0xff]
      %v649 = vld [vmem:[%s294 + $0xa50] sm:$0xff]
      %v650 = vld [vmem:[%s294 + $0xa58] sm:$0xff]
      %v651 = vld [vmem:[%s294 + $0xa60] sm:$0xff]
      %v652 = vld [vmem:[%s294 + $0xa68] sm:$0xff]
      %v653 = vld [vmem:[%s294 + $0xa70] sm:$0xff]
      %v654 = vld [vmem:[%s294 + $0xa78] sm:$0xff]
      %v655 = vld [vmem:[%s294 + $0xa80] sm:$0xff]
      %v656 = vld [vmem:[%s294 + $0xa88] sm:$0xff]
      %v657 = vld [vmem:[%s294 + $0xa90] sm:$0xff]
      %v658 = vld [vmem:[%s294 + $0xa98] sm:$0xff]
      %v659 = vld [vmem:[%s294 + $0xaa0] sm:$0xff]
      %v660 = vld [vmem:[%s294 + $0xaa8] sm:$0xff]
      %v661 = vld [vmem:[%s294 + $0xab0] sm:$0xff]
      %v662 = vld [vmem:[%s294 + $0xab8] sm:$0xff]
      %v663 = vld [vmem:[%s294 + $0xac0] sm:$0xff]
      %v664 = vld [vmem:[%s294 + $0xac8] sm:$0xff]
      %v665 = vld [vmem:[%s294 + $0xad0] sm:$0xff]
      %v666 = vld [vmem:[%s294 + $0xad8] sm:$0xff]
      %v667 = vld [vmem:[%s294 + $0xae0] sm:$0xff]
      %v668 = vld [vmem:[%s294 + $0xae8] sm:$0xff]
      %v669 = vld [vmem:[%s294 + $0xaf0] sm:$0xff]
      %v670 = vld [vmem:[%s294 + $0xaf8] sm:$0xff]
      %v671 = vld [vmem:[%s294 + $0xb00] sm:$0xff]
      %v672 = vld [vmem:[%s294 + $0xb08] sm:$0xff]
      %v673 = vld [vmem:[%s294 + $0xb10] sm:$0xff]
      %v674 = vld [vmem:[%s294 + $0xb18] sm:$0xff]
      %v675 = vld [vmem:[%s294 + $0xb20] sm:$0xff]
      %v676 = vld [vmem:[%s294 + $0xb28] sm:$0xff]
      %v677 = vld [vmem:[%s294 + $0xb30] sm:$0xff]
      %v678 = vld [vmem:[%s294 + $0xb38] sm:$0xff]
      %v679 = vld [vmem:[%s294 + $0xb40] sm:$0xff]
      %v680 = vld [vmem:[%s294 + $0xb48] sm:$0xff]
      %v681 = vld [vmem:[%s294 + $0xb50] sm:$0xff]
      %v682 = vld [vmem:[%s294 + $0xb58] sm:$0xff]
      %v683 = vld [vmem:[%s294 + $0xb60] sm:$0xff]
      %v684 = vld [vmem:[%s294 + $0xb68] sm:$0xff]
      %v685 = vld [vmem:[%s294 + $0xb70] sm:$0xff]
      %v686 = vld [vmem:[%s294 + $0xb78] sm:$0xff]
      %v687 = vld [vmem:[%s294 + $0xb80] sm:$0xff]
      %v688 = vld [vmem:[%s294 + $0xb88] sm:$0xff]
      %v689 = vld [vmem:[%s294 + $0xb90] sm:$0xff]
      %v690 = vld [vmem:[%s294 + $0xb98] sm:$0xff]
      %v691 = vld [vmem:[%s294 + $0xba0] sm:$0xff]
      %v692 = vld [vmem:[%s294 + $0xba8] sm:$0xff]
      %v693 = vld [vmem:[%s294 + $0xbb0] sm:$0xff]
      %v694 = vld [vmem:[%s294 + $0xbb8] sm:$0xff]
      %v695 = vld [vmem:[%s294 + $0xbc0] sm:$0xff]
      %v696 = vld [vmem:[%s294 + $0xbc8] sm:$0xff]
      %v697 = vld [vmem:[%s294 + $0xbd0] sm:$0xff]
      %v698 = vld [vmem:[%s294 + $0xbd8] sm:$0xff]
      %v699 = vld [vmem:[%s294 + $0xbe0] sm:$0xff]
      %v700 = vld [vmem:[%s294 + $0xbe8] sm:$0xff]
      %v701 = vld [vmem:[%s294 + $0xbf0] sm:$0xff]
      %v702 = vld [vmem:[%s294 + $0xbf8] sm:$0xff]
      %v703 = vld [vmem:[%s294 + $0xc00] sm:$0xff]
      %v704 = vld [vmem:[%s294 + $0xc08] sm:$0xff]
      %v705 = vld [vmem:[%s294 + $0xc10] sm:$0xff]
      %v706 = vld [vmem:[%s294 + $0xc18] sm:$0xff]
      %v707 = vld [vmem:[%s294 + $0xc20] sm:$0xff]
      %v708 = vld [vmem:[%s294 + $0xc28] sm:$0xff]
      %v709 = vld [vmem:[%s294 + $0xc30] sm:$0xff]
      %v710 = vld [vmem:[%s294 + $0xc38] sm:$0xff]
      %v711 = vld [vmem:[%s294 + $0xc40] sm:$0xff]
      %v712 = vld [vmem:[%s294 + $0xc48] sm:$0xff]
      %v713 = vld [vmem:[%s294 + $0xc50] sm:$0xff]
      %v714 = vld [vmem:[%s294 + $0xc58] sm:$0xff]
      %v715 = vld [vmem:[%s294 + $0xc60] sm:$0xff]
      %v716 = vld [vmem:[%s294 + $0xc68] sm:$0xff]
      %v717 = vld [vmem:[%s294 + $0xc70] sm:$0xff]
      %v718 = vld [vmem:[%s294 + $0xc78] sm:$0xff]
      %v719 = vld [vmem:[%s294 + $0xc80] sm:$0xff]
      %v720 = vld [vmem:[%s294 + $0xc88] sm:$0xff]
      %v721 = vld [vmem:[%s294 + $0xc90] sm:$0xff]
      %v722 = vld [vmem:[%s294 + $0xc98] sm:$0xff]
      %v723 = vld [vmem:[%s294 + $0xca0] sm:$0xff]
      %v724 = vld [vmem:[%s294 + $0xca8] sm:$0xff]
      %v725 = vld [vmem:[%s294 + $0xcb0] sm:$0xff]
      %v726 = vld [vmem:[%s294 + $0xcb8] sm:$0xff]
      %v727 = vld [vmem:[%s294 + $0xcc0] sm:$0xff]
      %v728 = vld [vmem:[%s294 + $0xcc8] sm:$0xff]
      %v729 = vld [vmem:[%s294 + $0xcd0] sm:$0xff]
      %v730 = vld [vmem:[%s294 + $0xcd8] sm:$0xff]
      %v731 = vld [vmem:[%s294 + $0xce0] sm:$0xff]
      %v732 = vld [vmem:[%s294 + $0xce8] sm:$0xff]
      %v733 = vld [vmem:[%s294 + $0xcf0] sm:$0xff]
      %v734 = vld [vmem:[%s294 + $0xcf8] sm:$0xff]
      %v735 = vld [vmem:[%s294 + $0xd00] sm:$0xff]
      %v736 = vld [vmem:[%s294 + $0xd08] sm:$0xff]
      %v737 = vld [vmem:[%s294 + $0xd10] sm:$0xff]
      %v738 = vld [vmem:[%s294 + $0xd18] sm:$0xff]
      %v739 = vld [vmem:[%s294 + $0xd20] sm:$0xff]
      %v740 = vld [vmem:[%s294 + $0xd28] sm:$0xff]
      %v741 = vld [vmem:[%s294 + $0xd30] sm:$0xff]
      %v742 = vld [vmem:[%s294 + $0xd38] sm:$0xff]
      %v743 = vld [vmem:[%s294 + $0xd40] sm:$0xff]
      %v744 = vld [vmem:[%s294 + $0xd48] sm:$0xff]
      %v745 = vld [vmem:[%s294 + $0xd50] sm:$0xff]
      %v746 = vld [vmem:[%s294 + $0xd58] sm:$0xff]
      %v747 = vld [vmem:[%s294 + $0xd60] sm:$0xff]
      %v748 = vld [vmem:[%s294 + $0xd68] sm:$0xff]
      %v749 = vld [vmem:[%s294 + $0xd70] sm:$0xff]
      %v750 = vld [vmem:[%s294 + $0xd78] sm:$0xff]
      %v751 = vld [vmem:[%s294 + $0xd80] sm:$0xff]
      %v752 = vld [vmem:[%s294 + $0xd88] sm:$0xff]
      %v753 = vld [vmem:[%s294 + $0xd90] sm:$0xff]
      %v754 = vld [vmem:[%s294 + $0xd98] sm:$0xff]
      %v755 = vld [vmem:[%s294 + $0xda0] sm:$0xff]
      %v756 = vld [vmem:[%s294 + $0xda8] sm:$0xff]
      %v757 = vld [vmem:[%s294 + $0xdb0] sm:$0xff]
      %v758 = vld [vmem:[%s294 + $0xdb8] sm:$0xff]
      %v759 = vld [vmem:[%s294 + $0xdc0] sm:$0xff]
      %v760 = vld [vmem:[%s294 + $0xdc8] sm:$0xff]
      %v761 = vld [vmem:[%s294 + $0xdd0] sm:$0xff]
      %v762 = vld [vmem:[%s294 + $0xdd8] sm:$0xff]
      %v763 = vld [vmem:[%s294 + $0xde0] sm:$0xff]
      %v764 = vld [vmem:[%s294 + $0xde8] sm:$0xff]
      %v765 = vld [vmem:[%s294 + $0xdf0] sm:$0xff]
      %v766 = vld [vmem:[%s294 + $0xdf8] sm:$0xff]
      %v767 = vld [vmem:[%s294 + $0xe00] sm:$0xff]
      %v768 = vld [vmem:[%s294 + $0xe08] sm:$0xff]
      %v769 = vld [vmem:[%s294 + $0xe10] sm:$0xff]
      %v770 = vld [vmem:[%s294 + $0xe18] sm:$0xff]
      %v771 = vld [vmem:[%s294 + $0xe20] sm:$0xff]
      %v772 = vld [vmem:[%s294 + $0xe28] sm:$0xff]
      %v773 = vld [vmem:[%s294 + $0xe30] sm:$0xff]
      %v774 = vld [vmem:[%s294 + $0xe38] sm:$0xff]
      %v775 = vld [vmem:[%s294 + $0xe40] sm:$0xff]
      %v776 = vld [vmem:[%s294 + $0xe48] sm:$0xff]
      %v777 = vld [vmem:[%s294 + $0xe50] sm:$0xff]
      %v778 = vld [vmem:[%s294 + $0xe58] sm:$0xff]
      %v779 = vld [vmem:[%s294 + $0xe60] sm:$0xff]
      %v780 = vld [vmem:[%s294 + $0xe68] sm:$0xff]
      %v781 = vld [vmem:[%s294 + $0xe70] sm:$0xff]
      %v782 = vld [vmem:[%s294 + $0xe78] sm:$0xff]
      %v783 = vld [vmem:[%s294 + $0xe80] sm:$0xff]
      %v784 = vld [vmem:[%s294 + $0xe88] sm:$0xff]
      %v785 = vld [vmem:[%s294 + $0xe90] sm:$0xff]
      %v786 = vld [vmem:[%s294 + $0xe98] sm:$0xff]
      %v787 = vld [vmem:[%s294 + $0xea0] sm:$0xff]
      %v788 = vld [vmem:[%s294 + $0xea8] sm:$0xff]
      %v789 = vld [vmem:[%s294 + $0xeb0] sm:$0xff]
      %v790 = vld [vmem:[%s294 + $0xeb8] sm:$0xff]
      %v791 = vld [vmem:[%s294 + $0xec0] sm:$0xff]
      %v792 = vld [vmem:[%s294 + $0xec8] sm:$0xff]
      %v793 = vld [vmem:[%s294 + $0xed0] sm:$0xff]
      %v794 = vld [vmem:[%s294 + $0xed8] sm:$0xff]
      %v795 = vld [vmem:[%s294 + $0xee0] sm:$0xff]
      %v796 = vld [vmem:[%s294 + $0xee8] sm:$0xff]
      %v797 = vld [vmem:[%s294 + $0xef0] sm:$0xff]
      %v798 = vld [vmem:[%s294 + $0xef8] sm:$0xff]
      %v799 = vld [vmem:[%s294 + $0xf00] sm:$0xff]
      %v800 = vld [vmem:[%s294 + $0xf08] sm:$0xff]
      %v801 = vld [vmem:[%s294 + $0xf10] sm:$0xff]
      %v802 = vld [vmem:[%s294 + $0xf18] sm:$0xff]
      %v803 = vld [vmem:[%s294 + $0xf20] sm:$0xff]
      %v804 = vld [vmem:[%s294 + $0xf28] sm:$0xff]
      %v805 = vld [vmem:[%s294 + $0xf30] sm:$0xff]
      %v806 = vld [vmem:[%s294 + $0xf38] sm:$0xff]
      %v807 = vld [vmem:[%s294 + $0xf40] sm:$0xff]
      %v808 = vld [vmem:[%s294 + $0xf48] sm:$0xff]
      %v809 = vld [vmem:[%s294 + $0xf50] sm:$0xff]
      %v810 = vld [vmem:[%s294 + $0xf58] sm:$0xff]
      %v811 = vld [vmem:[%s294 + $0xf60] sm:$0xff]
      %v812 = vld [vmem:[%s294 + $0xf68] sm:$0xff]
      %v813 = vld [vmem:[%s294 + $0xf70] sm:$0xff]
      %v814 = vld [vmem:[%s294 + $0xf78] sm:$0xff]
      %v815 = vld [vmem:[%s294 + $0xf80] sm:$0xff]
      %v816 = vld [vmem:[%s294 + $0xf88] sm:$0xff]
      %v817 = vld [vmem:[%s294 + $0xf90] sm:$0xff]
      %v818 = vld [vmem:[%s294 + $0xf98] sm:$0xff]
      %v819 = vld [vmem:[%s294 + $0xfa0] sm:$0xff]
      %v820 = vld [vmem:[%s294 + $0xfa8] sm:$0xff]
      %v821 = vld [vmem:[%s294 + $0xfb0] sm:$0xff]
      %v822 = vld [vmem:[%s294 + $0xfb8] sm:$0xff]
      %v823 = vld [vmem:[%s294 + $0xfc0] sm:$0xff]
      %v824 = vld [vmem:[%s294 + $0xfc8] sm:$0xff]
      %v825 = vld [vmem:[%s294 + $0xfd0] sm:$0xff]
      %v826 = vld [vmem:[%s294 + $0xfd8] sm:$0xff]
      %v827 = vld [vmem:[%s294 + $0xfe0] sm:$0xff]
      %v828 = vld [vmem:[%s294 + $0xfe8] sm:$0xff]
      %v829 = vld [vmem:[%s294 + $0xff0] sm:$0xff]
      %v830 = vld [vmem:[%s294 + $0xff8] sm:$0xff]
      %v831 = vld [vmem:[%s298] sm:$0xff]
      %v833 = vlaneseq
      %v834 = vshrl.u32 %v833, 7
      %v835 = vsub.s32 0, %v834
      %v836 = vrot.slane %v831, %v835
      %v837 = vlaneseq
      %v838 = vshrl.u32 %v837, 7
      %v839 = vsub.s32 1, %v838
      %v840 = vrot.slane %v831, %v839
      %v841 = vlaneseq
      %v842 = vshrl.u32 %v841, 7
      %v843 = vsub.s32 2, %v842
      %v844 = vrot.slane %v831, %v843
      %v845 = vlaneseq
      %v846 = vshrl.u32 %v845, 7
      %v847 = vsub.s32 3, %v846
      %v848 = vrot.slane %v831, %v847
      %v849 = vlaneseq
      %v850 = vshrl.u32 %v849, 7
      %v851 = vsub.s32 4, %v850
      %v852 = vrot.slane %v831, %v851
      %v853 = vlaneseq
      %v854 = vshrl.u32 %v853, 7
      %v855 = vsub.s32 5, %v854
      %v856 = vrot.slane %v831, %v855
      %v857 = vlaneseq
      %v858 = vshrl.u32 %v857, 7
      %v859 = vsub.s32 6, %v858
      %v860 = vrot.slane %v831, %v859
      %v861 = vlaneseq
      %v862 = vshrl.u32 %v861, 7
      %v863 = vsub.s32 7, %v862
      %v864 = vrot.slane %v831, %v863
      %v877 = vunpack.c.l.b16 %v315
      %v878 = vunpack.c.h.b16 %v315
      %v879 = vunpack.c.l.b16 %v316
      %v880 = vunpack.c.h.b16 %v316
      %v881 = vunpack.c.l.b16 %v317
      %v882 = vunpack.c.h.b16 %v317
      %v883 = vunpack.c.l.b16 %v318
      %v884 = vunpack.c.h.b16 %v318
      %v885 = vpack.c.b16 %v877, %v877
      %v886 = vpack.c.b16 %v878, %v878
      %v887 = vpack.c.b16 %v879, %v879
      %v888 = vpack.c.b16 %v880, %v880
      %v889 = vpack.c.b16 %v881, %v881
      %v890 = vpack.c.b16 %v882, %v882
      %v891 = vpack.c.b16 %v883, %v883
      %v892 = vpack.c.b16 %v884, %v884
      %v1413 = vunpack.c.l.b16 %v319
      %v1414 = vunpack.c.h.b16 %v319
      %v1415 = vunpack.c.l.b16 %v320
      %v1416 = vunpack.c.h.b16 %v320
      %v1417 = vunpack.c.l.b16 %v321
      %v1418 = vunpack.c.h.b16 %v321
      %v1419 = vunpack.c.l.b16 %v322
      %v1420 = vunpack.c.h.b16 %v322
      %v1421 = vunpack.c.l.b16 %v323
      %v1422 = vunpack.c.h.b16 %v323
      %v1423 = vunpack.c.l.b16 %v324
      %v1424 = vunpack.c.h.b16 %v324
      %v1425 = vunpack.c.l.b16 %v325
      %v1426 = vunpack.c.h.b16 %v325
      %v1427 = vunpack.c.l.b16 %v326
      %v1428 = vunpack.c.h.b16 %v326
      %v1429 = vunpack.c.l.b16 %v327
      %v1430 = vunpack.c.h.b16 %v327
      %v1431 = vunpack.c.l.b16 %v328
      %v1432 = vunpack.c.h.b16 %v328
      %v1433 = vunpack.c.l.b16 %v329
      %v1434 = vunpack.c.h.b16 %v329
      %v1435 = vunpack.c.l.b16 %v330
      %v1436 = vunpack.c.h.b16 %v330
      %v1437 = vunpack.c.l.b16 %v331
      %v1438 = vunpack.c.h.b16 %v331
      %v1439 = vunpack.c.l.b16 %v332
      %v1440 = vunpack.c.h.b16 %v332
      %v1441 = vunpack.c.l.b16 %v333
      %v1442 = vunpack.c.h.b16 %v333
      %v1443 = vunpack.c.l.b16 %v334
      %v1444 = vunpack.c.h.b16 %v334
      %v1445 = vunpack.c.l.b16 %v335
      %v1446 = vunpack.c.h.b16 %v335
      %v1447 = vunpack.c.l.b16 %v336
      %v1448 = vunpack.c.h.b16 %v336
      %v1449 = vunpack.c.l.b16 %v337
      %v1450 = vunpack.c.h.b16 %v337
      %v1451 = vunpack.c.l.b16 %v338
      %v1452 = vunpack.c.h.b16 %v338
      %v1453 = vunpack.c.l.b16 %v339
      %v1454 = vunpack.c.h.b16 %v339
      %v1455 = vunpack.c.l.b16 %v340
      %v1456 = vunpack.c.h.b16 %v340
      %v1457 = vunpack.c.l.b16 %v341
      %v1458 = vunpack.c.h.b16 %v341
      %v1459 = vunpack.c.l.b16 %v342
      %v1460 = vunpack.c.h.b16 %v342
      %v1461 = vunpack.c.l.b16 %v343
      %v1462 = vunpack.c.h.b16 %v343
      %v1463 = vunpack.c.l.b16 %v344
      %v1464 = vunpack.c.h.b16 %v344
      %v1465 = vunpack.c.l.b16 %v345
      %v1466 = vunpack.c.h.b16 %v345
      %v1467 = vunpack.c.l.b16 %v346
      %v1468 = vunpack.c.h.b16 %v346
      %v1469 = vunpack.c.l.b16 %v347
      %v1470 = vunpack.c.h.b16 %v347
      %v1471 = vunpack.c.l.b16 %v348
      %v1472 = vunpack.c.h.b16 %v348
      %v1473 = vunpack.c.l.b16 %v349
      %v1474 = vunpack.c.h.b16 %v349
      %v1475 = vunpack.c.l.b16 %v350
      %v1476 = vunpack.c.h.b16 %v350
      %v1477 = vunpack.c.l.b16 %v351
      %v1478 = vunpack.c.h.b16 %v351
      %v1479 = vunpack.c.l.b16 %v352
      %v1480 = vunpack.c.h.b16 %v352
      %v1481 = vunpack.c.l.b16 %v353
      %v1482 = vunpack.c.h.b16 %v353
      %v1483 = vunpack.c.l.b16 %v354
      %v1484 = vunpack.c.h.b16 %v354
      %v1485 = vunpack.c.l.b16 %v355
      %v1486 = vunpack.c.h.b16 %v355
      %v1487 = vunpack.c.l.b16 %v356
      %v1488 = vunpack.c.h.b16 %v356
      %v1489 = vunpack.c.l.b16 %v357
      %v1490 = vunpack.c.h.b16 %v357
      %v1491 = vunpack.c.l.b16 %v358
      %v1492 = vunpack.c.h.b16 %v358
      %v1493 = vunpack.c.l.b16 %v359
      %v1494 = vunpack.c.h.b16 %v359
      %v1495 = vunpack.c.l.b16 %v360
      %v1496 = vunpack.c.h.b16 %v360
      %v1497 = vunpack.c.l.b16 %v361
      %v1498 = vunpack.c.h.b16 %v361
      %v1499 = vunpack.c.l.b16 %v362
      %v1500 = vunpack.c.h.b16 %v362
      %v1501 = vunpack.c.l.b16 %v363
      %v1502 = vunpack.c.h.b16 %v363
      %v1503 = vunpack.c.l.b16 %v364
      %v1504 = vunpack.c.h.b16 %v364
      %v1505 = vunpack.c.l.b16 %v365
      %v1506 = vunpack.c.h.b16 %v365
      %v1507 = vunpack.c.l.b16 %v366
      %v1508 = vunpack.c.h.b16 %v366
      %v1509 = vunpack.c.l.b16 %v367
      %v1510 = vunpack.c.h.b16 %v367
      %v1511 = vunpack.c.l.b16 %v368
      %v1512 = vunpack.c.h.b16 %v368
      %v1513 = vunpack.c.l.b16 %v369
      %v1514 = vunpack.c.h.b16 %v369
      %v1515 = vunpack.c.l.b16 %v370
      %v1516 = vunpack.c.h.b16 %v370
      %v1517 = vunpack.c.l.b16 %v371
      %v1518 = vunpack.c.h.b16 %v371
      %v1519 = vunpack.c.l.b16 %v372
      %v1520 = vunpack.c.h.b16 %v372
      %v1521 = vunpack.c.l.b16 %v373
      %v1522 = vunpack.c.h.b16 %v373
      %v1523 = vunpack.c.l.b16 %v374
      %v1524 = vunpack.c.h.b16 %v374
      %v1525 = vunpack.c.l.b16 %v375
      %v1526 = vunpack.c.h.b16 %v375
      %v1527 = vunpack.c.l.b16 %v376
      %v1528 = vunpack.c.h.b16 %v376
      %v1529 = vunpack.c.l.b16 %v377
      %v1530 = vunpack.c.h.b16 %v377
      %v1531 = vunpack.c.l.b16 %v378
      %v1532 = vunpack.c.h.b16 %v378
      %v1533 = vunpack.c.l.b16 %v379
      %v1534 = vunpack.c.h.b16 %v379
      %v1535 = vunpack.c.l.b16 %v380
      %v1536 = vunpack.c.h.b16 %v380
      %v1537 = vunpack.c.l.b16 %v381
      %v1538 = vunpack.c.h.b16 %v381
      %v1539 = vunpack.c.l.b16 %v382
      %v1540 = vunpack.c.h.b16 %v382
      %v1541 = vunpack.c.l.b16 %v383
      %v1542 = vunpack.c.h.b16 %v383
      %v1543 = vunpack.c.l.b16 %v384
      %v1544 = vunpack.c.h.b16 %v384
      %v1545 = vunpack.c.l.b16 %v385
      %v1546 = vunpack.c.h.b16 %v385
      %v1547 = vunpack.c.l.b16 %v386
      %v1548 = vunpack.c.h.b16 %v386
      %v1549 = vunpack.c.l.b16 %v387
      %v1550 = vunpack.c.h.b16 %v387
      %v1551 = vunpack.c.l.b16 %v388
      %v1552 = vunpack.c.h.b16 %v388
      %v1553 = vunpack.c.l.b16 %v389
      %v1554 = vunpack.c.h.b16 %v389
      %v1555 = vunpack.c.l.b16 %v390
      %v1556 = vunpack.c.h.b16 %v390
      %v1557 = vunpack.c.l.b16 %v391
      %v1558 = vunpack.c.h.b16 %v391
      %v1559 = vunpack.c.l.b16 %v392
      %v1560 = vunpack.c.h.b16 %v392
      %v1561 = vunpack.c.l.b16 %v393
      %v1562 = vunpack.c.h.b16 %v393
      %v1563 = vunpack.c.l.b16 %v394
      %v1564 = vunpack.c.h.b16 %v394
      %v1565 = vunpack.c.l.b16 %v395
      %v1566 = vunpack.c.h.b16 %v395
      %v1567 = vunpack.c.l.b16 %v396
      %v1568 = vunpack.c.h.b16 %v396
      %v1569 = vunpack.c.l.b16 %v397
      %v1570 = vunpack.c.h.b16 %v397
      %v1571 = vunpack.c.l.b16 %v398
      %v1572 = vunpack.c.h.b16 %v398
      %v1573 = vunpack.c.l.b16 %v399
      %v1574 = vunpack.c.h.b16 %v399
      %v1575 = vunpack.c.l.b16 %v400
      %v1576 = vunpack.c.h.b16 %v400
      %v1577 = vunpack.c.l.b16 %v401
      %v1578 = vunpack.c.h.b16 %v401
      %v1579 = vunpack.c.l.b16 %v402
      %v1580 = vunpack.c.h.b16 %v402
      %v1581 = vunpack.c.l.b16 %v403
      %v1582 = vunpack.c.h.b16 %v403
      %v1583 = vunpack.c.l.b16 %v404
      %v1584 = vunpack.c.h.b16 %v404
      %v1585 = vunpack.c.l.b16 %v405
      %v1586 = vunpack.c.h.b16 %v405
      %v1587 = vunpack.c.l.b16 %v406
      %v1588 = vunpack.c.h.b16 %v406
      %v1589 = vunpack.c.l.b16 %v407
      %v1590 = vunpack.c.h.b16 %v407
      %v1591 = vunpack.c.l.b16 %v408
      %v1592 = vunpack.c.h.b16 %v408
      %v1593 = vunpack.c.l.b16 %v409
      %v1594 = vunpack.c.h.b16 %v409
      %v1595 = vunpack.c.l.b16 %v410
      %v1596 = vunpack.c.h.b16 %v410
      %v1597 = vunpack.c.l.b16 %v411
      %v1598 = vunpack.c.h.b16 %v411
      %v1599 = vunpack.c.l.b16 %v412
      %v1600 = vunpack.c.h.b16 %v412
      %v1601 = vunpack.c.l.b16 %v413
      %v1602 = vunpack.c.h.b16 %v413
      %v1603 = vunpack.c.l.b16 %v414
      %v1604 = vunpack.c.h.b16 %v414
      %v1605 = vunpack.c.l.b16 %v415
      %v1606 = vunpack.c.h.b16 %v415
      %v1607 = vunpack.c.l.b16 %v416
      %v1608 = vunpack.c.h.b16 %v416
      %v1609 = vunpack.c.l.b16 %v417
      %v1610 = vunpack.c.h.b16 %v417
      %v1611 = vunpack.c.l.b16 %v418
      %v1612 = vunpack.c.h.b16 %v418
      %v1613 = vunpack.c.l.b16 %v419
      %v1614 = vunpack.c.h.b16 %v419
      %v1615 = vunpack.c.l.b16 %v420
      %v1616 = vunpack.c.h.b16 %v420
      %v1617 = vunpack.c.l.b16 %v421
      %v1618 = vunpack.c.h.b16 %v421
      %v1619 = vunpack.c.l.b16 %v422
      %v1620 = vunpack.c.h.b16 %v422
      %v1621 = vunpack.c.l.b16 %v423
      %v1622 = vunpack.c.h.b16 %v423
      %v1623 = vunpack.c.l.b16 %v424
      %v1624 = vunpack.c.h.b16 %v424
      %v1625 = vunpack.c.l.b16 %v425
      %v1626 = vunpack.c.h.b16 %v425
      %v1627 = vunpack.c.l.b16 %v426
      %v1628 = vunpack.c.h.b16 %v426
      %v1629 = vunpack.c.l.b16 %v427
      %v1630 = vunpack.c.h.b16 %v427
      %v1631 = vunpack.c.l.b16 %v428
      %v1632 = vunpack.c.h.b16 %v428
      %v1633 = vunpack.c.l.b16 %v429
      %v1634 = vunpack.c.h.b16 %v429
      %v1635 = vunpack.c.l.b16 %v430
      %v1636 = vunpack.c.h.b16 %v430
      %v1637 = vunpack.c.l.b16 %v431
      %v1638 = vunpack.c.h.b16 %v431
      %v1639 = vunpack.c.l.b16 %v432
      %v1640 = vunpack.c.h.b16 %v432
      %v1641 = vunpack.c.l.b16 %v433
      %v1642 = vunpack.c.h.b16 %v433
      %v1643 = vunpack.c.l.b16 %v434
      %v1644 = vunpack.c.h.b16 %v434
      %v1645 = vunpack.c.l.b16 %v435
      %v1646 = vunpack.c.h.b16 %v435
      %v1647 = vunpack.c.l.b16 %v436
      %v1648 = vunpack.c.h.b16 %v436
      %v1649 = vunpack.c.l.b16 %v437
      %v1650 = vunpack.c.h.b16 %v437
      %v1651 = vunpack.c.l.b16 %v438
      %v1652 = vunpack.c.h.b16 %v438
      %v1653 = vunpack.c.l.b16 %v439
      %v1654 = vunpack.c.h.b16 %v439
      %v1655 = vunpack.c.l.b16 %v440
      %v1656 = vunpack.c.h.b16 %v440
      %v1657 = vunpack.c.l.b16 %v441
      %v1658 = vunpack.c.h.b16 %v441
      %v1659 = vunpack.c.l.b16 %v442
      %v1660 = vunpack.c.h.b16 %v442
      %v1661 = vunpack.c.l.b16 %v443
      %v1662 = vunpack.c.h.b16 %v443
      %v1663 = vunpack.c.l.b16 %v444
      %v1664 = vunpack.c.h.b16 %v444
      %v1665 = vunpack.c.l.b16 %v445
      %v1666 = vunpack.c.h.b16 %v445
      %v1667 = vunpack.c.l.b16 %v446
      %v1668 = vunpack.c.h.b16 %v446
      %v1669 = vunpack.c.l.b16 %v447
      %v1670 = vunpack.c.h.b16 %v447
      %v1671 = vunpack.c.l.b16 %v448
      %v1672 = vunpack.c.h.b16 %v448
      %v1673 = vunpack.c.l.b16 %v449
      %v1674 = vunpack.c.h.b16 %v449
      %v1675 = vunpack.c.l.b16 %v450
      %v1676 = vunpack.c.h.b16 %v450
      %v1677 = vunpack.c.l.b16 %v451
      %v1678 = vunpack.c.h.b16 %v451
      %v1679 = vunpack.c.l.b16 %v452
      %v1680 = vunpack.c.h.b16 %v452
      %v1681 = vunpack.c.l.b16 %v453
      %v1682 = vunpack.c.h.b16 %v453
      %v1683 = vunpack.c.l.b16 %v454
      %v1684 = vunpack.c.h.b16 %v454
      %v1685 = vunpack.c.l.b16 %v455
      %v1686 = vunpack.c.h.b16 %v455
      %v1687 = vunpack.c.l.b16 %v456
      %v1688 = vunpack.c.h.b16 %v456
      %v1689 = vunpack.c.l.b16 %v457
      %v1690 = vunpack.c.h.b16 %v457
      %v1691 = vunpack.c.l.b16 %v458
      %v1692 = vunpack.c.h.b16 %v458
      %v1693 = vunpack.c.l.b16 %v459
      %v1694 = vunpack.c.h.b16 %v459
      %v1695 = vunpack.c.l.b16 %v460
      %v1696 = vunpack.c.h.b16 %v460
      %v1697 = vunpack.c.l.b16 %v461
      %v1698 = vunpack.c.h.b16 %v461
      %v1699 = vunpack.c.l.b16 %v462
      %v1700 = vunpack.c.h.b16 %v462
      %v1701 = vunpack.c.l.b16 %v463
      %v1702 = vunpack.c.h.b16 %v463
      %v1703 = vunpack.c.l.b16 %v464
      %v1704 = vunpack.c.h.b16 %v464
      %v1705 = vunpack.c.l.b16 %v465
      %v1706 = vunpack.c.h.b16 %v465
      %v1707 = vunpack.c.l.b16 %v466
      %v1708 = vunpack.c.h.b16 %v466
      %v1709 = vunpack.c.l.b16 %v467
      %v1710 = vunpack.c.h.b16 %v467
      %v1711 = vunpack.c.l.b16 %v468
      %v1712 = vunpack.c.h.b16 %v468
      %v1713 = vunpack.c.l.b16 %v469
      %v1714 = vunpack.c.h.b16 %v469
      %v1715 = vunpack.c.l.b16 %v470
      %v1716 = vunpack.c.h.b16 %v470
      %v1717 = vunpack.c.l.b16 %v471
      %v1718 = vunpack.c.h.b16 %v471
      %v1719 = vunpack.c.l.b16 %v472
      %v1720 = vunpack.c.h.b16 %v472
      %v1721 = vunpack.c.l.b16 %v473
      %v1722 = vunpack.c.h.b16 %v473
      %v1723 = vunpack.c.l.b16 %v474
      %v1724 = vunpack.c.h.b16 %v474
      %v1725 = vunpack.c.l.b16 %v475
      %v1726 = vunpack.c.h.b16 %v475
      %v1727 = vunpack.c.l.b16 %v476
      %v1728 = vunpack.c.h.b16 %v476
      %v1729 = vunpack.c.l.b16 %v477
      %v1730 = vunpack.c.h.b16 %v477
      %v1731 = vunpack.c.l.b16 %v478
      %v1732 = vunpack.c.h.b16 %v478
      %v1733 = vunpack.c.l.b16 %v479
      %v1734 = vunpack.c.h.b16 %v479
      %v1735 = vunpack.c.l.b16 %v480
      %v1736 = vunpack.c.h.b16 %v480
      %v1737 = vunpack.c.l.b16 %v481
      %v1738 = vunpack.c.h.b16 %v481
      %v1739 = vunpack.c.l.b16 %v482
      %v1740 = vunpack.c.h.b16 %v482
      %v1741 = vunpack.c.l.b16 %v483
      %v1742 = vunpack.c.h.b16 %v483
      %v1743 = vunpack.c.l.b16 %v484
      %v1744 = vunpack.c.h.b16 %v484
      %v1745 = vunpack.c.l.b16 %v485
      %v1746 = vunpack.c.h.b16 %v485
      %v1747 = vunpack.c.l.b16 %v486
      %v1748 = vunpack.c.h.b16 %v486
      %v1749 = vunpack.c.l.b16 %v487
      %v1750 = vunpack.c.h.b16 %v487
      %v1751 = vunpack.c.l.b16 %v488
      %v1752 = vunpack.c.h.b16 %v488
      %v1753 = vunpack.c.l.b16 %v489
      %v1754 = vunpack.c.h.b16 %v489
      %v1755 = vunpack.c.l.b16 %v490
      %v1756 = vunpack.c.h.b16 %v490
      %v1757 = vunpack.c.l.b16 %v491
      %v1758 = vunpack.c.h.b16 %v491
      %v1759 = vunpack.c.l.b16 %v492
      %v1760 = vunpack.c.h.b16 %v492
      %v1761 = vunpack.c.l.b16 %v493
      %v1762 = vunpack.c.h.b16 %v493
      %v1763 = vunpack.c.l.b16 %v494
      %v1764 = vunpack.c.h.b16 %v494
      %v1765 = vunpack.c.l.b16 %v495
      %v1766 = vunpack.c.h.b16 %v495
      %v1767 = vunpack.c.l.b16 %v496
      %v1768 = vunpack.c.h.b16 %v496
      %v1769 = vunpack.c.l.b16 %v497
      %v1770 = vunpack.c.h.b16 %v497
      %v1771 = vunpack.c.l.b16 %v498
      %v1772 = vunpack.c.h.b16 %v498
      %v1773 = vunpack.c.l.b16 %v499
      %v1774 = vunpack.c.h.b16 %v499
      %v1775 = vunpack.c.l.b16 %v500
      %v1776 = vunpack.c.h.b16 %v500
      %v1777 = vunpack.c.l.b16 %v501
      %v1778 = vunpack.c.h.b16 %v501
      %v1779 = vunpack.c.l.b16 %v502
      %v1780 = vunpack.c.h.b16 %v502
      %v1781 = vunpack.c.l.b16 %v503
      %v1782 = vunpack.c.h.b16 %v503
      %v1783 = vunpack.c.l.b16 %v504
      %v1784 = vunpack.c.h.b16 %v504
      %v1785 = vunpack.c.l.b16 %v505
      %v1786 = vunpack.c.h.b16 %v505
      %v1787 = vunpack.c.l.b16 %v506
      %v1788 = vunpack.c.h.b16 %v506
      %v1789 = vunpack.c.l.b16 %v507
      %v1790 = vunpack.c.h.b16 %v507
      %v1791 = vunpack.c.l.b16 %v508
      %v1792 = vunpack.c.h.b16 %v508
      %v1793 = vunpack.c.l.b16 %v509
      %v1794 = vunpack.c.h.b16 %v509
      %v1795 = vunpack.c.l.b16 %v510
      %v1796 = vunpack.c.h.b16 %v510
      %v1797 = vunpack.c.l.b16 %v511
      %v1798 = vunpack.c.h.b16 %v511
      %v1799 = vunpack.c.l.b16 %v512
      %v1800 = vunpack.c.h.b16 %v512
      %v1801 = vunpack.c.l.b16 %v513
      %v1802 = vunpack.c.h.b16 %v513
      %v1803 = vunpack.c.l.b16 %v514
      %v1804 = vunpack.c.h.b16 %v514
      %v1805 = vunpack.c.l.b16 %v515
      %v1806 = vunpack.c.h.b16 %v515
      %v1807 = vunpack.c.l.b16 %v516
      %v1808 = vunpack.c.h.b16 %v516
      %v1809 = vunpack.c.l.b16 %v517
      %v1810 = vunpack.c.h.b16 %v517
      %v1811 = vunpack.c.l.b16 %v518
      %v1812 = vunpack.c.h.b16 %v518
      %v1813 = vunpack.c.l.b16 %v519
      %v1814 = vunpack.c.h.b16 %v519
      %v1815 = vunpack.c.l.b16 %v520
      %v1816 = vunpack.c.h.b16 %v520
      %v1817 = vunpack.c.l.b16 %v521
      %v1818 = vunpack.c.h.b16 %v521
      %v1819 = vunpack.c.l.b16 %v522
      %v1820 = vunpack.c.h.b16 %v522
      %v1821 = vunpack.c.l.b16 %v523
      %v1822 = vunpack.c.h.b16 %v523
      %v1823 = vunpack.c.l.b16 %v524
      %v1824 = vunpack.c.h.b16 %v524
      %v1825 = vunpack.c.l.b16 %v525
      %v1826 = vunpack.c.h.b16 %v525
      %v1827 = vunpack.c.l.b16 %v526
      %v1828 = vunpack.c.h.b16 %v526
      %v1829 = vunpack.c.l.b16 %v527
      %v1830 = vunpack.c.h.b16 %v527
      %v1831 = vunpack.c.l.b16 %v528
      %v1832 = vunpack.c.h.b16 %v528
      %v1833 = vunpack.c.l.b16 %v529
      %v1834 = vunpack.c.h.b16 %v529
      %v1835 = vunpack.c.l.b16 %v530
      %v1836 = vunpack.c.h.b16 %v530
      %v1837 = vunpack.c.l.b16 %v531
      %v1838 = vunpack.c.h.b16 %v531
      %v1839 = vunpack.c.l.b16 %v532
      %v1840 = vunpack.c.h.b16 %v532
      %v1841 = vunpack.c.l.b16 %v533
      %v1842 = vunpack.c.h.b16 %v533
      %v1843 = vunpack.c.l.b16 %v534
      %v1844 = vunpack.c.h.b16 %v534
      %v1845 = vunpack.c.l.b16 %v535
      %v1846 = vunpack.c.h.b16 %v535
      %v1847 = vunpack.c.l.b16 %v536
      %v1848 = vunpack.c.h.b16 %v536
      %v1849 = vunpack.c.l.b16 %v537
      %v1850 = vunpack.c.h.b16 %v537
      %v1851 = vunpack.c.l.b16 %v538
      %v1852 = vunpack.c.h.b16 %v538
      %v1853 = vunpack.c.l.b16 %v539
      %v1854 = vunpack.c.h.b16 %v539
      %v1855 = vunpack.c.l.b16 %v540
      %v1856 = vunpack.c.h.b16 %v540
      %v1857 = vunpack.c.l.b16 %v541
      %v1858 = vunpack.c.h.b16 %v541
      %v1859 = vunpack.c.l.b16 %v542
      %v1860 = vunpack.c.h.b16 %v542
      %v1861 = vunpack.c.l.b16 %v543
      %v1862 = vunpack.c.h.b16 %v543
      %v1863 = vunpack.c.l.b16 %v544
      %v1864 = vunpack.c.h.b16 %v544
      %v1865 = vunpack.c.l.b16 %v545
      %v1866 = vunpack.c.h.b16 %v545
      %v1867 = vunpack.c.l.b16 %v546
      %v1868 = vunpack.c.h.b16 %v546
      %v1869 = vunpack.c.l.b16 %v547
      %v1870 = vunpack.c.h.b16 %v547
      %v1871 = vunpack.c.l.b16 %v548
      %v1872 = vunpack.c.h.b16 %v548
      %v1873 = vunpack.c.l.b16 %v549
      %v1874 = vunpack.c.h.b16 %v549
      %v1875 = vunpack.c.l.b16 %v550
      %v1876 = vunpack.c.h.b16 %v550
      %v1877 = vunpack.c.l.b16 %v551
      %v1878 = vunpack.c.h.b16 %v551
      %v1879 = vunpack.c.l.b16 %v552
      %v1880 = vunpack.c.h.b16 %v552
      %v1881 = vunpack.c.l.b16 %v553
      %v1882 = vunpack.c.h.b16 %v553
      %v1883 = vunpack.c.l.b16 %v554
      %v1884 = vunpack.c.h.b16 %v554
      %v1885 = vunpack.c.l.b16 %v555
      %v1886 = vunpack.c.h.b16 %v555
      %v1887 = vunpack.c.l.b16 %v556
      %v1888 = vunpack.c.h.b16 %v556
      %v1889 = vunpack.c.l.b16 %v557
      %v1890 = vunpack.c.h.b16 %v557
      %v1891 = vunpack.c.l.b16 %v558
      %v1892 = vunpack.c.h.b16 %v558
      %v1893 = vunpack.c.l.b16 %v559
      %v1894 = vunpack.c.h.b16 %v559
      %v1895 = vunpack.c.l.b16 %v560
      %v1896 = vunpack.c.h.b16 %v560
      %v1897 = vunpack.c.l.b16 %v561
      %v1898 = vunpack.c.h.b16 %v561
      %v1899 = vunpack.c.l.b16 %v562
      %v1900 = vunpack.c.h.b16 %v562
      %v1901 = vunpack.c.l.b16 %v563
      %v1902 = vunpack.c.h.b16 %v563
      %v1903 = vunpack.c.l.b16 %v564
      %v1904 = vunpack.c.h.b16 %v564
      %v1905 = vunpack.c.l.b16 %v565
      %v1906 = vunpack.c.h.b16 %v565
      %v1907 = vunpack.c.l.b16 %v566
      %v1908 = vunpack.c.h.b16 %v566
      %v1909 = vunpack.c.l.b16 %v567
      %v1910 = vunpack.c.h.b16 %v567
      %v1911 = vunpack.c.l.b16 %v568
      %v1912 = vunpack.c.h.b16 %v568
      %v1913 = vunpack.c.l.b16 %v569
      %v1914 = vunpack.c.h.b16 %v569
      %v1915 = vunpack.c.l.b16 %v570
      %v1916 = vunpack.c.h.b16 %v570
      %v1917 = vunpack.c.l.b16 %v571
      %v1918 = vunpack.c.h.b16 %v571
      %v1919 = vunpack.c.l.b16 %v572
      %v1920 = vunpack.c.h.b16 %v572
      %v1921 = vunpack.c.l.b16 %v573
      %v1922 = vunpack.c.h.b16 %v573
      %v1923 = vunpack.c.l.b16 %v574
      %v1924 = vunpack.c.h.b16 %v574
      %v1925 = vunpack.c.l.b16 %v575
      %v1926 = vunpack.c.h.b16 %v575
      %v1927 = vunpack.c.l.b16 %v576
      %v1928 = vunpack.c.h.b16 %v576
      %v1929 = vunpack.c.l.b16 %v577
      %v1930 = vunpack.c.h.b16 %v577
      %v1931 = vunpack.c.l.b16 %v578
      %v1932 = vunpack.c.h.b16 %v578
      %v1933 = vunpack.c.l.b16 %v579
      %v1934 = vunpack.c.h.b16 %v579
      %v1935 = vunpack.c.l.b16 %v580
      %v1936 = vunpack.c.h.b16 %v580
      %v1937 = vunpack.c.l.b16 %v581
      %v1938 = vunpack.c.h.b16 %v581
      %v1939 = vunpack.c.l.b16 %v582
      %v1940 = vunpack.c.h.b16 %v582
      %v1941 = vunpack.c.l.b16 %v583
      %v1942 = vunpack.c.h.b16 %v583
      %v1943 = vunpack.c.l.b16 %v584
      %v1944 = vunpack.c.h.b16 %v584
      %v1945 = vunpack.c.l.b16 %v585
      %v1946 = vunpack.c.h.b16 %v585
      %v1947 = vunpack.c.l.b16 %v586
      %v1948 = vunpack.c.h.b16 %v586
      %v1949 = vunpack.c.l.b16 %v587
      %v1950 = vunpack.c.h.b16 %v587
      %v1951 = vunpack.c.l.b16 %v588
      %v1952 = vunpack.c.h.b16 %v588
      %v1953 = vunpack.c.l.b16 %v589
      %v1954 = vunpack.c.h.b16 %v589
      %v1955 = vunpack.c.l.b16 %v590
      %v1956 = vunpack.c.h.b16 %v590
      %v1957 = vunpack.c.l.b16 %v591
      %v1958 = vunpack.c.h.b16 %v591
      %v1959 = vunpack.c.l.b16 %v592
      %v1960 = vunpack.c.h.b16 %v592
      %v1961 = vunpack.c.l.b16 %v593
      %v1962 = vunpack.c.h.b16 %v593
      %v1963 = vunpack.c.l.b16 %v594
      %v1964 = vunpack.c.h.b16 %v594
      %v1965 = vunpack.c.l.b16 %v595
      %v1966 = vunpack.c.h.b16 %v595
      %v1967 = vunpack.c.l.b16 %v596
      %v1968 = vunpack.c.h.b16 %v596
      %v1969 = vunpack.c.l.b16 %v597
      %v1970 = vunpack.c.h.b16 %v597
      %v1971 = vunpack.c.l.b16 %v598
      %v1972 = vunpack.c.h.b16 %v598
      %v1973 = vunpack.c.l.b16 %v599
      %v1974 = vunpack.c.h.b16 %v599
      %v1975 = vunpack.c.l.b16 %v600
      %v1976 = vunpack.c.h.b16 %v600
      %v1977 = vunpack.c.l.b16 %v601
      %v1978 = vunpack.c.h.b16 %v601
      %v1979 = vunpack.c.l.b16 %v602
      %v1980 = vunpack.c.h.b16 %v602
      %v1981 = vunpack.c.l.b16 %v603
      %v1982 = vunpack.c.h.b16 %v603
      %v1983 = vunpack.c.l.b16 %v604
      %v1984 = vunpack.c.h.b16 %v604
      %v1985 = vunpack.c.l.b16 %v605
      %v1986 = vunpack.c.h.b16 %v605
      %v1987 = vunpack.c.l.b16 %v606
      %v1988 = vunpack.c.h.b16 %v606
      %v1989 = vunpack.c.l.b16 %v607
      %v1990 = vunpack.c.h.b16 %v607
      %v1991 = vunpack.c.l.b16 %v608
      %v1992 = vunpack.c.h.b16 %v608
      %v1993 = vunpack.c.l.b16 %v609
      %v1994 = vunpack.c.h.b16 %v609
      %v1995 = vunpack.c.l.b16 %v610
      %v1996 = vunpack.c.h.b16 %v610
      %v1997 = vunpack.c.l.b16 %v611
      %v1998 = vunpack.c.h.b16 %v611
      %v1999 = vunpack.c.l.b16 %v612
      %v2000 = vunpack.c.h.b16 %v612
      %v2001 = vunpack.c.l.b16 %v613
      %v2002 = vunpack.c.h.b16 %v613
      %v2003 = vunpack.c.l.b16 %v614
      %v2004 = vunpack.c.h.b16 %v614
      %v2005 = vunpack.c.l.b16 %v615
      %v2006 = vunpack.c.h.b16 %v615
      %v2007 = vunpack.c.l.b16 %v616
      %v2008 = vunpack.c.h.b16 %v616
      %v2009 = vunpack.c.l.b16 %v617
      %v2010 = vunpack.c.h.b16 %v617
      %v2011 = vunpack.c.l.b16 %v618
      %v2012 = vunpack.c.h.b16 %v618
      %v2013 = vunpack.c.l.b16 %v619
      %v2014 = vunpack.c.h.b16 %v619
      %v2015 = vunpack.c.l.b16 %v620
      %v2016 = vunpack.c.h.b16 %v620
      %v2017 = vunpack.c.l.b16 %v621
      %v2018 = vunpack.c.h.b16 %v621
      %v2019 = vunpack.c.l.b16 %v622
      %v2020 = vunpack.c.h.b16 %v622
      %v2021 = vunpack.c.l.b16 %v623
      %v2022 = vunpack.c.h.b16 %v623
      %v2023 = vunpack.c.l.b16 %v624
      %v2024 = vunpack.c.h.b16 %v624
      %v2025 = vunpack.c.l.b16 %v625
      %v2026 = vunpack.c.h.b16 %v625
      %v2027 = vunpack.c.l.b16 %v626
      %v2028 = vunpack.c.h.b16 %v626
      %v2029 = vunpack.c.l.b16 %v627
      %v2030 = vunpack.c.h.b16 %v627
      %v2031 = vunpack.c.l.b16 %v628
      %v2032 = vunpack.c.h.b16 %v628
      %v2033 = vunpack.c.l.b16 %v629
      %v2034 = vunpack.c.h.b16 %v629
      %v2035 = vunpack.c.l.b16 %v630
      %v2036 = vunpack.c.h.b16 %v630
      %v2037 = vunpack.c.l.b16 %v631
      %v2038 = vunpack.c.h.b16 %v631
      %v2039 = vunpack.c.l.b16 %v632
      %v2040 = vunpack.c.h.b16 %v632
      %v2041 = vunpack.c.l.b16 %v633
      %v2042 = vunpack.c.h.b16 %v633
      %v2043 = vunpack.c.l.b16 %v634
      %v2044 = vunpack.c.h.b16 %v634
      %v2045 = vunpack.c.l.b16 %v635
      %v2046 = vunpack.c.h.b16 %v635
      %v2047 = vunpack.c.l.b16 %v636
      %v2048 = vunpack.c.h.b16 %v636
      %v2049 = vunpack.c.l.b16 %v637
      %v2050 = vunpack.c.h.b16 %v637
      %v2051 = vunpack.c.l.b16 %v638
      %v2052 = vunpack.c.h.b16 %v638
      %v2053 = vunpack.c.l.b16 %v639
      %v2054 = vunpack.c.h.b16 %v639
      %v2055 = vunpack.c.l.b16 %v640
      %v2056 = vunpack.c.h.b16 %v640
      %v2057 = vunpack.c.l.b16 %v641
      %v2058 = vunpack.c.h.b16 %v641
      %v2059 = vunpack.c.l.b16 %v642
      %v2060 = vunpack.c.h.b16 %v642
      %v2061 = vunpack.c.l.b16 %v643
      %v2062 = vunpack.c.h.b16 %v643
      %v2063 = vunpack.c.l.b16 %v644
      %v2064 = vunpack.c.h.b16 %v644
      %v2065 = vunpack.c.l.b16 %v645
      %v2066 = vunpack.c.h.b16 %v645
      %v2067 = vunpack.c.l.b16 %v646
      %v2068 = vunpack.c.h.b16 %v646
      %v2069 = vunpack.c.l.b16 %v647
      %v2070 = vunpack.c.h.b16 %v647
      %v2071 = vunpack.c.l.b16 %v648
      %v2072 = vunpack.c.h.b16 %v648
      %v2073 = vunpack.c.l.b16 %v649
      %v2074 = vunpack.c.h.b16 %v649
      %v2075 = vunpack.c.l.b16 %v650
      %v2076 = vunpack.c.h.b16 %v650
      %v2077 = vunpack.c.l.b16 %v651
      %v2078 = vunpack.c.h.b16 %v651
      %v2079 = vunpack.c.l.b16 %v652
      %v2080 = vunpack.c.h.b16 %v652
      %v2081 = vunpack.c.l.b16 %v653
      %v2082 = vunpack.c.h.b16 %v653
      %v2083 = vunpack.c.l.b16 %v654
      %v2084 = vunpack.c.h.b16 %v654
      %v2085 = vunpack.c.l.b16 %v655
      %v2086 = vunpack.c.h.b16 %v655
      %v2087 = vunpack.c.l.b16 %v656
      %v2088 = vunpack.c.h.b16 %v656
      %v2089 = vunpack.c.l.b16 %v657
      %v2090 = vunpack.c.h.b16 %v657
      %v2091 = vunpack.c.l.b16 %v658
      %v2092 = vunpack.c.h.b16 %v658
      %v2093 = vunpack.c.l.b16 %v659
      %v2094 = vunpack.c.h.b16 %v659
      %v2095 = vunpack.c.l.b16 %v660
      %v2096 = vunpack.c.h.b16 %v660
      %v2097 = vunpack.c.l.b16 %v661
      %v2098 = vunpack.c.h.b16 %v661
      %v2099 = vunpack.c.l.b16 %v662
      %v2100 = vunpack.c.h.b16 %v662
      %v2101 = vunpack.c.l.b16 %v663
      %v2102 = vunpack.c.h.b16 %v663
      %v2103 = vunpack.c.l.b16 %v664
      %v2104 = vunpack.c.h.b16 %v664
      %v2105 = vunpack.c.l.b16 %v665
      %v2106 = vunpack.c.h.b16 %v665
      %v2107 = vunpack.c.l.b16 %v666
      %v2108 = vunpack.c.h.b16 %v666
      %v2109 = vunpack.c.l.b16 %v667
      %v2110 = vunpack.c.h.b16 %v667
      %v2111 = vunpack.c.l.b16 %v668
      %v2112 = vunpack.c.h.b16 %v668
      %v2113 = vunpack.c.l.b16 %v669
      %v2114 = vunpack.c.h.b16 %v669
      %v2115 = vunpack.c.l.b16 %v670
      %v2116 = vunpack.c.h.b16 %v670
      %v2117 = vunpack.c.l.b16 %v671
      %v2118 = vunpack.c.h.b16 %v671
      %v2119 = vunpack.c.l.b16 %v672
      %v2120 = vunpack.c.h.b16 %v672
      %v2121 = vunpack.c.l.b16 %v673
      %v2122 = vunpack.c.h.b16 %v673
      %v2123 = vunpack.c.l.b16 %v674
      %v2124 = vunpack.c.h.b16 %v674
      %v2125 = vunpack.c.l.b16 %v675
      %v2126 = vunpack.c.h.b16 %v675
      %v2127 = vunpack.c.l.b16 %v676
      %v2128 = vunpack.c.h.b16 %v676
      %v2129 = vunpack.c.l.b16 %v677
      %v2130 = vunpack.c.h.b16 %v677
      %v2131 = vunpack.c.l.b16 %v678
      %v2132 = vunpack.c.h.b16 %v678
      %v2133 = vunpack.c.l.b16 %v679
      %v2134 = vunpack.c.h.b16 %v679
      %v2135 = vunpack.c.l.b16 %v680
      %v2136 = vunpack.c.h.b16 %v680
      %v2137 = vunpack.c.l.b16 %v681
      %v2138 = vunpack.c.h.b16 %v681
      %v2139 = vunpack.c.l.b16 %v682
      %v2140 = vunpack.c.h.b16 %v682
      %v2141 = vunpack.c.l.b16 %v683
      %v2142 = vunpack.c.h.b16 %v683
      %v2143 = vunpack.c.l.b16 %v684
      %v2144 = vunpack.c.h.b16 %v684
      %v2145 = vunpack.c.l.b16 %v685
      %v2146 = vunpack.c.h.b16 %v685
      %v2147 = vunpack.c.l.b16 %v686
      %v2148 = vunpack.c.h.b16 %v686
      %v2149 = vunpack.c.l.b16 %v687
      %v2150 = vunpack.c.h.b16 %v687
      %v2151 = vunpack.c.l.b16 %v688
      %v2152 = vunpack.c.h.b16 %v688
      %v2153 = vunpack.c.l.b16 %v689
      %v2154 = vunpack.c.h.b16 %v689
      %v2155 = vunpack.c.l.b16 %v690
      %v2156 = vunpack.c.h.b16 %v690
      %v2157 = vunpack.c.l.b16 %v691
      %v2158 = vunpack.c.h.b16 %v691
      %v2159 = vunpack.c.l.b16 %v692
      %v2160 = vunpack.c.h.b16 %v692
      %v2161 = vunpack.c.l.b16 %v693
      %v2162 = vunpack.c.h.b16 %v693
      %v2163 = vunpack.c.l.b16 %v694
      %v2164 = vunpack.c.h.b16 %v694
      %v2165 = vunpack.c.l.b16 %v695
      %v2166 = vunpack.c.h.b16 %v695
      %v2167 = vunpack.c.l.b16 %v696
      %v2168 = vunpack.c.h.b16 %v696
      %v2169 = vunpack.c.l.b16 %v697
      %v2170 = vunpack.c.h.b16 %v697
      %v2171 = vunpack.c.l.b16 %v698
      %v2172 = vunpack.c.h.b16 %v698
      %v2173 = vunpack.c.l.b16 %v699
      %v2174 = vunpack.c.h.b16 %v699
      %v2175 = vunpack.c.l.b16 %v700
      %v2176 = vunpack.c.h.b16 %v700
      %v2177 = vunpack.c.l.b16 %v701
      %v2178 = vunpack.c.h.b16 %v701
      %v2179 = vunpack.c.l.b16 %v702
      %v2180 = vunpack.c.h.b16 %v702
      %v2181 = vunpack.c.l.b16 %v703
      %v2182 = vunpack.c.h.b16 %v703
      %v2183 = vunpack.c.l.b16 %v704
      %v2184 = vunpack.c.h.b16 %v704
      %v2185 = vunpack.c.l.b16 %v705
      %v2186 = vunpack.c.h.b16 %v705
      %v2187 = vunpack.c.l.b16 %v706
      %v2188 = vunpack.c.h.b16 %v706
      %v2189 = vunpack.c.l.b16 %v707
      %v2190 = vunpack.c.h.b16 %v707
      %v2191 = vunpack.c.l.b16 %v708
      %v2192 = vunpack.c.h.b16 %v708
      %v2193 = vunpack.c.l.b16 %v709
      %v2194 = vunpack.c.h.b16 %v709
      %v2195 = vunpack.c.l.b16 %v710
      %v2196 = vunpack.c.h.b16 %v710
      %v2197 = vunpack.c.l.b16 %v711
      %v2198 = vunpack.c.h.b16 %v711
      %v2199 = vunpack.c.l.b16 %v712
      %v2200 = vunpack.c.h.b16 %v712
      %v2201 = vunpack.c.l.b16 %v713
      %v2202 = vunpack.c.h.b16 %v713
      %v2203 = vunpack.c.l.b16 %v714
      %v2204 = vunpack.c.h.b16 %v714
      %v2205 = vunpack.c.l.b16 %v715
      %v2206 = vunpack.c.h.b16 %v715
      %v2207 = vunpack.c.l.b16 %v716
      %v2208 = vunpack.c.h.b16 %v716
      %v2209 = vunpack.c.l.b16 %v717
      %v2210 = vunpack.c.h.b16 %v717
      %v2211 = vunpack.c.l.b16 %v718
      %v2212 = vunpack.c.h.b16 %v718
      %v2213 = vunpack.c.l.b16 %v719
      %v2214 = vunpack.c.h.b16 %v719
      %v2215 = vunpack.c.l.b16 %v720
      %v2216 = vunpack.c.h.b16 %v720
      %v2217 = vunpack.c.l.b16 %v721
      %v2218 = vunpack.c.h.b16 %v721
      %v2219 = vunpack.c.l.b16 %v722
      %v2220 = vunpack.c.h.b16 %v722
      %v2221 = vunpack.c.l.b16 %v723
      %v2222 = vunpack.c.h.b16 %v723
      %v2223 = vunpack.c.l.b16 %v724
      %v2224 = vunpack.c.h.b16 %v724
      %v2225 = vunpack.c.l.b16 %v725
      %v2226 = vunpack.c.h.b16 %v725
      %v2227 = vunpack.c.l.b16 %v726
      %v2228 = vunpack.c.h.b16 %v726
      %v2229 = vunpack.c.l.b16 %v727
      %v2230 = vunpack.c.h.b16 %v727
      %v2231 = vunpack.c.l.b16 %v728
      %v2232 = vunpack.c.h.b16 %v728
      %v2233 = vunpack.c.l.b16 %v729
      %v2234 = vunpack.c.h.b16 %v729
      %v2235 = vunpack.c.l.b16 %v730
      %v2236 = vunpack.c.h.b16 %v730
      %v2237 = vunpack.c.l.b16 %v731
      %v2238 = vunpack.c.h.b16 %v731
      %v2239 = vunpack.c.l.b16 %v732
      %v2240 = vunpack.c.h.b16 %v732
      %v2241 = vunpack.c.l.b16 %v733
      %v2242 = vunpack.c.h.b16 %v733
      %v2243 = vunpack.c.l.b16 %v734
      %v2244 = vunpack.c.h.b16 %v734
      %v2245 = vunpack.c.l.b16 %v735
      %v2246 = vunpack.c.h.b16 %v735
      %v2247 = vunpack.c.l.b16 %v736
      %v2248 = vunpack.c.h.b16 %v736
      %v2249 = vunpack.c.l.b16 %v737
      %v2250 = vunpack.c.h.b16 %v737
      %v2251 = vunpack.c.l.b16 %v738
      %v2252 = vunpack.c.h.b16 %v738
      %v2253 = vunpack.c.l.b16 %v739
      %v2254 = vunpack.c.h.b16 %v739
      %v2255 = vunpack.c.l.b16 %v740
      %v2256 = vunpack.c.h.b16 %v740
      %v2257 = vunpack.c.l.b16 %v741
      %v2258 = vunpack.c.h.b16 %v741
      %v2259 = vunpack.c.l.b16 %v742
      %v2260 = vunpack.c.h.b16 %v742
      %v2261 = vunpack.c.l.b16 %v743
      %v2262 = vunpack.c.h.b16 %v743
      %v2263 = vunpack.c.l.b16 %v744
      %v2264 = vunpack.c.h.b16 %v744
      %v2265 = vunpack.c.l.b16 %v745
      %v2266 = vunpack.c.h.b16 %v745
      %v2267 = vunpack.c.l.b16 %v746
      %v2268 = vunpack.c.h.b16 %v746
      %v2269 = vunpack.c.l.b16 %v747
      %v2270 = vunpack.c.h.b16 %v747
      %v2271 = vunpack.c.l.b16 %v748
      %v2272 = vunpack.c.h.b16 %v748
      %v2273 = vunpack.c.l.b16 %v749
      %v2274 = vunpack.c.h.b16 %v749
      %v2275 = vunpack.c.l.b16 %v750
      %v2276 = vunpack.c.h.b16 %v750
      %v2277 = vunpack.c.l.b16 %v751
      %v2278 = vunpack.c.h.b16 %v751
      %v2279 = vunpack.c.l.b16 %v752
      %v2280 = vunpack.c.h.b16 %v752
      %v2281 = vunpack.c.l.b16 %v753
      %v2282 = vunpack.c.h.b16 %v753
      %v2283 = vunpack.c.l.b16 %v754
      %v2284 = vunpack.c.h.b16 %v754
      %v2285 = vunpack.c.l.b16 %v755
      %v2286 = vunpack.c.h.b16 %v755
      %v2287 = vunpack.c.l.b16 %v756
      %v2288 = vunpack.c.h.b16 %v756
      %v2289 = vunpack.c.l.b16 %v757
      %v2290 = vunpack.c.h.b16 %v757
      %v2291 = vunpack.c.l.b16 %v758
      %v2292 = vunpack.c.h.b16 %v758
      %v2293 = vunpack.c.l.b16 %v759
      %v2294 = vunpack.c.h.b16 %v759
      %v2295 = vunpack.c.l.b16 %v760
      %v2296 = vunpack.c.h.b16 %v760
      %v2297 = vunpack.c.l.b16 %v761
      %v2298 = vunpack.c.h.b16 %v761
      %v2299 = vunpack.c.l.b16 %v762
      %v2300 = vunpack.c.h.b16 %v762
      %v2301 = vunpack.c.l.b16 %v763
      %v2302 = vunpack.c.h.b16 %v763
      %v2303 = vunpack.c.l.b16 %v764
      %v2304 = vunpack.c.h.b16 %v764
      %v2305 = vunpack.c.l.b16 %v765
      %v2306 = vunpack.c.h.b16 %v765
      %v2307 = vunpack.c.l.b16 %v766
      %v2308 = vunpack.c.h.b16 %v766
      %v2309 = vunpack.c.l.b16 %v767
      %v2310 = vunpack.c.h.b16 %v767
      %v2311 = vunpack.c.l.b16 %v768
      %v2312 = vunpack.c.h.b16 %v768
      %v2313 = vunpack.c.l.b16 %v769
      %v2314 = vunpack.c.h.b16 %v769
      %v2315 = vunpack.c.l.b16 %v770
      %v2316 = vunpack.c.h.b16 %v770
      %v2317 = vunpack.c.l.b16 %v771
      %v2318 = vunpack.c.h.b16 %v771
      %v2319 = vunpack.c.l.b16 %v772
      %v2320 = vunpack.c.h.b16 %v772
      %v2321 = vunpack.c.l.b16 %v773
      %v2322 = vunpack.c.h.b16 %v773
      %v2323 = vunpack.c.l.b16 %v774
      %v2324 = vunpack.c.h.b16 %v774
      %v2325 = vunpack.c.l.b16 %v775
      %v2326 = vunpack.c.h.b16 %v775
      %v2327 = vunpack.c.l.b16 %v776
      %v2328 = vunpack.c.h.b16 %v776
      %v2329 = vunpack.c.l.b16 %v777
      %v2330 = vunpack.c.h.b16 %v777
      %v2331 = vunpack.c.l.b16 %v778
      %v2332 = vunpack.c.h.b16 %v778
      %v2333 = vunpack.c.l.b16 %v779
      %v2334 = vunpack.c.h.b16 %v779
      %v2335 = vunpack.c.l.b16 %v780
      %v2336 = vunpack.c.h.b16 %v780
      %v2337 = vunpack.c.l.b16 %v781
      %v2338 = vunpack.c.h.b16 %v781
      %v2339 = vunpack.c.l.b16 %v782
      %v2340 = vunpack.c.h.b16 %v782
      %v2341 = vunpack.c.l.b16 %v783
      %v2342 = vunpack.c.h.b16 %v783
      %v2343 = vunpack.c.l.b16 %v784
      %v2344 = vunpack.c.h.b16 %v784
      %v2345 = vunpack.c.l.b16 %v785
      %v2346 = vunpack.c.h.b16 %v785
      %v2347 = vunpack.c.l.b16 %v786
      %v2348 = vunpack.c.h.b16 %v786
      %v2349 = vunpack.c.l.b16 %v787
      %v2350 = vunpack.c.h.b16 %v787
      %v2351 = vunpack.c.l.b16 %v788
      %v2352 = vunpack.c.h.b16 %v788
      %v2353 = vunpack.c.l.b16 %v789
      %v2354 = vunpack.c.h.b16 %v789
      %v2355 = vunpack.c.l.b16 %v790
      %v2356 = vunpack.c.h.b16 %v790
      %v2357 = vunpack.c.l.b16 %v791
      %v2358 = vunpack.c.h.b16 %v791
      %v2359 = vunpack.c.l.b16 %v792
      %v2360 = vunpack.c.h.b16 %v792
      %v2361 = vunpack.c.l.b16 %v793
      %v2362 = vunpack.c.h.b16 %v793
      %v2363 = vunpack.c.l.b16 %v794
      %v2364 = vunpack.c.h.b16 %v794
      %v2365 = vunpack.c.l.b16 %v795
      %v2366 = vunpack.c.h.b16 %v795
      %v2367 = vunpack.c.l.b16 %v796
      %v2368 = vunpack.c.h.b16 %v796
      %v2369 = vunpack.c.l.b16 %v797
      %v2370 = vunpack.c.h.b16 %v797
      %v2371 = vunpack.c.l.b16 %v798
      %v2372 = vunpack.c.h.b16 %v798
      %v2373 = vunpack.c.l.b16 %v799
      %v2374 = vunpack.c.h.b16 %v799
      %v2375 = vunpack.c.l.b16 %v800
      %v2376 = vunpack.c.h.b16 %v800
      %v2377 = vunpack.c.l.b16 %v801
      %v2378 = vunpack.c.h.b16 %v801
      %v2379 = vunpack.c.l.b16 %v802
      %v2380 = vunpack.c.h.b16 %v802
      %v2381 = vunpack.c.l.b16 %v803
      %v2382 = vunpack.c.h.b16 %v803
      %v2383 = vunpack.c.l.b16 %v804
      %v2384 = vunpack.c.h.b16 %v804
      %v2385 = vunpack.c.l.b16 %v805
      %v2386 = vunpack.c.h.b16 %v805
      %v2387 = vunpack.c.l.b16 %v806
      %v2388 = vunpack.c.h.b16 %v806
      %v2389 = vunpack.c.l.b16 %v807
      %v2390 = vunpack.c.h.b16 %v807
      %v2391 = vunpack.c.l.b16 %v808
      %v2392 = vunpack.c.h.b16 %v808
      %v2393 = vunpack.c.l.b16 %v809
      %v2394 = vunpack.c.h.b16 %v809
      %v2395 = vunpack.c.l.b16 %v810
      %v2396 = vunpack.c.h.b16 %v810
      %v2397 = vunpack.c.l.b16 %v811
      %v2398 = vunpack.c.h.b16 %v811
      %v2399 = vunpack.c.l.b16 %v812
      %v2400 = vunpack.c.h.b16 %v812
      %v2401 = vunpack.c.l.b16 %v813
      %v2402 = vunpack.c.h.b16 %v813
      %v2403 = vunpack.c.l.b16 %v814
      %v2404 = vunpack.c.h.b16 %v814
      %v2405 = vunpack.c.l.b16 %v815
      %v2406 = vunpack.c.h.b16 %v815
      %v2407 = vunpack.c.l.b16 %v816
      %v2408 = vunpack.c.h.b16 %v816
      %v2409 = vunpack.c.l.b16 %v817
      %v2410 = vunpack.c.h.b16 %v817
      %v2411 = vunpack.c.l.b16 %v818
      %v2412 = vunpack.c.h.b16 %v818
      %v2413 = vunpack.c.l.b16 %v819
      %v2414 = vunpack.c.h.b16 %v819
      %v2415 = vunpack.c.l.b16 %v820
      %v2416 = vunpack.c.h.b16 %v820
      %v2417 = vunpack.c.l.b16 %v821
      %v2418 = vunpack.c.h.b16 %v821
      %v2419 = vunpack.c.l.b16 %v822
      %v2420 = vunpack.c.h.b16 %v822
      %v2421 = vunpack.c.l.b16 %v823
      %v2422 = vunpack.c.h.b16 %v823
      %v2423 = vunpack.c.l.b16 %v824
      %v2424 = vunpack.c.h.b16 %v824
      %v2425 = vunpack.c.l.b16 %v825
      %v2426 = vunpack.c.h.b16 %v825
      %v2427 = vunpack.c.l.b16 %v826
      %v2428 = vunpack.c.h.b16 %v826
      %v2429 = vunpack.c.l.b16 %v827
      %v2430 = vunpack.c.h.b16 %v827
      %v2431 = vunpack.c.l.b16 %v828
      %v2432 = vunpack.c.h.b16 %v828
      %v2433 = vunpack.c.l.b16 %v829
      %v2434 = vunpack.c.h.b16 %v829
      %v2435 = vunpack.c.l.b16 %v830
      %v2436 = vunpack.c.h.b16 %v830
      %v2437 = vpack.c.b16 %v1421, %v1413
      %v2438 = vpack.c.b16 %v1422, %v1414
      %v2439 = vpack.c.b16 %v1423, %v1415
      %v2440 = vpack.c.b16 %v1424, %v1416
      %v2441 = vpack.c.b16 %v1425, %v1417
      %v2442 = vpack.c.b16 %v1426, %v1418
      %v2443 = vpack.c.b16 %v1427, %v1419
      %v2444 = vpack.c.b16 %v1428, %v1420
      %v2445 = vpack.c.b16 %v1437, %v1429
      %v2446 = vpack.c.b16 %v1438, %v1430
      %v2447 = vpack.c.b16 %v1439, %v1431
      %v2448 = vpack.c.b16 %v1440, %v1432
      %v2449 = vpack.c.b16 %v1441, %v1433
      %v2450 = vpack.c.b16 %v1442, %v1434
      %v2451 = vpack.c.b16 %v1443, %v1435
      %v2452 = vpack.c.b16 %v1444, %v1436
      %v2453 = vpack.c.b16 %v1453, %v1445
      %v2454 = vpack.c.b16 %v1454, %v1446
      %v2455 = vpack.c.b16 %v1455, %v1447
      %v2456 = vpack.c.b16 %v1456, %v1448
      %v2457 = vpack.c.b16 %v1457, %v1449
      %v2458 = vpack.c.b16 %v1458, %v1450
      %v2459 = vpack.c.b16 %v1459, %v1451
      %v2460 = vpack.c.b16 %v1460, %v1452
      %v2461 = vpack.c.b16 %v1469, %v1461
      %v2462 = vpack.c.b16 %v1470, %v1462
      %v2463 = vpack.c.b16 %v1471, %v1463
      %v2464 = vpack.c.b16 %v1472, %v1464
      %v2465 = vpack.c.b16 %v1473, %v1465
      %v2466 = vpack.c.b16 %v1474, %v1466
      %v2467 = vpack.c.b16 %v1475, %v1467
      %v2468 = vpack.c.b16 %v1476, %v1468
      %v2469 = vpack.c.b16 %v1485, %v1477
      %v2470 = vpack.c.b16 %v1486, %v1478
      %v2471 = vpack.c.b16 %v1487, %v1479
      %v2472 = vpack.c.b16 %v1488, %v1480
      %v2473 = vpack.c.b16 %v1489, %v1481
      %v2474 = vpack.c.b16 %v1490, %v1482
      %v2475 = vpack.c.b16 %v1491, %v1483
      %v2476 = vpack.c.b16 %v1492, %v1484
      %v2477 = vpack.c.b16 %v1501, %v1493
      %v2478 = vpack.c.b16 %v1502, %v1494
      %v2479 = vpack.c.b16 %v1503, %v1495
      %v2480 = vpack.c.b16 %v1504, %v1496
      %v2481 = vpack.c.b16 %v1505, %v1497
      %v2482 = vpack.c.b16 %v1506, %v1498
      %v2483 = vpack.c.b16 %v1507, %v1499
      %v2484 = vpack.c.b16 %v1508, %v1500
      %v2485 = vpack.c.b16 %v1517, %v1509
      %v2486 = vpack.c.b16 %v1518, %v1510
      %v2487 = vpack.c.b16 %v1519, %v1511
      %v2488 = vpack.c.b16 %v1520, %v1512
      %v2489 = vpack.c.b16 %v1521, %v1513
      %v2490 = vpack.c.b16 %v1522, %v1514
      %v2491 = vpack.c.b16 %v1523, %v1515
      %v2492 = vpack.c.b16 %v1524, %v1516
      %v2493 = vpack.c.b16 %v1533, %v1525
      %v2494 = vpack.c.b16 %v1534, %v1526
      %v2495 = vpack.c.b16 %v1535, %v1527
      %v2496 = vpack.c.b16 %v1536, %v1528
      %v2497 = vpack.c.b16 %v1537, %v1529
      %v2498 = vpack.c.b16 %v1538, %v1530
      %v2499 = vpack.c.b16 %v1539, %v1531
      %v2500 = vpack.c.b16 %v1540, %v1532
      %v2501 = vpack.c.b16 %v1549, %v1541
      %v2502 = vpack.c.b16 %v1550, %v1542
      %v2503 = vpack.c.b16 %v1551, %v1543
      %v2504 = vpack.c.b16 %v1552, %v1544
      %v2505 = vpack.c.b16 %v1553, %v1545
      %v2506 = vpack.c.b16 %v1554, %v1546
      %v2507 = vpack.c.b16 %v1555, %v1547
      %v2508 = vpack.c.b16 %v1556, %v1548
      %v2509 = vpack.c.b16 %v1565, %v1557
      %v2510 = vpack.c.b16 %v1566, %v1558
      %v2511 = vpack.c.b16 %v1567, %v1559
      %v2512 = vpack.c.b16 %v1568, %v1560
      %v2513 = vpack.c.b16 %v1569, %v1561
      %v2514 = vpack.c.b16 %v1570, %v1562
      %v2515 = vpack.c.b16 %v1571, %v1563
      %v2516 = vpack.c.b16 %v1572, %v1564
      %v2517 = vpack.c.b16 %v1581, %v1573
      %v2518 = vpack.c.b16 %v1582, %v1574
      %v2519 = vpack.c.b16 %v1583, %v1575
      %v2520 = vpack.c.b16 %v1584, %v1576
      %v2521 = vpack.c.b16 %v1585, %v1577
      %v2522 = vpack.c.b16 %v1586, %v1578
      %v2523 = vpack.c.b16 %v1587, %v1579
      %v2524 = vpack.c.b16 %v1588, %v1580
      %v2525 = vpack.c.b16 %v1597, %v1589
      %v2526 = vpack.c.b16 %v1598, %v1590
      %v2527 = vpack.c.b16 %v1599, %v1591
      %v2528 = vpack.c.b16 %v1600, %v1592
      %v2529 = vpack.c.b16 %v1601, %v1593
      %v2530 = vpack.c.b16 %v1602, %v1594
      %v2531 = vpack.c.b16 %v1603, %v1595
      %v2532 = vpack.c.b16 %v1604, %v1596
      %v2533 = vpack.c.b16 %v1613, %v1605
      %v2534 = vpack.c.b16 %v1614, %v1606
      %v2535 = vpack.c.b16 %v1615, %v1607
      %v2536 = vpack.c.b16 %v1616, %v1608
      %v2537 = vpack.c.b16 %v1617, %v1609
      %v2538 = vpack.c.b16 %v1618, %v1610
      %v2539 = vpack.c.b16 %v1619, %v1611
      %v2540 = vpack.c.b16 %v1620, %v1612
      %v2541 = vpack.c.b16 %v1629, %v1621
      %v2542 = vpack.c.b16 %v1630, %v1622
      %v2543 = vpack.c.b16 %v1631, %v1623
      %v2544 = vpack.c.b16 %v1632, %v1624
      %v2545 = vpack.c.b16 %v1633, %v1625
      %v2546 = vpack.c.b16 %v1634, %v1626
      %v2547 = vpack.c.b16 %v1635, %v1627
      %v2548 = vpack.c.b16 %v1636, %v1628
      %v2549 = vpack.c.b16 %v1645, %v1637
      %v2550 = vpack.c.b16 %v1646, %v1638
      %v2551 = vpack.c.b16 %v1647, %v1639
      %v2552 = vpack.c.b16 %v1648, %v1640
      %v2553 = vpack.c.b16 %v1649, %v1641
      %v2554 = vpack.c.b16 %v1650, %v1642
      %v2555 = vpack.c.b16 %v1651, %v1643
      %v2556 = vpack.c.b16 %v1652, %v1644
      %v2557 = vpack.c.b16 %v1661, %v1653
      %v2558 = vpack.c.b16 %v1662, %v1654
      %v2559 = vpack.c.b16 %v1663, %v1655
      %v2560 = vpack.c.b16 %v1664, %v1656
      %v2561 = vpack.c.b16 %v1665, %v1657
      %v2562 = vpack.c.b16 %v1666, %v1658
      %v2563 = vpack.c.b16 %v1667, %v1659
      %v2564 = vpack.c.b16 %v1668, %v1660
      %v2565 = vpack.c.b16 %v1677, %v1669
      %v2566 = vpack.c.b16 %v1678, %v1670
      %v2567 = vpack.c.b16 %v1679, %v1671
      %v2568 = vpack.c.b16 %v1680, %v1672
      %v2569 = vpack.c.b16 %v1681, %v1673
      %v2570 = vpack.c.b16 %v1682, %v1674
      %v2571 = vpack.c.b16 %v1683, %v1675
      %v2572 = vpack.c.b16 %v1684, %v1676
      %v2573 = vpack.c.b16 %v1693, %v1685
      %v2574 = vpack.c.b16 %v1694, %v1686
      %v2575 = vpack.c.b16 %v1695, %v1687
      %v2576 = vpack.c.b16 %v1696, %v1688
      %v2577 = vpack.c.b16 %v1697, %v1689
      %v2578 = vpack.c.b16 %v1698, %v1690
      %v2579 = vpack.c.b16 %v1699, %v1691
      %v2580 = vpack.c.b16 %v1700, %v1692
      %v2581 = vpack.c.b16 %v1709, %v1701
      %v2582 = vpack.c.b16 %v1710, %v1702
      %v2583 = vpack.c.b16 %v1711, %v1703
      %v2584 = vpack.c.b16 %v1712, %v1704
      %v2585 = vpack.c.b16 %v1713, %v1705
      %v2586 = vpack.c.b16 %v1714, %v1706
      %v2587 = vpack.c.b16 %v1715, %v1707
      %v2588 = vpack.c.b16 %v1716, %v1708
      %v2589 = vpack.c.b16 %v1725, %v1717
      %v2590 = vpack.c.b16 %v1726, %v1718
      %v2591 = vpack.c.b16 %v1727, %v1719
      %v2592 = vpack.c.b16 %v1728, %v1720
      %v2593 = vpack.c.b16 %v1729, %v1721
      %v2594 = vpack.c.b16 %v1730, %v1722
      %v2595 = vpack.c.b16 %v1731, %v1723
      %v2596 = vpack.c.b16 %v1732, %v1724
      %v2597 = vpack.c.b16 %v1741, %v1733
      %v2598 = vpack.c.b16 %v1742, %v1734
      %v2599 = vpack.c.b16 %v1743, %v1735
      %v2600 = vpack.c.b16 %v1744, %v1736
      %v2601 = vpack.c.b16 %v1745, %v1737
      %v2602 = vpack.c.b16 %v1746, %v1738
      %v2603 = vpack.c.b16 %v1747, %v1739
      %v2604 = vpack.c.b16 %v1748, %v1740
      %v2605 = vpack.c.b16 %v1757, %v1749
      %v2606 = vpack.c.b16 %v1758, %v1750
      %v2607 = vpack.c.b16 %v1759, %v1751
      %v2608 = vpack.c.b16 %v1760, %v1752
      %v2609 = vpack.c.b16 %v1761, %v1753
      %v2610 = vpack.c.b16 %v1762, %v1754
      %v2611 = vpack.c.b16 %v1763, %v1755
      %v2612 = vpack.c.b16 %v1764, %v1756
      %v2613 = vpack.c.b16 %v1773, %v1765
      %v2614 = vpack.c.b16 %v1774, %v1766
      %v2615 = vpack.c.b16 %v1775, %v1767
      %v2616 = vpack.c.b16 %v1776, %v1768
      %v2617 = vpack.c.b16 %v1777, %v1769
      %v2618 = vpack.c.b16 %v1778, %v1770
      %v2619 = vpack.c.b16 %v1779, %v1771
      %v2620 = vpack.c.b16 %v1780, %v1772
      %v2621 = vpack.c.b16 %v1789, %v1781
      %v2622 = vpack.c.b16 %v1790, %v1782
      %v2623 = vpack.c.b16 %v1791, %v1783
      %v2624 = vpack.c.b16 %v1792, %v1784
      %v2625 = vpack.c.b16 %v1793, %v1785
      %v2626 = vpack.c.b16 %v1794, %v1786
      %v2627 = vpack.c.b16 %v1795, %v1787
      %v2628 = vpack.c.b16 %v1796, %v1788
      %v2629 = vpack.c.b16 %v1805, %v1797
      %v2630 = vpack.c.b16 %v1806, %v1798
      %v2631 = vpack.c.b16 %v1807, %v1799
      %v2632 = vpack.c.b16 %v1808, %v1800
      %v2633 = vpack.c.b16 %v1809, %v1801
      %v2634 = vpack.c.b16 %v1810, %v1802
      %v2635 = vpack.c.b16 %v1811, %v1803
      %v2636 = vpack.c.b16 %v1812, %v1804
      %v2637 = vpack.c.b16 %v1821, %v1813
      %v2638 = vpack.c.b16 %v1822, %v1814
      %v2639 = vpack.c.b16 %v1823, %v1815
      %v2640 = vpack.c.b16 %v1824, %v1816
      %v2641 = vpack.c.b16 %v1825, %v1817
      %v2642 = vpack.c.b16 %v1826, %v1818
      %v2643 = vpack.c.b16 %v1827, %v1819
      %v2644 = vpack.c.b16 %v1828, %v1820
      %v2645 = vpack.c.b16 %v1837, %v1829
      %v2646 = vpack.c.b16 %v1838, %v1830
      %v2647 = vpack.c.b16 %v1839, %v1831
      %v2648 = vpack.c.b16 %v1840, %v1832
      %v2649 = vpack.c.b16 %v1841, %v1833
      %v2650 = vpack.c.b16 %v1842, %v1834
      %v2651 = vpack.c.b16 %v1843, %v1835
      %v2652 = vpack.c.b16 %v1844, %v1836
      %v2653 = vpack.c.b16 %v1853, %v1845
      %v2654 = vpack.c.b16 %v1854, %v1846
      %v2655 = vpack.c.b16 %v1855, %v1847
      %v2656 = vpack.c.b16 %v1856, %v1848
      %v2657 = vpack.c.b16 %v1857, %v1849
      %v2658 = vpack.c.b16 %v1858, %v1850
      %v2659 = vpack.c.b16 %v1859, %v1851
      %v2660 = vpack.c.b16 %v1860, %v1852
      %v2661 = vpack.c.b16 %v1869, %v1861
      %v2662 = vpack.c.b16 %v1870, %v1862
      %v2663 = vpack.c.b16 %v1871, %v1863
      %v2664 = vpack.c.b16 %v1872, %v1864
      %v2665 = vpack.c.b16 %v1873, %v1865
      %v2666 = vpack.c.b16 %v1874, %v1866
      %v2667 = vpack.c.b16 %v1875, %v1867
      %v2668 = vpack.c.b16 %v1876, %v1868
      %v2669 = vpack.c.b16 %v1885, %v1877
      %v2670 = vpack.c.b16 %v1886, %v1878
      %v2671 = vpack.c.b16 %v1887, %v1879
      %v2672 = vpack.c.b16 %v1888, %v1880
      %v2673 = vpack.c.b16 %v1889, %v1881
      %v2674 = vpack.c.b16 %v1890, %v1882
      %v2675 = vpack.c.b16 %v1891, %v1883
      %v2676 = vpack.c.b16 %v1892, %v1884
      %v2677 = vpack.c.b16 %v1901, %v1893
      %v2678 = vpack.c.b16 %v1902, %v1894
      %v2679 = vpack.c.b16 %v1903, %v1895
      %v2680 = vpack.c.b16 %v1904, %v1896
      %v2681 = vpack.c.b16 %v1905, %v1897
      %v2682 = vpack.c.b16 %v1906, %v1898
      %v2683 = vpack.c.b16 %v1907, %v1899
      %v2684 = vpack.c.b16 %v1908, %v1900
      %v2685 = vpack.c.b16 %v1917, %v1909
      %v2686 = vpack.c.b16 %v1918, %v1910
      %v2687 = vpack.c.b16 %v1919, %v1911
      %v2688 = vpack.c.b16 %v1920, %v1912
      %v2689 = vpack.c.b16 %v1921, %v1913
      %v2690 = vpack.c.b16 %v1922, %v1914
      %v2691 = vpack.c.b16 %v1923, %v1915
      %v2692 = vpack.c.b16 %v1924, %v1916
      %v2693 = vpack.c.b16 %v1933, %v1925
      %v2694 = vpack.c.b16 %v1934, %v1926
      %v2695 = vpack.c.b16 %v1935, %v1927
      %v2696 = vpack.c.b16 %v1936, %v1928
      %v2697 = vpack.c.b16 %v1937, %v1929
      %v2698 = vpack.c.b16 %v1938, %v1930
      %v2699 = vpack.c.b16 %v1939, %v1931
      %v2700 = vpack.c.b16 %v1940, %v1932
      %v2701 = vpack.c.b16 %v1949, %v1941
      %v2702 = vpack.c.b16 %v1950, %v1942
      %v2703 = vpack.c.b16 %v1951, %v1943
      %v2704 = vpack.c.b16 %v1952, %v1944
      %v2705 = vpack.c.b16 %v1953, %v1945
      %v2706 = vpack.c.b16 %v1954, %v1946
      %v2707 = vpack.c.b16 %v1955, %v1947
      %v2708 = vpack.c.b16 %v1956, %v1948
      %v2709 = vpack.c.b16 %v1965, %v1957
      %v2710 = vpack.c.b16 %v1966, %v1958
      %v2711 = vpack.c.b16 %v1967, %v1959
      %v2712 = vpack.c.b16 %v1968, %v1960
      %v2713 = vpack.c.b16 %v1969, %v1961
      %v2714 = vpack.c.b16 %v1970, %v1962
      %v2715 = vpack.c.b16 %v1971, %v1963
      %v2716 = vpack.c.b16 %v1972, %v1964
      %v2717 = vpack.c.b16 %v1981, %v1973
      %v2718 = vpack.c.b16 %v1982, %v1974
      %v2719 = vpack.c.b16 %v1983, %v1975
      %v2720 = vpack.c.b16 %v1984, %v1976
      %v2721 = vpack.c.b16 %v1985, %v1977
      %v2722 = vpack.c.b16 %v1986, %v1978
      %v2723 = vpack.c.b16 %v1987, %v1979
      %v2724 = vpack.c.b16 %v1988, %v1980
      %v2725 = vpack.c.b16 %v1997, %v1989
      %v2726 = vpack.c.b16 %v1998, %v1990
      %v2727 = vpack.c.b16 %v1999, %v1991
      %v2728 = vpack.c.b16 %v2000, %v1992
      %v2729 = vpack.c.b16 %v2001, %v1993
      %v2730 = vpack.c.b16 %v2002, %v1994
      %v2731 = vpack.c.b16 %v2003, %v1995
      %v2732 = vpack.c.b16 %v2004, %v1996
      %v2733 = vpack.c.b16 %v2013, %v2005
      %v2734 = vpack.c.b16 %v2014, %v2006
      %v2735 = vpack.c.b16 %v2015, %v2007
      %v2736 = vpack.c.b16 %v2016, %v2008
      %v2737 = vpack.c.b16 %v2017, %v2009
      %v2738 = vpack.c.b16 %v2018, %v2010
      %v2739 = vpack.c.b16 %v2019, %v2011
      %v2740 = vpack.c.b16 %v2020, %v2012
      %v2741 = vpack.c.b16 %v2029, %v2021
      %v2742 = vpack.c.b16 %v2030, %v2022
      %v2743 = vpack.c.b16 %v2031, %v2023
      %v2744 = vpack.c.b16 %v2032, %v2024
      %v2745 = vpack.c.b16 %v2033, %v2025
      %v2746 = vpack.c.b16 %v2034, %v2026
      %v2747 = vpack.c.b16 %v2035, %v2027
      %v2748 = vpack.c.b16 %v2036, %v2028
      %v2749 = vpack.c.b16 %v2045, %v2037
      %v2750 = vpack.c.b16 %v2046, %v2038
      %v2751 = vpack.c.b16 %v2047, %v2039
      %v2752 = vpack.c.b16 %v2048, %v2040
      %v2753 = vpack.c.b16 %v2049, %v2041
      %v2754 = vpack.c.b16 %v2050, %v2042
      %v2755 = vpack.c.b16 %v2051, %v2043
      %v2756 = vpack.c.b16 %v2052, %v2044
      %v2757 = vpack.c.b16 %v2061, %v2053
      %v2758 = vpack.c.b16 %v2062, %v2054
      %v2759 = vpack.c.b16 %v2063, %v2055
      %v2760 = vpack.c.b16 %v2064, %v2056
      %v2761 = vpack.c.b16 %v2065, %v2057
      %v2762 = vpack.c.b16 %v2066, %v2058
      %v2763 = vpack.c.b16 %v2067, %v2059
      %v2764 = vpack.c.b16 %v2068, %v2060
      %v2765 = vpack.c.b16 %v2077, %v2069
      %v2766 = vpack.c.b16 %v2078, %v2070
      %v2767 = vpack.c.b16 %v2079, %v2071
      %v2768 = vpack.c.b16 %v2080, %v2072
      %v2769 = vpack.c.b16 %v2081, %v2073
      %v2770 = vpack.c.b16 %v2082, %v2074
      %v2771 = vpack.c.b16 %v2083, %v2075
      %v2772 = vpack.c.b16 %v2084, %v2076
      %v2773 = vpack.c.b16 %v2093, %v2085
      %v2774 = vpack.c.b16 %v2094, %v2086
      %v2775 = vpack.c.b16 %v2095, %v2087
      %v2776 = vpack.c.b16 %v2096, %v2088
      %v2777 = vpack.c.b16 %v2097, %v2089
      %v2778 = vpack.c.b16 %v2098, %v2090
      %v2779 = vpack.c.b16 %v2099, %v2091
      %v2780 = vpack.c.b16 %v2100, %v2092
      %v2781 = vpack.c.b16 %v2109, %v2101
      %v2782 = vpack.c.b16 %v2110, %v2102
      %v2783 = vpack.c.b16 %v2111, %v2103
      %v2784 = vpack.c.b16 %v2112, %v2104
      %v2785 = vpack.c.b16 %v2113, %v2105
      %v2786 = vpack.c.b16 %v2114, %v2106
      %v2787 = vpack.c.b16 %v2115, %v2107
      %v2788 = vpack.c.b16 %v2116, %v2108
      %v2789 = vpack.c.b16 %v2125, %v2117
      %v2790 = vpack.c.b16 %v2126, %v2118
      %v2791 = vpack.c.b16 %v2127, %v2119
      %v2792 = vpack.c.b16 %v2128, %v2120
      %v2793 = vpack.c.b16 %v2129, %v2121
      %v2794 = vpack.c.b16 %v2130, %v2122
      %v2795 = vpack.c.b16 %v2131, %v2123
      %v2796 = vpack.c.b16 %v2132, %v2124
      %v2797 = vpack.c.b16 %v2141, %v2133
      %v2798 = vpack.c.b16 %v2142, %v2134
      %v2799 = vpack.c.b16 %v2143, %v2135
      %v2800 = vpack.c.b16 %v2144, %v2136
      %v2801 = vpack.c.b16 %v2145, %v2137
      %v2802 = vpack.c.b16 %v2146, %v2138
      %v2803 = vpack.c.b16 %v2147, %v2139
      %v2804 = vpack.c.b16 %v2148, %v2140
      %v2805 = vpack.c.b16 %v2157, %v2149
      %v2806 = vpack.c.b16 %v2158, %v2150
      %v2807 = vpack.c.b16 %v2159, %v2151
      %v2808 = vpack.c.b16 %v2160, %v2152
      %v2809 = vpack.c.b16 %v2161, %v2153
      %v2810 = vpack.c.b16 %v2162, %v2154
      %v2811 = vpack.c.b16 %v2163, %v2155
      %v2812 = vpack.c.b16 %v2164, %v2156
      %v2813 = vpack.c.b16 %v2173, %v2165
      %v2814 = vpack.c.b16 %v2174, %v2166
      %v2815 = vpack.c.b16 %v2175, %v2167
      %v2816 = vpack.c.b16 %v2176, %v2168
      %v2817 = vpack.c.b16 %v2177, %v2169
      %v2818 = vpack.c.b16 %v2178, %v2170
      %v2819 = vpack.c.b16 %v2179, %v2171
      %v2820 = vpack.c.b16 %v2180, %v2172
      %v2821 = vpack.c.b16 %v2189, %v2181
      %v2822 = vpack.c.b16 %v2190, %v2182
      %v2823 = vpack.c.b16 %v2191, %v2183
      %v2824 = vpack.c.b16 %v2192, %v2184
      %v2825 = vpack.c.b16 %v2193, %v2185
      %v2826 = vpack.c.b16 %v2194, %v2186
      %v2827 = vpack.c.b16 %v2195, %v2187
      %v2828 = vpack.c.b16 %v2196, %v2188
      %v2829 = vpack.c.b16 %v2205, %v2197
      %v2830 = vpack.c.b16 %v2206, %v2198
      %v2831 = vpack.c.b16 %v2207, %v2199
      %v2832 = vpack.c.b16 %v2208, %v2200
      %v2833 = vpack.c.b16 %v2209, %v2201
      %v2834 = vpack.c.b16 %v2210, %v2202
      %v2835 = vpack.c.b16 %v2211, %v2203
      %v2836 = vpack.c.b16 %v2212, %v2204
      %v2837 = vpack.c.b16 %v2221, %v2213
      %v2838 = vpack.c.b16 %v2222, %v2214
      %v2839 = vpack.c.b16 %v2223, %v2215
      %v2840 = vpack.c.b16 %v2224, %v2216
      %v2841 = vpack.c.b16 %v2225, %v2217
      %v2842 = vpack.c.b16 %v2226, %v2218
      %v2843 = vpack.c.b16 %v2227, %v2219
      %v2844 = vpack.c.b16 %v2228, %v2220
      %v2845 = vpack.c.b16 %v2237, %v2229
      %v2846 = vpack.c.b16 %v2238, %v2230
      %v2847 = vpack.c.b16 %v2239, %v2231
      %v2848 = vpack.c.b16 %v2240, %v2232
      %v2849 = vpack.c.b16 %v2241, %v2233
      %v2850 = vpack.c.b16 %v2242, %v2234
      %v2851 = vpack.c.b16 %v2243, %v2235
      %v2852 = vpack.c.b16 %v2244, %v2236
      %v2853 = vpack.c.b16 %v2253, %v2245
      %v2854 = vpack.c.b16 %v2254, %v2246
      %v2855 = vpack.c.b16 %v2255, %v2247
      %v2856 = vpack.c.b16 %v2256, %v2248
      %v2857 = vpack.c.b16 %v2257, %v2249
      %v2858 = vpack.c.b16 %v2258, %v2250
      %v2859 = vpack.c.b16 %v2259, %v2251
      %v2860 = vpack.c.b16 %v2260, %v2252
      %v2861 = vpack.c.b16 %v2269, %v2261
      %v2862 = vpack.c.b16 %v2270, %v2262
      %v2863 = vpack.c.b16 %v2271, %v2263
      %v2864 = vpack.c.b16 %v2272, %v2264
      %v2865 = vpack.c.b16 %v2273, %v2265
      %v2866 = vpack.c.b16 %v2274, %v2266
      %v2867 = vpack.c.b16 %v2275, %v2267
      %v2868 = vpack.c.b16 %v2276, %v2268
      %v2869 = vpack.c.b16 %v2285, %v2277
      %v2870 = vpack.c.b16 %v2286, %v2278
      %v2871 = vpack.c.b16 %v2287, %v2279
      %v2872 = vpack.c.b16 %v2288, %v2280
      %v2873 = vpack.c.b16 %v2289, %v2281
      %v2874 = vpack.c.b16 %v2290, %v2282
      %v2875 = vpack.c.b16 %v2291, %v2283
      %v2876 = vpack.c.b16 %v2292, %v2284
      %v2877 = vpack.c.b16 %v2301, %v2293
      %v2878 = vpack.c.b16 %v2302, %v2294
      %v2879 = vpack.c.b16 %v2303, %v2295
      %v2880 = vpack.c.b16 %v2304, %v2296
      %v2881 = vpack.c.b16 %v2305, %v2297
      %v2882 = vpack.c.b16 %v2306, %v2298
      %v2883 = vpack.c.b16 %v2307, %v2299
      %v2884 = vpack.c.b16 %v2308, %v2300
      %v2885 = vpack.c.b16 %v2317, %v2309
      %v2886 = vpack.c.b16 %v2318, %v2310
      %v2887 = vpack.c.b16 %v2319, %v2311
      %v2888 = vpack.c.b16 %v2320, %v2312
      %v2889 = vpack.c.b16 %v2321, %v2313
      %v2890 = vpack.c.b16 %v2322, %v2314
      %v2891 = vpack.c.b16 %v2323, %v2315
      %v2892 = vpack.c.b16 %v2324, %v2316
      %v2893 = vpack.c.b16 %v2333, %v2325
      %v2894 = vpack.c.b16 %v2334, %v2326
      %v2895 = vpack.c.b16 %v2335, %v2327
      %v2896 = vpack.c.b16 %v2336, %v2328
      %v2897 = vpack.c.b16 %v2337, %v2329
      %v2898 = vpack.c.b16 %v2338, %v2330
      %v2899 = vpack.c.b16 %v2339, %v2331
      %v2900 = vpack.c.b16 %v2340, %v2332
      %v2901 = vpack.c.b16 %v2349, %v2341
      %v2902 = vpack.c.b16 %v2350, %v2342
      %v2903 = vpack.c.b16 %v2351, %v2343
      %v2904 = vpack.c.b16 %v2352, %v2344
      %v2905 = vpack.c.b16 %v2353, %v2345
      %v2906 = vpack.c.b16 %v2354, %v2346
      %v2907 = vpack.c.b16 %v2355, %v2347
      %v2908 = vpack.c.b16 %v2356, %v2348
      %v2909 = vpack.c.b16 %v2365, %v2357
      %v2910 = vpack.c.b16 %v2366, %v2358
      %v2911 = vpack.c.b16 %v2367, %v2359
      %v2912 = vpack.c.b16 %v2368, %v2360
      %v2913 = vpack.c.b16 %v2369, %v2361
      %v2914 = vpack.c.b16 %v2370, %v2362
      %v2915 = vpack.c.b16 %v2371, %v2363
      %v2916 = vpack.c.b16 %v2372, %v2364
      %v2917 = vpack.c.b16 %v2381, %v2373
      %v2918 = vpack.c.b16 %v2382, %v2374
      %v2919 = vpack.c.b16 %v2383, %v2375
      %v2920 = vpack.c.b16 %v2384, %v2376
      %v2921 = vpack.c.b16 %v2385, %v2377
      %v2922 = vpack.c.b16 %v2386, %v2378
      %v2923 = vpack.c.b16 %v2387, %v2379
      %v2924 = vpack.c.b16 %v2388, %v2380
      %v2925 = vpack.c.b16 %v2397, %v2389
      %v2926 = vpack.c.b16 %v2398, %v2390
      %v2927 = vpack.c.b16 %v2399, %v2391
      %v2928 = vpack.c.b16 %v2400, %v2392
      %v2929 = vpack.c.b16 %v2401, %v2393
      %v2930 = vpack.c.b16 %v2402, %v2394
      %v2931 = vpack.c.b16 %v2403, %v2395
      %v2932 = vpack.c.b16 %v2404, %v2396
      %v2933 = vpack.c.b16 %v2413, %v2405
      %v2934 = vpack.c.b16 %v2414, %v2406
      %v2935 = vpack.c.b16 %v2415, %v2407
      %v2936 = vpack.c.b16 %v2416, %v2408
      %v2937 = vpack.c.b16 %v2417, %v2409
      %v2938 = vpack.c.b16 %v2418, %v2410
      %v2939 = vpack.c.b16 %v2419, %v2411
      %v2940 = vpack.c.b16 %v2420, %v2412
      %v2941 = vpack.c.b16 %v2429, %v2421
      %v2942 = vpack.c.b16 %v2430, %v2422
      %v2943 = vpack.c.b16 %v2431, %v2423
      %v2944 = vpack.c.b16 %v2432, %v2424
      %v2945 = vpack.c.b16 %v2433, %v2425
      %v2946 = vpack.c.b16 %v2434, %v2426
      %v2947 = vpack.c.b16 %v2435, %v2427
      %v2948 = vpack.c.b16 %v2436, %v2428
      %3461 = vmatprep.subr.bf16.mxu0 %v2438
      %3462 = vmatpush1.bf16.msra.mxu0 %v2437
      %3463 = vmatprep.subr.bf16.mxu0 %v2446
      %3464 = vmatpush1.bf16.msra.mxu0 %v2445
      %3465 = vmatprep.subr.bf16.mxu0 %v2454
      %3466 = vmatpush1.bf16.msra.mxu0 %v2453
      %3467 = vmatprep.subr.bf16.mxu0 %v2462
      %3468 = vmatpush1.bf16.msra.mxu0 %v2461
      %3469 = vmatprep.subr.bf16.mxu0 %v2470
      %3470 = vmatpush1.bf16.msra.mxu0 %v2469
      %3471 = vmatprep.subr.bf16.mxu0 %v2478
      %3472 = vmatpush1.bf16.msra.mxu0 %v2477
      %3473 = vmatprep.subr.bf16.mxu0 %v2486
      %3474 = vmatpush1.bf16.msra.mxu0 %v2485
      %3475 = vmatprep.subr.bf16.mxu0 %v2494
      %3476 = vmatpush1.bf16.msra.mxu0 %v2493
      %3477 = vmatprep.subr.bf16.mxu0 %v2502
      %3478 = vmatpush1.bf16.msra.mxu0 %v2501
      %3479 = vmatprep.subr.bf16.mxu0 %v2510
      %3480 = vmatpush1.bf16.msra.mxu0 %v2509
      %3481 = vmatprep.subr.bf16.mxu0 %v2518
      %3482 = vmatpush1.bf16.msra.mxu0 %v2517
      %3483 = vmatprep.subr.bf16.mxu0 %v2526
      %3484 = vmatpush1.bf16.msra.mxu0 %v2525
      %3485 = vmatprep.subr.bf16.mxu0 %v2534
      %3486 = vmatpush1.bf16.msra.mxu0 %v2533
      %3487 = vmatprep.subr.bf16.mxu0 %v2542
      %3488 = vmatpush1.bf16.msra.mxu0 %v2541
      %3489 = vmatprep.subr.bf16.mxu0 %v2550
      %3490 = vmatpush1.bf16.msra.mxu0 %v2549
      %3491 = vmatprep.subr.bf16.mxu0 %v2558
      %3492 = vmatpush1.bf16.msra.mxu0 %v2557
      %3493 = vmatprep.mubr.bf16.mxu0 %v886
      %3494 = vmatmul.mubr.bf16.gmra.mrb[0].mxu0 %v885
      %v3495 = vpop.f32.mrb[0].mxu0
      %v3496 = vadd.f32 %v836, %v3495
      %v3497 = vpop.f32.mrb[0].mxu0
      %v3498 = vadd.f32 %v840, %v3497
      %v3499 = vpop.f32.mrb[0].mxu0
      %v3500 = vpop.f32.mrb[0].mxu0
      %3501 = vdwg.mxu0
      %3502 = vmatprep.subr.bf16.mxu0 %v2566
      %3503 = vmatpush1.bf16.msra.mxu0 %v2565
      %3504 = vmatprep.subr.bf16.mxu0 %v2574
      %3505 = vmatpush1.bf16.msra.mxu0 %v2573
      %3506 = vmatprep.subr.bf16.mxu0 %v2582
      %3507 = vmatpush1.bf16.msra.mxu0 %v2581
      %3508 = vmatprep.subr.bf16.mxu0 %v2590
      %3509 = vmatpush1.bf16.msra.mxu0 %v2589
      %3510 = vmatprep.subr.bf16.mxu0 %v2598
      %3511 = vmatpush1.bf16.msra.mxu0 %v2597
      %3512 = vmatprep.subr.bf16.mxu0 %v2606
      %3513 = vmatpush1.bf16.msra.mxu0 %v2605
      %3514 = vmatprep.subr.bf16.mxu0 %v2614
      %3515 = vmatpush1.bf16.msra.mxu0 %v2613
      %3516 = vmatprep.subr.bf16.mxu0 %v2622
      %3517 = vmatpush1.bf16.msra.mxu0 %v2621
      %3518 = vmatprep.subr.bf16.mxu0 %v2630
      %3519 = vmatpush1.bf16.msra.mxu0 %v2629
      %3520 = vmatprep.subr.bf16.mxu0 %v2638
      %3521 = vmatpush1.bf16.msra.mxu0 %v2637
      %3522 = vmatprep.subr.bf16.mxu0 %v2646
      %3523 = vmatpush1.bf16.msra.mxu0 %v2645
      %3524 = vmatprep.subr.bf16.mxu0 %v2654
      %3525 = vmatpush1.bf16.msra.mxu0 %v2653
      %3526 = vmatprep.subr.bf16.mxu0 %v2662
      %3527 = vmatpush1.bf16.msra.mxu0 %v2661
      %3528 = vmatprep.subr.bf16.mxu0 %v2670
      %3529 = vmatpush1.bf16.msra.mxu0 %v2669
      %3530 = vmatprep.subr.bf16.mxu0 %v2678
      %3531 = vmatpush1.bf16.msra.mxu0 %v2677
      %3532 = vmatprep.subr.bf16.mxu0 %v2686
      %3533 = vmatpush1.bf16.msra.mxu0 %v2685
      %3534 = vmatprep.mubr.bf16.mxu0 %v888
      %3535 = vmatmul.mubr.bf16.gmra.mrb[0].mxu0 %v887
      %v3536 = vpop.f32.mrb[0].mxu0
      %v3537 = vadd.f32 %v3496, %v3536
      %v3538 = vpop.f32.mrb[0].mxu0
      %v3539 = vadd.f32 %v3498, %v3538
      %v3540 = vpop.f32.mrb[0].mxu0
      %v3541 = vpop.f32.mrb[0].mxu0
      %3542 = vdwg.mxu0
      %3543 = vmatprep.subr.bf16.mxu0 %v2694
      %3544 = vmatpush1.bf16.msra.mxu0 %v2693
      %3545 = vmatprep.subr.bf16.mxu0 %v2702
      %3546 = vmatpush1.bf16.msra.mxu0 %v2701
      %3547 = vmatprep.subr.bf16.mxu0 %v2710
      %3548 = vmatpush1.bf16.msra.mxu0 %v2709
      %3549 = vmatprep.subr.bf16.mxu0 %v2718
      %3550 = vmatpush1.bf16.msra.mxu0 %v2717
      %3551 = vmatprep.subr.bf16.mxu0 %v2726
      %3552 = vmatpush1.bf16.msra.mxu0 %v2725
      %3553 = vmatprep.subr.bf16.mxu0 %v2734
      %3554 = vmatpush1.bf16.msra.mxu0 %v2733
      %3555 = vmatprep.subr.bf16.mxu0 %v2742
      %3556 = vmatpush1.bf16.msra.mxu0 %v2741
      %3557 = vmatprep.subr.bf16.mxu0 %v2750
      %3558 = vmatpush1.bf16.msra.mxu0 %v2749
      %3559 = vmatprep.subr.bf16.mxu0 %v2758
      %3560 = vmatpush1.bf16.msra.mxu0 %v2757
      %3561 = vmatprep.subr.bf16.mxu0 %v2766
      %3562 = vmatpush1.bf16.msra.mxu0 %v2765
      %3563 = vmatprep.subr.bf16.mxu0 %v2774
      %3564 = vmatpush1.bf16.msra.mxu0 %v2773
      %3565 = vmatprep.subr.bf16.mxu0 %v2782
      %3566 = vmatpush1.bf16.msra.mxu0 %v2781
      %3567 = vmatprep.subr.bf16.mxu0 %v2790
      %3568 = vmatpush1.bf16.msra.mxu0 %v2789
      %3569 = vmatprep.subr.bf16.mxu0 %v2798
      %3570 = vmatpush1.bf16.msra.mxu0 %v2797
      %3571 = vmatprep.subr.bf16.mxu0 %v2806
      %3572 = vmatpush1.bf16.msra.mxu0 %v2805
      %3573 = vmatprep.subr.bf16.mxu0 %v2814
      %3574 = vmatpush1.bf16.msra.mxu0 %v2813
      %3575 = vmatprep.mubr.bf16.mxu0 %v890
      %3576 = vmatmul.mubr.bf16.gmra.mrb[0].mxu0 %v889
      %v3577 = vpop.f32.mrb[0].mxu0
      %v3578 = vadd.f32 %v3537, %v3577
      %v3579 = vpop.f32.mrb[0].mxu0
      %v3580 = vadd.f32 %v3539, %v3579
      %v3581 = vpop.f32.mrb[0].mxu0
      %v3582 = vpop.f32.mrb[0].mxu0
      %3583 = vdwg.mxu0
      %3584 = vmatprep.subr.bf16.mxu0 %v2822
      %3585 = vmatpush1.bf16.msra.mxu0 %v2821
      %3586 = vmatprep.subr.bf16.mxu0 %v2830
      %3587 = vmatpush1.bf16.msra.mxu0 %v2829
      %3588 = vmatprep.subr.bf16.mxu0 %v2838
      %3589 = vmatpush1.bf16.msra.mxu0 %v2837
      %3590 = vmatprep.subr.bf16.mxu0 %v2846
      %3591 = vmatpush1.bf16.msra.mxu0 %v2845
      %3592 = vmatprep.subr.bf16.mxu0 %v2854
      %3593 = vmatpush1.bf16.msra.mxu0 %v2853
      %3594 = vmatprep.subr.bf16.mxu0 %v2862
      %3595 = vmatpush1.bf16.msra.mxu0 %v2861
      %3596 = vmatprep.subr.bf16.mxu0 %v2870
      %3597 = vmatpush1.bf16.msra.mxu0 %v2869
      %3598 = vmatprep.subr.bf16.mxu0 %v2878
      %3599 = vmatpush1.bf16.msra.mxu0 %v2877
      %3600 = vmatprep.subr.bf16.mxu0 %v2886
      %3601 = vmatpush1.bf16.msra.mxu0 %v2885
      %3602 = vmatprep.subr.bf16.mxu0 %v2894
      %3603 = vmatpush1.bf16.msra.mxu0 %v2893
      %3604 = vmatprep.subr.bf16.mxu0 %v2902
      %3605 = vmatpush1.bf16.msra.mxu0 %v2901
      %3606 = vmatprep.subr.bf16.mxu0 %v2910
      %3607 = vmatpush1.bf16.msra.mxu0 %v2909
      %3608 = vmatprep.subr.bf16.mxu0 %v2918
      %3609 = vmatpush1.bf16.msra.mxu0 %v2917
      %3610 = vmatprep.subr.bf16.mxu0 %v2926
      %3611 = vmatpush1.bf16.msra.mxu0 %v2925
      %3612 = vmatprep.subr.bf16.mxu0 %v2934
      %3613 = vmatpush1.bf16.msra.mxu0 %v2933
      %3614 = vmatprep.subr.bf16.mxu0 %v2942
      %3615 = vmatpush1.bf16.msra.mxu0 %v2941
      %3616 = vmatprep.mubr.bf16.mxu0 %v892
      %3617 = vmatmul.mubr.bf16.gmra.mrb[0].mxu0 %v891
      %v3618 = vpop.f32.mrb[0].mxu0
      %v3619 = vadd.f32 %v3578, %v3618
      %v3620 = vpop.f32.mrb[0].mxu0
      %v3621 = vadd.f32 %v3580, %v3620
      %v3622 = vpop.f32.mrb[0].mxu0
      %v3623 = vpop.f32.mrb[0].mxu0
      %3624 = vdwg.mxu0
      %3625 = vmatprep.subr.bf16.mxu0 %v2440
      %3626 = vmatpush1.bf16.msra.mxu0 %v2439
      %3627 = vmatprep.subr.bf16.mxu0 %v2448
      %3628 = vmatpush1.bf16.msra.mxu0 %v2447
      %3629 = vmatprep.subr.bf16.mxu0 %v2456
      %3630 = vmatpush1.bf16.msra.mxu0 %v2455
      %3631 = vmatprep.subr.bf16.mxu0 %v2464
      %3632 = vmatpush1.bf16.msra.mxu0 %v2463
      %3633 = vmatprep.subr.bf16.mxu0 %v2472
      %3634 = vmatpush1.bf16.msra.mxu0 %v2471
      %3635 = vmatprep.subr.bf16.mxu0 %v2480
      %3636 = vmatpush1.bf16.msra.mxu0 %v2479
      %3637 = vmatprep.subr.bf16.mxu0 %v2488
      %3638 = vmatpush1.bf16.msra.mxu0 %v2487
      %3639 = vmatprep.subr.bf16.mxu0 %v2496
      %3640 = vmatpush1.bf16.msra.mxu0 %v2495
      %3641 = vmatprep.subr.bf16.mxu0 %v2504
      %3642 = vmatpush1.bf16.msra.mxu0 %v2503
      %3643 = vmatprep.subr.bf16.mxu0 %v2512
      %3644 = vmatpush1.bf16.msra.mxu0 %v2511
      %3645 = vmatprep.subr.bf16.mxu0 %v2520
      %3646 = vmatpush1.bf16.msra.mxu0 %v2519
      %3647 = vmatprep.subr.bf16.mxu0 %v2528
      %3648 = vmatpush1.bf16.msra.mxu0 %v2527
      %3649 = vmatprep.subr.bf16.mxu0 %v2536
      %3650 = vmatpush1.bf16.msra.mxu0 %v2535
      %3651 = vmatprep.subr.bf16.mxu0 %v2544
      %3652 = vmatpush1.bf16.msra.mxu0 %v2543
      %3653 = vmatprep.subr.bf16.mxu0 %v2552
      %3654 = vmatpush1.bf16.msra.mxu0 %v2551
      %3655 = vmatprep.subr.bf16.mxu0 %v2560
      %3656 = vmatpush1.bf16.msra.mxu0 %v2559
      %3657 = vmatprep.mubr.bf16.mxu0 %v886
      %3658 = vmatmul.mubr.bf16.gmra.mrb[0].mxu0 %v885
      %v3659 = vpop.f32.mrb[0].mxu0
      %v3660 = vadd.f32 %v844, %v3659
      %v3661 = vpop.f32.mrb[0].mxu0
      %v3662 = vadd.f32 %v848, %v3661
      %v3663 = vpop.f32.mrb[0].mxu0
      %v3664 = vpop.f32.mrb[0].mxu0
      %3665 = vdwg.mxu0
      %3666 = vmatprep.subr.bf16.mxu0 %v2568
      %3667 = vmatpush1.bf16.msra.mxu0 %v2567
      %3668 = vmatprep.subr.bf16.mxu0 %v2576
      %3669 = vmatpush1.bf16.msra.mxu0 %v2575
      %3670 = vmatprep.subr.bf16.mxu0 %v2584
      %3671 = vmatpush1.bf16.msra.mxu0 %v2583
      %3672 = vmatprep.subr.bf16.mxu0 %v2592
      %3673 = vmatpush1.bf16.msra.mxu0 %v2591
      %3674 = vmatprep.subr.bf16.mxu0 %v2600
      %3675 = vmatpush1.bf16.msra.mxu0 %v2599
      %3676 = vmatprep.subr.bf16.mxu0 %v2608
      %3677 = vmatpush1.bf16.msra.mxu0 %v2607
      %3678 = vmatprep.subr.bf16.mxu0 %v2616
      %3679 = vmatpush1.bf16.msra.mxu0 %v2615
      %3680 = vmatprep.subr.bf16.mxu0 %v2624
      %3681 = vmatpush1.bf16.msra.mxu0 %v2623
      %3682 = vmatprep.subr.bf16.mxu0 %v2632
      %3683 = vmatpush1.bf16.msra.mxu0 %v2631
      %3684 = vmatprep.subr.bf16.mxu0 %v2640
      %3685 = vmatpush1.bf16.msra.mxu0 %v2639
      %3686 = vmatprep.subr.bf16.mxu0 %v2648
      %3687 = vmatpush1.bf16.msra.mxu0 %v2647
      %3688 = vmatprep.subr.bf16.mxu0 %v2656
      %3689 = vmatpush1.bf16.msra.mxu0 %v2655
      %3690 = vmatprep.subr.bf16.mxu0 %v2664
      %3691 = vmatpush1.bf16.msra.mxu0 %v2663
      %3692 = vmatprep.subr.bf16.mxu0 %v2672
      %3693 = vmatpush1.bf16.msra.mxu0 %v2671
      %3694 = vmatprep.subr.bf16.mxu0 %v2680
      %3695 = vmatpush1.bf16.msra.mxu0 %v2679
      %3696 = vmatprep.subr.bf16.mxu0 %v2688
      %3697 = vmatpush1.bf16.msra.mxu0 %v2687
      %3698 = vmatprep.mubr.bf16.mxu0 %v888
      %3699 = vmatmul.mubr.bf16.gmra.mrb[0].mxu0 %v887
      %v3700 = vpop.f32.mrb[0].mxu0
      %v3701 = vadd.f32 %v3660, %v3700
      %v3702 = vpop.f32.mrb[0].mxu0
      %v3703 = vadd.f32 %v3662, %v3702
      %v3704 = vpop.f32.mrb[0].mxu0
      %v3705 = vpop.f32.mrb[0].mxu0
      %3706 = vdwg.mxu0
      %3707 = vmatprep.subr.bf16.mxu0 %v2696
      %3708 = vmatpush1.bf16.msra.mxu0 %v2695
      %3709 = vmatprep.subr.bf16.mxu0 %v2704
      %3710 = vmatpush1.bf16.msra.mxu0 %v2703
      %3711 = vmatprep.subr.bf16.mxu0 %v2712
      %3712 = vmatpush1.bf16.msra.mxu0 %v2711
      %3713 = vmatprep.subr.bf16.mxu0 %v2720
      %3714 = vmatpush1.bf16.msra.mxu0 %v2719
      %3715 = vmatprep.subr.bf16.mxu0 %v2728
      %3716 = vmatpush1.bf16.msra.mxu0 %v2727
      %3717 = vmatprep.subr.bf16.mxu0 %v2736
      %3718 = vmatpush1.bf16.msra.mxu0 %v2735
      %3719 = vmatprep.subr.bf16.mxu0 %v2744
      %3720 = vmatpush1.bf16.msra.mxu0 %v2743
      %3721 = vmatprep.subr.bf16.mxu0 %v2752
      %3722 = vmatpush1.bf16.msra.mxu0 %v2751
      %3723 = vmatprep.subr.bf16.mxu0 %v2760
      %3724 = vmatpush1.bf16.msra.mxu0 %v2759
      %3725 = vmatprep.subr.bf16.mxu0 %v2768
      %3726 = vmatpush1.bf16.msra.mxu0 %v2767
      %3727 = vmatprep.subr.bf16.mxu0 %v2776
      %3728 = vmatpush1.bf16.msra.mxu0 %v2775
      %3729 = vmatprep.subr.bf16.mxu0 %v2784
      %3730 = vmatpush1.bf16.msra.mxu0 %v2783
      %3731 = vmatprep.subr.bf16.mxu0 %v2792
      %3732 = vmatpush1.bf16.msra.mxu0 %v2791
      %3733 = vmatprep.subr.bf16.mxu0 %v2800
      %3734 = vmatpush1.bf16.msra.mxu0 %v2799
      %3735 = vmatprep.subr.bf16.mxu0 %v2808
      %3736 = vmatpush1.bf16.msra.mxu0 %v2807
      %3737 = vmatprep.subr.bf16.mxu0 %v2816
      %3738 = vmatpush1.bf16.msra.mxu0 %v2815
      %3739 = vmatprep.mubr.bf16.mxu0 %v890
      %3740 = vmatmul.mubr.bf16.gmra.mrb[0].mxu0 %v889
      %v3741 = vpop.f32.mrb[0].mxu0
      %v3742 = vadd.f32 %v3701, %v3741
      %v3743 = vpop.f32.mrb[0].mxu0
      %v3744 = vadd.f32 %v3703, %v3743
      %v3745 = vpop.f32.mrb[0].mxu0
      %v3746 = vpop.f32.mrb[0].mxu0
      %3747 = vdwg.mxu0
      %3748 = vmatprep.subr.bf16.mxu0 %v2824
      %3749 = vmatpush1.bf16.msra.mxu0 %v2823
      %3750 = vmatprep.subr.bf16.mxu0 %v2832
      %3751 = vmatpush1.bf16.msra.mxu0 %v2831
      %3752 = vmatprep.subr.bf16.mxu0 %v2840
      %3753 = vmatpush1.bf16.msra.mxu0 %v2839
      %3754 = vmatprep.subr.bf16.mxu0 %v2848
      %3755 = vmatpush1.bf16.msra.mxu0 %v2847
      %3756 = vmatprep.subr.bf16.mxu0 %v2856
      %3757 = vmatpush1.bf16.msra.mxu0 %v2855
      %3758 = vmatprep.subr.bf16.mxu0 %v2864
      %3759 = vmatpush1.bf16.msra.mxu0 %v2863
      %3760 = vmatprep.subr.bf16.mxu0 %v2872
      %3761 = vmatpush1.bf16.msra.mxu0 %v2871
      %3762 = vmatprep.subr.bf16.mxu0 %v2880
      %3763 = vmatpush1.bf16.msra.mxu0 %v2879
      %3764 = vmatprep.subr.bf16.mxu0 %v2888
      %3765 = vmatpush1.bf16.msra.mxu0 %v2887
      %3766 = vmatprep.subr.bf16.mxu0 %v2896
      %3767 = vmatpush1.bf16.msra.mxu0 %v2895
      %3768 = vmatprep.subr.bf16.mxu0 %v2904
      %3769 = vmatpush1.bf16.msra.mxu0 %v2903
      %3770 = vmatprep.subr.bf16.mxu0 %v2912
      %3771 = vmatpush1.bf16.msra.mxu0 %v2911
      %3772 = vmatprep.subr.bf16.mxu0 %v2920
      %3773 = vmatpush1.bf16.msra.mxu0 %v2919
      %3774 = vmatprep.subr.bf16.mxu0 %v2928
      %3775 = vmatpush1.bf16.msra.mxu0 %v2927
      %3776 = vmatprep.subr.bf16.mxu0 %v2936
      %3777 = vmatpush1.bf16.msra.mxu0 %v2935
      %3778 = vmatprep.subr.bf16.mxu0 %v2944
      %3779 = vmatpush1.bf16.msra.mxu0 %v2943
      %3780 = vmatprep.mubr.bf16.mxu0 %v892
      %3781 = vmatmul.mubr.bf16.gmra.mrb[0].mxu0 %v891
      %v3782 = vpop.f32.mrb[0].mxu0
      %v3783 = vadd.f32 %v3742, %v3782
      %v3784 = vpop.f32.mrb[0].mxu0
      %v3785 = vadd.f32 %v3744, %v3784
      %v3786 = vpop.f32.mrb[0].mxu0
      %v3787 = vpop.f32.mrb[0].mxu0
      %3788 = vdwg.mxu0
      %3789 = vmatprep.subr.bf16.mxu0 %v2442
      %3790 = vmatpush1.bf16.msra.mxu0 %v2441
      %3791 = vmatprep.subr.bf16.mxu0 %v2450
      %3792 = vmatpush1.bf16.msra.mxu0 %v2449
      %3793 = vmatprep.subr.bf16.mxu0 %v2458
      %3794 = vmatpush1.bf16.msra.mxu0 %v2457
      %3795 = vmatprep.subr.bf16.mxu0 %v2466
      %3796 = vmatpush1.bf16.msra.mxu0 %v2465
      %3797 = vmatprep.subr.bf16.mxu0 %v2474
      %3798 = vmatpush1.bf16.msra.mxu0 %v2473
      %3799 = vmatprep.subr.bf16.mxu0 %v2482
      %3800 = vmatpush1.bf16.msra.mxu0 %v2481
      %3801 = vmatprep.subr.bf16.mxu0 %v2490
      %3802 = vmatpush1.bf16.msra.mxu0 %v2489
      %3803 = vmatprep.subr.bf16.mxu0 %v2498
      %3804 = vmatpush1.bf16.msra.mxu0 %v2497
      %3805 = vmatprep.subr.bf16.mxu0 %v2506
      %3806 = vmatpush1.bf16.msra.mxu0 %v2505
      %3807 = vmatprep.subr.bf16.mxu0 %v2514
      %3808 = vmatpush1.bf16.msra.mxu0 %v2513
      %3809 = vmatprep.subr.bf16.mxu0 %v2522
      %3810 = vmatpush1.bf16.msra.mxu0 %v2521
      %3811 = vmatprep.subr.bf16.mxu0 %v2530
      %3812 = vmatpush1.bf16.msra.mxu0 %v2529
      %3813 = vmatprep.subr.bf16.mxu0 %v2538
      %3814 = vmatpush1.bf16.msra.mxu0 %v2537
      %3815 = vmatprep.subr.bf16.mxu0 %v2546
      %3816 = vmatpush1.bf16.msra.mxu0 %v2545
      %3817 = vmatprep.subr.bf16.mxu0 %v2554
      %3818 = vmatpush1.bf16.msra.mxu0 %v2553
      %3819 = vmatprep.subr.bf16.mxu0 %v2562
      %3820 = vmatpush1.bf16.msra.mxu0 %v2561
      %3821 = vmatprep.mubr.bf16.mxu0 %v886
      %3822 = vmatmul.mubr.bf16.gmra.mrb[0].mxu0 %v885
      %v3823 = vpop.f32.mrb[0].mxu0
      %v3824 = vadd.f32 %v852, %v3823
      %v3825 = vpop.f32.mrb[0].mxu0
      %v3826 = vadd.f32 %v856, %v3825
      %v3827 = vpop.f32.mrb[0].mxu0
      %v3828 = vpop.f32.mrb[0].mxu0
      %3829 = vdwg.mxu0
      %3830 = vmatprep.subr.bf16.mxu0 %v2570
      %3831 = vmatpush1.bf16.msra.mxu0 %v2569
      %3832 = vmatprep.subr.bf16.mxu0 %v2578
      %3833 = vmatpush1.bf16.msra.mxu0 %v2577
      %3834 = vmatprep.subr.bf16.mxu0 %v2586
      %3835 = vmatpush1.bf16.msra.mxu0 %v2585
      %3836 = vmatprep.subr.bf16.mxu0 %v2594
      %3837 = vmatpush1.bf16.msra.mxu0 %v2593
      %3838 = vmatprep.subr.bf16.mxu0 %v2602
      %3839 = vmatpush1.bf16.msra.mxu0 %v2601
      %3840 = vmatprep.subr.bf16.mxu0 %v2610
      %3841 = vmatpush1.bf16.msra.mxu0 %v2609
      %3842 = vmatprep.subr.bf16.mxu0 %v2618
      %3843 = vmatpush1.bf16.msra.mxu0 %v2617
      %3844 = vmatprep.subr.bf16.mxu0 %v2626
      %3845 = vmatpush1.bf16.msra.mxu0 %v2625
      %3846 = vmatprep.subr.bf16.mxu0 %v2634
      %3847 = vmatpush1.bf16.msra.mxu0 %v2633
      %3848 = vmatprep.subr.bf16.mxu0 %v2642
      %3849 = vmatpush1.bf16.msra.mxu0 %v2641
      %3850 = vmatprep.subr.bf16.mxu0 %v2650
      %3851 = vmatpush1.bf16.msra.mxu0 %v2649
      %3852 = vmatprep.subr.bf16.mxu0 %v2658
      %3853 = vmatpush1.bf16.msra.mxu0 %v2657
      %3854 = vmatprep.subr.bf16.mxu0 %v2666
      %3855 = vmatpush1.bf16.msra.mxu0 %v2665
      %3856 = vmatprep.subr.bf16.mxu0 %v2674
      %3857 = vmatpush1.bf16.msra.mxu0 %v2673
      %3858 = vmatprep.subr.bf16.mxu0 %v2682
      %3859 = vmatpush1.bf16.msra.mxu0 %v2681
      %3860 = vmatprep.subr.bf16.mxu0 %v2690
      %3861 = vmatpush1.bf16.msra.mxu0 %v2689
      %3862 = vmatprep.mubr.bf16.mxu0 %v888
      %3863 = vmatmul.mubr.bf16.gmra.mrb[0].mxu0 %v887
      %v3864 = vpop.f32.mrb[0].mxu0
      %v3865 = vadd.f32 %v3824, %v3864
      %v3866 = vpop.f32.mrb[0].mxu0
      %v3867 = vadd.f32 %v3826, %v3866
      %v3868 = vpop.f32.mrb[0].mxu0
      %v3869 = vpop.f32.mrb[0].mxu0
      %3870 = vdwg.mxu0
      %3871 = vmatprep.subr.bf16.mxu0 %v2698
      %3872 = vmatpush1.bf16.msra.mxu0 %v2697
      %3873 = vmatprep.subr.bf16.mxu0 %v2706
      %3874 = vmatpush1.bf16.msra.mxu0 %v2705
      %3875 = vmatprep.subr.bf16.mxu0 %v2714
      %3876 = vmatpush1.bf16.msra.mxu0 %v2713
      %3877 = vmatprep.subr.bf16.mxu0 %v2722
      %3878 = vmatpush1.bf16.msra.mxu0 %v2721
      %3879 = vmatprep.subr.bf16.mxu0 %v2730
      %3880 = vmatpush1.bf16.msra.mxu0 %v2729
      %3881 = vmatprep.subr.bf16.mxu0 %v2738
      %3882 = vmatpush1.bf16.msra.mxu0 %v2737
      %3883 = vmatprep.subr.bf16.mxu0 %v2746
      %3884 = vmatpush1.bf16.msra.mxu0 %v2745
      %3885 = vmatprep.subr.bf16.mxu0 %v2754
      %3886 = vmatpush1.bf16.msra.mxu0 %v2753
      %3887 = vmatprep.subr.bf16.mxu0 %v2762
      %3888 = vmatpush1.bf16.msra.mxu0 %v2761
      %3889 = vmatprep.subr.bf16.mxu0 %v2770
      %3890 = vmatpush1.bf16.msra.mxu0 %v2769
      %3891 = vmatprep.subr.bf16.mxu0 %v2778
      %3892 = vmatpush1.bf16.msra.mxu0 %v2777
      %3893 = vmatprep.subr.bf16.mxu0 %v2786
      %3894 = vmatpush1.bf16.msra.mxu0 %v2785
      %3895 = vmatprep.subr.bf16.mxu0 %v2794
      %3896 = vmatpush1.bf16.msra.mxu0 %v2793
      %3897 = vmatprep.subr.bf16.mxu0 %v2802
      %3898 = vmatpush1.bf16.msra.mxu0 %v2801
      %3899 = vmatprep.subr.bf16.mxu0 %v2810
      %3900 = vmatpush1.bf16.msra.mxu0 %v2809
      %3901 = vmatprep.subr.bf16.mxu0 %v2818
      %3902 = vmatpush1.bf16.msra.mxu0 %v2817
      %3903 = vmatprep.mubr.bf16.mxu0 %v890
      %3904 = vmatmul.mubr.bf16.gmra.mrb[0].mxu0 %v889
      %v3905 = vpop.f32.mrb[0].mxu0
      %v3906 = vadd.f32 %v3865, %v3905
      %v3907 = vpop.f32.mrb[0].mxu0
      %v3908 = vadd.f32 %v3867, %v3907
      %v3909 = vpop.f32.mrb[0].mxu0
      %v3910 = vpop.f32.mrb[0].mxu0
      %3911 = vdwg.mxu0
      %3912 = vmatprep.subr.bf16.mxu0 %v2826
      %3913 = vmatpush1.bf16.msra.mxu0 %v2825
      %3914 = vmatprep.subr.bf16.mxu0 %v2834
      %3915 = vmatpush1.bf16.msra.mxu0 %v2833
      %3916 = vmatprep.subr.bf16.mxu0 %v2842
      %3917 = vmatpush1.bf16.msra.mxu0 %v2841
      %3918 = vmatprep.subr.bf16.mxu0 %v2850
      %3919 = vmatpush1.bf16.msra.mxu0 %v2849
      %3920 = vmatprep.subr.bf16.mxu0 %v2858
      %3921 = vmatpush1.bf16.msra.mxu0 %v2857
      %3922 = vmatprep.subr.bf16.mxu0 %v2866
      %3923 = vmatpush1.bf16.msra.mxu0 %v2865
      %3924 = vmatprep.subr.bf16.mxu0 %v2874
      %3925 = vmatpush1.bf16.msra.mxu0 %v2873
      %3926 = vmatprep.subr.bf16.mxu0 %v2882
      %3927 = vmatpush1.bf16.msra.mxu0 %v2881
      %3928 = vmatprep.subr.bf16.mxu0 %v2890
      %3929 = vmatpush1.bf16.msra.mxu0 %v2889
      %3930 = vmatprep.subr.bf16.mxu0 %v2898
      %3931 = vmatpush1.bf16.msra.mxu0 %v2897
      %3932 = vmatprep.subr.bf16.mxu0 %v2906
      %3933 = vmatpush1.bf16.msra.mxu0 %v2905
      %3934 = vmatprep.subr.bf16.mxu0 %v2914
      %3935 = vmatpush1.bf16.msra.mxu0 %v2913
      %3936 = vmatprep.subr.bf16.mxu0 %v2922
      %3937 = vmatpush1.bf16.msra.mxu0 %v2921
      %3938 = vmatprep.subr.bf16.mxu0 %v2930
      %3939 = vmatpush1.bf16.msra.mxu0 %v2929
      %3940 = vmatprep.subr.bf16.mxu0 %v2938
      %3941 = vmatpush1.bf16.msra.mxu0 %v2937
      %3942 = vmatprep.subr.bf16.mxu0 %v2946
      %3943 = vmatpush1.bf16.msra.mxu0 %v2945
      %3944 = vmatprep.mubr.bf16.mxu0 %v892
      %3945 = vmatmul.mubr.bf16.gmra.mrb[0].mxu0 %v891
      %v3946 = vpop.f32.mrb[0].mxu0
      %v3947 = vadd.f32 %v3906, %v3946
      %v3948 = vpop.f32.mrb[0].mxu0
      %v3949 = vadd.f32 %v3908, %v3948
      %v3950 = vpop.f32.mrb[0].mxu0
      %v3951 = vpop.f32.mrb[0].mxu0
      %3952 = vdwg.mxu0
      %3953 = vmatprep.subr.bf16.mxu0 %v2444
      %3954 = vmatpush1.bf16.msra.mxu0 %v2443
      %3955 = vmatprep.subr.bf16.mxu0 %v2452
      %3956 = vmatpush1.bf16.msra.mxu0 %v2451
      %3957 = vmatprep.subr.bf16.mxu0 %v2460
      %3958 = vmatpush1.bf16.msra.mxu0 %v2459
      %3959 = vmatprep.subr.bf16.mxu0 %v2468
      %3960 = vmatpush1.bf16.msra.mxu0 %v2467
      %3961 = vmatprep.subr.bf16.mxu0 %v2476
      %3962 = vmatpush1.bf16.msra.mxu0 %v2475
      %3963 = vmatprep.subr.bf16.mxu0 %v2484
      %3964 = vmatpush1.bf16.msra.mxu0 %v2483
      %3965 = vmatprep.subr.bf16.mxu0 %v2492
      %3966 = vmatpush1.bf16.msra.mxu0 %v2491
      %3967 = vmatprep.subr.bf16.mxu0 %v2500
      %3968 = vmatpush1.bf16.msra.mxu0 %v2499
      %3969 = vmatprep.subr.bf16.mxu0 %v2508
      %3970 = vmatpush1.bf16.msra.mxu0 %v2507
      %3971 = vmatprep.subr.bf16.mxu0 %v2516
      %3972 = vmatpush1.bf16.msra.mxu0 %v2515
      %3973 = vmatprep.subr.bf16.mxu0 %v2524
      %3974 = vmatpush1.bf16.msra.mxu0 %v2523
      %3975 = vmatprep.subr.bf16.mxu0 %v2532
      %3976 = vmatpush1.bf16.msra.mxu0 %v2531
      %3977 = vmatprep.subr.bf16.mxu0 %v2540
      %3978 = vmatpush1.bf16.msra.mxu0 %v2539
      %3979 = vmatprep.subr.bf16.mxu0 %v2548
      %3980 = vmatpush1.bf16.msra.mxu0 %v2547
      %3981 = vmatprep.subr.bf16.mxu0 %v2556
      %3982 = vmatpush1.bf16.msra.mxu0 %v2555
      %3983 = vmatprep.subr.bf16.mxu0 %v2564
      %3984 = vmatpush1.bf16.msra.mxu0 %v2563
      %3985 = vmatprep.mubr.bf16.mxu0 %v886
      %3986 = vmatmul.mubr.bf16.gmra.mrb[0].mxu0 %v885
      %v3987 = vpop.f32.mrb[0].mxu0
      %v3988 = vadd.f32 %v860, %v3987
      %v3989 = vpop.f32.mrb[0].mxu0
      %v3990 = vadd.f32 %v864, %v3989
      %v3991 = vpop.f32.mrb[0].mxu0
      %v3992 = vpop.f32.mrb[0].mxu0
      %3993 = vdwg.mxu0
      %3994 = vmatprep.subr.bf16.mxu0 %v2572
      %3995 = vmatpush1.bf16.msra.mxu0 %v2571
      %3996 = vmatprep.subr.bf16.mxu0 %v2580
      %3997 = vmatpush1.bf16.msra.mxu0 %v2579
      %3998 = vmatprep.subr.bf16.mxu0 %v2588
      %3999 = vmatpush1.bf16.msra.mxu0 %v2587
      %4000 = vmatprep.subr.bf16.mxu0 %v2596
      %4001 = vmatpush1.bf16.msra.mxu0 %v2595
      %4002 = vmatprep.subr.bf16.mxu0 %v2604
      %4003 = vmatpush1.bf16.msra.mxu0 %v2603
      %4004 = vmatprep.subr.bf16.mxu0 %v2612
      %4005 = vmatpush1.bf16.msra.mxu0 %v2611
      %4006 = vmatprep.subr.bf16.mxu0 %v2620
      %4007 = vmatpush1.bf16.msra.mxu0 %v2619
      %4008 = vmatprep.subr.bf16.mxu0 %v2628
      %4009 = vmatpush1.bf16.msra.mxu0 %v2627
      %4010 = vmatprep.subr.bf16.mxu0 %v2636
      %4011 = vmatpush1.bf16.msra.mxu0 %v2635
      %4012 = vmatprep.subr.bf16.mxu0 %v2644
      %4013 = vmatpush1.bf16.msra.mxu0 %v2643
      %4014 = vmatprep.subr.bf16.mxu0 %v2652
      %4015 = vmatpush1.bf16.msra.mxu0 %v2651
      %4016 = vmatprep.subr.bf16.mxu0 %v2660
      %4017 = vmatpush1.bf16.msra.mxu0 %v2659
      %4018 = vmatprep.subr.bf16.mxu0 %v2668
      %4019 = vmatpush1.bf16.msra.mxu0 %v2667
      %4020 = vmatprep.subr.bf16.mxu0 %v2676
      %4021 = vmatpush1.bf16.msra.mxu0 %v2675
      %4022 = vmatprep.subr.bf16.mxu0 %v2684
      %4023 = vmatpush1.bf16.msra.mxu0 %v2683
      %4024 = vmatprep.subr.bf16.mxu0 %v2692
      %4025 = vmatpush1.bf16.msra.mxu0 %v2691
      %4026 = vmatprep.mubr.bf16.mxu0 %v888
      %4027 = vmatmul.mubr.bf16.gmra.mrb[0].mxu0 %v887
      %v4028 = vpop.f32.mrb[0].mxu0
      %v4029 = vadd.f32 %v3988, %v4028
      %v4030 = vpop.f32.mrb[0].mxu0
      %v4031 = vadd.f32 %v3990, %v4030
      %v4032 = vpop.f32.mrb[0].mxu0
      %v4033 = vpop.f32.mrb[0].mxu0
      %4034 = vdwg.mxu0
      %4035 = vmatprep.subr.bf16.mxu0 %v2700
      %4036 = vmatpush1.bf16.msra.mxu0 %v2699
      %4037 = vmatprep.subr.bf16.mxu0 %v2708
      %4038 = vmatpush1.bf16.msra.mxu0 %v2707
      %4039 = vmatprep.subr.bf16.mxu0 %v2716
      %4040 = vmatpush1.bf16.msra.mxu0 %v2715
      %4041 = vmatprep.subr.bf16.mxu0 %v2724
      %4042 = vmatpush1.bf16.msra.mxu0 %v2723
      %4043 = vmatprep.subr.bf16.mxu0 %v2732
      %4044 = vmatpush1.bf16.msra.mxu0 %v2731
      %4045 = vmatprep.subr.bf16.mxu0 %v2740
      %4046 = vmatpush1.bf16.msra.mxu0 %v2739
      %4047 = vmatprep.subr.bf16.mxu0 %v2748
      %4048 = vmatpush1.bf16.msra.mxu0 %v2747
      %4049 = vmatprep.subr.bf16.mxu0 %v2756
      %4050 = vmatpush1.bf16.msra.mxu0 %v2755
      %4051 = vmatprep.subr.bf16.mxu0 %v2764
      %4052 = vmatpush1.bf16.msra.mxu0 %v2763
      %4053 = vmatprep.subr.bf16.mxu0 %v2772
      %4054 = vmatpush1.bf16.msra.mxu0 %v2771
      %4055 = vmatprep.subr.bf16.mxu0 %v2780
      %4056 = vmatpush1.bf16.msra.mxu0 %v2779
      %4057 = vmatprep.subr.bf16.mxu0 %v2788
      %4058 = vmatpush1.bf16.msra.mxu0 %v2787
      %4059 = vmatprep.subr.bf16.mxu0 %v2796
      %4060 = vmatpush1.bf16.msra.mxu0 %v2795
      %4061 = vmatprep.subr.bf16.mxu0 %v2804
      %4062 = vmatpush1.bf16.msra.mxu0 %v2803
      %4063 = vmatprep.subr.bf16.mxu0 %v2812
      %4064 = vmatpush1.bf16.msra.mxu0 %v2811
      %4065 = vmatprep.subr.bf16.mxu0 %v2820
      %4066 = vmatpush1.bf16.msra.mxu0 %v2819
      %4067 = vmatprep.mubr.bf16.mxu0 %v890
      %4068 = vmatmul.mubr.bf16.gmra.mrb[0].mxu0 %v889
      %v4069 = vpop.f32.mrb[0].mxu0
      %v4070 = vadd.f32 %v4029, %v4069
      %v4071 = vpop.f32.mrb[0].mxu0
      %v4072 = vadd.f32 %v4031, %v4071
      %v4073 = vpop.f32.mrb[0].mxu0
      %v4074 = vpop.f32.mrb[0].mxu0
      %4075 = vdwg.mxu0
      %4076 = vmatprep.subr.bf16.mxu0 %v2828
      %4077 = vmatpush1.bf16.msra.mxu0 %v2827
      %4078 = vmatprep.subr.bf16.mxu0 %v2836
      %4079 = vmatpush1.bf16.msra.mxu0 %v2835
      %4080 = vmatprep.subr.bf16.mxu0 %v2844
      %4081 = vmatpush1.bf16.msra.mxu0 %v2843
      %4082 = vmatprep.subr.bf16.mxu0 %v2852
      %4083 = vmatpush1.bf16.msra.mxu0 %v2851
      %4084 = vmatprep.subr.bf16.mxu0 %v2860
      %4085 = vmatpush1.bf16.msra.mxu0 %v2859
      %4086 = vmatprep.subr.bf16.mxu0 %v2868
      %4087 = vmatpush1.bf16.msra.mxu0 %v2867
      %4088 = vmatprep.subr.bf16.mxu0 %v2876
      %4089 = vmatpush1.bf16.msra.mxu0 %v2875
      %4090 = vmatprep.subr.bf16.mxu0 %v2884
      %4091 = vmatpush1.bf16.msra.mxu0 %v2883
      %4092 = vmatprep.subr.bf16.mxu0 %v2892
      %4093 = vmatpush1.bf16.msra.mxu0 %v2891
      %4094 = vmatprep.subr.bf16.mxu0 %v2900
      %4095 = vmatpush1.bf16.msra.mxu0 %v2899
      %4096 = vmatprep.subr.bf16.mxu0 %v2908
      %4097 = vmatpush1.bf16.msra.mxu0 %v2907
      %4098 = vmatprep.subr.bf16.mxu0 %v2916
      %4099 = vmatpush1.bf16.msra.mxu0 %v2915
      %4100 = vmatprep.subr.bf16.mxu0 %v2924
      %4101 = vmatpush1.bf16.msra.mxu0 %v2923
      %4102 = vmatprep.subr.bf16.mxu0 %v2932
      %4103 = vmatpush1.bf16.msra.mxu0 %v2931
      %4104 = vmatprep.subr.bf16.mxu0 %v2940
      %4105 = vmatpush1.bf16.msra.mxu0 %v2939
      %4106 = vmatprep.subr.bf16.mxu0 %v2948
      %4107 = vmatpush1.bf16.msra.mxu0 %v2947
      %4108 = vmatprep.mubr.bf16.mxu0 %v892
      %4109 = vmatmul.mubr.bf16.gmra.mrb[0].mxu0 %v891
      %v4110 = vpop.f32.mrb[0].mxu0
      %v4111 = vadd.f32 %v4070, %v4110
      %v4112 = vpop.f32.mrb[0].mxu0
      %v4113 = vadd.f32 %v4072, %v4112
      %v4114 = vpop.f32.mrb[0].mxu0
      %v4115 = vpop.f32.mrb[0].mxu0
      %4116 = vdwg.mxu0
      %v4117 = vmax.f32 %v3619, 0.0
      %v4118 = vmax.f32 %v3621, 0.0
      %v4119 = vmax.f32 %v3783, 0.0
      %v4120 = vmax.f32 %v3785, 0.0
      %v4121 = vmax.f32 %v3947, 0.0
      %v4122 = vmax.f32 %v3949, 0.0
      %v4123 = vmax.f32 %v4111, 0.0
      %v4124 = vmax.f32 %v4113, 0.0
      %v4125 = vpack.c.bf16 %v4117, %v4117
      %v4126 = vpack.c.bf16 %v4118, %v4118
      %v4127 = vpack.c.bf16 %v4119, %v4119
      %v4128 = vpack.c.bf16 %v4120, %v4120
      %v4129 = vpack.c.bf16 %v4121, %v4121
      %v4130 = vpack.c.bf16 %v4122, %v4122
      %v4131 = vpack.c.bf16 %v4123, %v4123
      %v4132 = vpack.c.bf16 %v4124, %v4124
      %v4133 = vld [vmem:[%s303] sm:$0xf]
      %v4134 = vld [vmem:[%s303 + $0x4] sm:$0xf]
      %v4135 = vld [vmem:[%s303 + $0x8] sm:$0xf]
      %v4136 = vld [vmem:[%s303 + $0xc] sm:$0xf]
      %v4137 = vld [vmem:[%s303 + $0x10] sm:$0xf]
      %v4138 = vld [vmem:[%s303 + $0x14] sm:$0xf]
      %v4139 = vld [vmem:[%s303 + $0x18] sm:$0xf]
      %v4140 = vld [vmem:[%s303 + $0x1c] sm:$0xf]
      %v4141 = vld [vmem:[%s303 + $0x20] sm:$0xf]
      %v4142 = vld [vmem:[%s303 + $0x24] sm:$0xf]
      %v4143 = vld [vmem:[%s303 + $0x28] sm:$0xf]
      %v4144 = vld [vmem:[%s303 + $0x2c] sm:$0xf]
      %v4145 = vld [vmem:[%s303 + $0x30] sm:$0xf]
      %v4146 = vld [vmem:[%s303 + $0x34] sm:$0xf]
      %v4147 = vld [vmem:[%s303 + $0x38] sm:$0xf]
      %v4148 = vld [vmem:[%s303 + $0x3c] sm:$0xf]
      %v4149 = vld [vmem:[%s303 + $0x40] sm:$0xf]
      %v4150 = vld [vmem:[%s303 + $0x44] sm:$0xf]
      %v4151 = vld [vmem:[%s303 + $0x48] sm:$0xf]
      %v4152 = vld [vmem:[%s303 + $0x4c] sm:$0xf]
      %v4153 = vld [vmem:[%s303 + $0x50] sm:$0xf]
      %v4154 = vld [vmem:[%s303 + $0x54] sm:$0xf]
      %v4155 = vld [vmem:[%s303 + $0x58] sm:$0xf]
      %v4156 = vld [vmem:[%s303 + $0x5c] sm:$0xf]
      %v4157 = vld [vmem:[%s303 + $0x60] sm:$0xf]
      %v4158 = vld [vmem:[%s303 + $0x64] sm:$0xf]
      %v4159 = vld [vmem:[%s303 + $0x68] sm:$0xf]
      %v4160 = vld [vmem:[%s303 + $0x6c] sm:$0xf]
      %v4161 = vld [vmem:[%s303 + $0x70] sm:$0xf]
      %v4162 = vld [vmem:[%s303 + $0x74] sm:$0xf]
      %v4163 = vld [vmem:[%s303 + $0x78] sm:$0xf]
      %v4164 = vld [vmem:[%s303 + $0x7c] sm:$0xf]
      %v4165 = vld [vmem:[%s303 + $0x80] sm:$0xf]
      %v4166 = vld [vmem:[%s303 + $0x84] sm:$0xf]
      %v4167 = vld [vmem:[%s303 + $0x88] sm:$0xf]
      %v4168 = vld [vmem:[%s303 + $0x8c] sm:$0xf]
      %v4169 = vld [vmem:[%s303 + $0x90] sm:$0xf]
      %v4170 = vld [vmem:[%s303 + $0x94] sm:$0xf]
      %v4171 = vld [vmem:[%s303 + $0x98] sm:$0xf]
      %v4172 = vld [vmem:[%s303 + $0x9c] sm:$0xf]
      %v4173 = vld [vmem:[%s303 + $0xa0] sm:$0xf]
      %v4174 = vld [vmem:[%s303 + $0xa4] sm:$0xf]
      %v4175 = vld [vmem:[%s303 + $0xa8] sm:$0xf]
      %v4176 = vld [vmem:[%s303 + $0xac] sm:$0xf]
      %v4177 = vld [vmem:[%s303 + $0xb0] sm:$0xf]
      %v4178 = vld [vmem:[%s303 + $0xb4] sm:$0xf]
      %v4179 = vld [vmem:[%s303 + $0xb8] sm:$0xf]
      %v4180 = vld [vmem:[%s303 + $0xbc] sm:$0xf]
      %v4181 = vld [vmem:[%s303 + $0xc0] sm:$0xf]
      %v4182 = vld [vmem:[%s303 + $0xc4] sm:$0xf]
      %v4183 = vld [vmem:[%s303 + $0xc8] sm:$0xf]
      %v4184 = vld [vmem:[%s303 + $0xcc] sm:$0xf]
      %v4185 = vld [vmem:[%s303 + $0xd0] sm:$0xf]
      %v4186 = vld [vmem:[%s303 + $0xd4] sm:$0xf]
      %v4187 = vld [vmem:[%s303 + $0xd8] sm:$0xf]
      %v4188 = vld [vmem:[%s303 + $0xdc] sm:$0xf]
      %v4189 = vld [vmem:[%s303 + $0xe0] sm:$0xf]
      %v4190 = vld [vmem:[%s303 + $0xe4] sm:$0xf]
      %v4191 = vld [vmem:[%s303 + $0xe8] sm:$0xf]
      %v4192 = vld [vmem:[%s303 + $0xec] sm:$0xf]
      %v4193 = vld [vmem:[%s303 + $0xf0] sm:$0xf]
      %v4194 = vld [vmem:[%s303 + $0xf4] sm:$0xf]
      %v4195 = vld [vmem:[%s303 + $0xf8] sm:$0xf]
      %v4196 = vld [vmem:[%s303 + $0xfc] sm:$0xf]
      %v4197 = vld [vmem:[%s303 + $0x100] sm:$0xf]
      %v4198 = vld [vmem:[%s303 + $0x104] sm:$0xf]
      %v4199 = vld [vmem:[%s303 + $0x108] sm:$0xf]
      %v4200 = vld [vmem:[%s303 + $0x10c] sm:$0xf]
      %v4201 = vld [vmem:[%s303 + $0x110] sm:$0xf]
      %v4202 = vld [vmem:[%s303 + $0x114] sm:$0xf]
      %v4203 = vld [vmem:[%s303 + $0x118] sm:$0xf]
      %v4204 = vld [vmem:[%s303 + $0x11c] sm:$0xf]
      %v4205 = vld [vmem:[%s303 + $0x120] sm:$0xf]
      %v4206 = vld [vmem:[%s303 + $0x124] sm:$0xf]
      %v4207 = vld [vmem:[%s303 + $0x128] sm:$0xf]
      %v4208 = vld [vmem:[%s303 + $0x12c] sm:$0xf]
      %v4209 = vld [vmem:[%s303 + $0x130] sm:$0xf]
      %v4210 = vld [vmem:[%s303 + $0x134] sm:$0xf]
      %v4211 = vld [vmem:[%s303 + $0x138] sm:$0xf]
      %v4212 = vld [vmem:[%s303 + $0x13c] sm:$0xf]
      %v4213 = vld [vmem:[%s303 + $0x140] sm:$0xf]
      %v4214 = vld [vmem:[%s303 + $0x144] sm:$0xf]
      %v4215 = vld [vmem:[%s303 + $0x148] sm:$0xf]
      %v4216 = vld [vmem:[%s303 + $0x14c] sm:$0xf]
      %v4217 = vld [vmem:[%s303 + $0x150] sm:$0xf]
      %v4218 = vld [vmem:[%s303 + $0x154] sm:$0xf]
      %v4219 = vld [vmem:[%s303 + $0x158] sm:$0xf]
      %v4220 = vld [vmem:[%s303 + $0x15c] sm:$0xf]
      %v4221 = vld [vmem:[%s303 + $0x160] sm:$0xf]
      %v4222 = vld [vmem:[%s303 + $0x164] sm:$0xf]
      %v4223 = vld [vmem:[%s303 + $0x168] sm:$0xf]
      %v4224 = vld [vmem:[%s303 + $0x16c] sm:$0xf]
      %v4225 = vld [vmem:[%s303 + $0x170] sm:$0xf]
      %v4226 = vld [vmem:[%s303 + $0x174] sm:$0xf]
      %v4227 = vld [vmem:[%s303 + $0x178] sm:$0xf]
      %v4228 = vld [vmem:[%s303 + $0x17c] sm:$0xf]
      %v4229 = vld [vmem:[%s303 + $0x180] sm:$0xf]
      %v4230 = vld [vmem:[%s303 + $0x184] sm:$0xf]
      %v4231 = vld [vmem:[%s303 + $0x188] sm:$0xf]
      %v4232 = vld [vmem:[%s303 + $0x18c] sm:$0xf]
      %v4233 = vld [vmem:[%s303 + $0x190] sm:$0xf]
      %v4234 = vld [vmem:[%s303 + $0x194] sm:$0xf]
      %v4235 = vld [vmem:[%s303 + $0x198] sm:$0xf]
      %v4236 = vld [vmem:[%s303 + $0x19c] sm:$0xf]
      %v4237 = vld [vmem:[%s303 + $0x1a0] sm:$0xf]
      %v4238 = vld [vmem:[%s303 + $0x1a4] sm:$0xf]
      %v4239 = vld [vmem:[%s303 + $0x1a8] sm:$0xf]
      %v4240 = vld [vmem:[%s303 + $0x1ac] sm:$0xf]
      %v4241 = vld [vmem:[%s303 + $0x1b0] sm:$0xf]
      %v4242 = vld [vmem:[%s303 + $0x1b4] sm:$0xf]
      %v4243 = vld [vmem:[%s303 + $0x1b8] sm:$0xf]
      %v4244 = vld [vmem:[%s303 + $0x1bc] sm:$0xf]
      %v4245 = vld [vmem:[%s303 + $0x1c0] sm:$0xf]
      %v4246 = vld [vmem:[%s303 + $0x1c4] sm:$0xf]
      %v4247 = vld [vmem:[%s303 + $0x1c8] sm:$0xf]
      %v4248 = vld [vmem:[%s303 + $0x1cc] sm:$0xf]
      %v4249 = vld [vmem:[%s303 + $0x1d0] sm:$0xf]
      %v4250 = vld [vmem:[%s303 + $0x1d4] sm:$0xf]
      %v4251 = vld [vmem:[%s303 + $0x1d8] sm:$0xf]
      %v4252 = vld [vmem:[%s303 + $0x1dc] sm:$0xf]
      %v4253 = vld [vmem:[%s303 + $0x1e0] sm:$0xf]
      %v4254 = vld [vmem:[%s303 + $0x1e4] sm:$0xf]
      %v4255 = vld [vmem:[%s303 + $0x1e8] sm:$0xf]
      %v4256 = vld [vmem:[%s303 + $0x1ec] sm:$0xf]
      %v4257 = vld [vmem:[%s303 + $0x1f0] sm:$0xf]
      %v4258 = vld [vmem:[%s303 + $0x1f4] sm:$0xf]
      %v4259 = vld [vmem:[%s303 + $0x1f8] sm:$0xf]
      %v4260 = vld [vmem:[%s303 + $0x1fc] sm:$0xf]
      %v4261 = vld [vmem:[%s306] sm:$0x1]
      %v4263 = vlaneseq
      %v4264 = vshrl.u32 %v4263, 7
      %v4265 = vsub.s32 0, %v4264
      %v4266 = vrot.slane %v4261, %v4265
      %v4396 = vunpack.c.l.b16 %v4133
      %v4397 = vunpack.c.l.b16 %v4134
      %v4398 = vunpack.c.l.b16 %v4135
      %v4399 = vunpack.c.l.b16 %v4136
      %v4400 = vunpack.c.l.b16 %v4137
      %v4401 = vunpack.c.l.b16 %v4138
      %v4402 = vunpack.c.l.b16 %v4139
      %v4403 = vunpack.c.l.b16 %v4140
      %v4404 = vunpack.c.l.b16 %v4141
      %v4405 = vunpack.c.l.b16 %v4142
      %v4406 = vunpack.c.l.b16 %v4143
      %v4407 = vunpack.c.l.b16 %v4144
      %v4408 = vunpack.c.l.b16 %v4145
      %v4409 = vunpack.c.l.b16 %v4146
      %v4410 = vunpack.c.l.b16 %v4147
      %v4411 = vunpack.c.l.b16 %v4148
      %v4412 = vunpack.c.l.b16 %v4149
      %v4413 = vunpack.c.l.b16 %v4150
      %v4414 = vunpack.c.l.b16 %v4151
      %v4415 = vunpack.c.l.b16 %v4152
      %v4416 = vunpack.c.l.b16 %v4153
      %v4417 = vunpack.c.l.b16 %v4154
      %v4418 = vunpack.c.l.b16 %v4155
      %v4419 = vunpack.c.l.b16 %v4156
      %v4420 = vunpack.c.l.b16 %v4157
      %v4421 = vunpack.c.l.b16 %v4158
      %v4422 = vunpack.c.l.b16 %v4159
      %v4423 = vunpack.c.l.b16 %v4160
      %v4424 = vunpack.c.l.b16 %v4161
      %v4425 = vunpack.c.l.b16 %v4162
      %v4426 = vunpack.c.l.b16 %v4163
      %v4427 = vunpack.c.l.b16 %v4164
      %v4428 = vunpack.c.l.b16 %v4165
      %v4429 = vunpack.c.l.b16 %v4166
      %v4430 = vunpack.c.l.b16 %v4167
      %v4431 = vunpack.c.l.b16 %v4168
      %v4432 = vunpack.c.l.b16 %v4169
      %v4433 = vunpack.c.l.b16 %v4170
      %v4434 = vunpack.c.l.b16 %v4171
      %v4435 = vunpack.c.l.b16 %v4172
      %v4436 = vunpack.c.l.b16 %v4173
      %v4437 = vunpack.c.l.b16 %v4174
      %v4438 = vunpack.c.l.b16 %v4175
      %v4439 = vunpack.c.l.b16 %v4176
      %v4440 = vunpack.c.l.b16 %v4177
      %v4441 = vunpack.c.l.b16 %v4178
      %v4442 = vunpack.c.l.b16 %v4179
      %v4443 = vunpack.c.l.b16 %v4180
      %v4444 = vunpack.c.l.b16 %v4181
      %v4445 = vunpack.c.l.b16 %v4182
      %v4446 = vunpack.c.l.b16 %v4183
      %v4447 = vunpack.c.l.b16 %v4184
      %v4448 = vunpack.c.l.b16 %v4185
      %v4449 = vunpack.c.l.b16 %v4186
      %v4450 = vunpack.c.l.b16 %v4187
      %v4451 = vunpack.c.l.b16 %v4188
      %v4452 = vunpack.c.l.b16 %v4189
      %v4453 = vunpack.c.l.b16 %v4190
      %v4454 = vunpack.c.l.b16 %v4191
      %v4455 = vunpack.c.l.b16 %v4192
      %v4456 = vunpack.c.l.b16 %v4193
      %v4457 = vunpack.c.l.b16 %v4194
      %v4458 = vunpack.c.l.b16 %v4195
      %v4459 = vunpack.c.l.b16 %v4196
      %v4460 = vunpack.c.l.b16 %v4197
      %v4461 = vunpack.c.l.b16 %v4198
      %v4462 = vunpack.c.l.b16 %v4199
      %v4463 = vunpack.c.l.b16 %v4200
      %v4464 = vunpack.c.l.b16 %v4201
      %v4465 = vunpack.c.l.b16 %v4202
      %v4466 = vunpack.c.l.b16 %v4203
      %v4467 = vunpack.c.l.b16 %v4204
      %v4468 = vunpack.c.l.b16 %v4205
      %v4469 = vunpack.c.l.b16 %v4206
      %v4470 = vunpack.c.l.b16 %v4207
      %v4471 = vunpack.c.l.b16 %v4208
      %v4472 = vunpack.c.l.b16 %v4209
      %v4473 = vunpack.c.l.b16 %v4210
      %v4474 = vunpack.c.l.b16 %v4211
      %v4475 = vunpack.c.l.b16 %v4212
      %v4476 = vunpack.c.l.b16 %v4213
      %v4477 = vunpack.c.l.b16 %v4214
      %v4478 = vunpack.c.l.b16 %v4215
      %v4479 = vunpack.c.l.b16 %v4216
      %v4480 = vunpack.c.l.b16 %v4217
      %v4481 = vunpack.c.l.b16 %v4218
      %v4482 = vunpack.c.l.b16 %v4219
      %v4483 = vunpack.c.l.b16 %v4220
      %v4484 = vunpack.c.l.b16 %v4221
      %v4485 = vunpack.c.l.b16 %v4222
      %v4486 = vunpack.c.l.b16 %v4223
      %v4487 = vunpack.c.l.b16 %v4224
      %v4488 = vunpack.c.l.b16 %v4225
      %v4489 = vunpack.c.l.b16 %v4226
      %v4490 = vunpack.c.l.b16 %v4227
      %v4491 = vunpack.c.l.b16 %v4228
      %v4492 = vunpack.c.l.b16 %v4229
      %v4493 = vunpack.c.l.b16 %v4230
      %v4494 = vunpack.c.l.b16 %v4231
      %v4495 = vunpack.c.l.b16 %v4232
      %v4496 = vunpack.c.l.b16 %v4233
      %v4497 = vunpack.c.l.b16 %v4234
      %v4498 = vunpack.c.l.b16 %v4235
      %v4499 = vunpack.c.l.b16 %v4236
      %v4500 = vunpack.c.l.b16 %v4237
      %v4501 = vunpack.c.l.b16 %v4238
      %v4502 = vunpack.c.l.b16 %v4239
      %v4503 = vunpack.c.l.b16 %v4240
      %v4504 = vunpack.c.l.b16 %v4241
      %v4505 = vunpack.c.l.b16 %v4242
      %v4506 = vunpack.c.l.b16 %v4243
      %v4507 = vunpack.c.l.b16 %v4244
      %v4508 = vunpack.c.l.b16 %v4245
      %v4509 = vunpack.c.l.b16 %v4246
      %v4510 = vunpack.c.l.b16 %v4247
      %v4511 = vunpack.c.l.b16 %v4248
      %v4512 = vunpack.c.l.b16 %v4249
      %v4513 = vunpack.c.l.b16 %v4250
      %v4514 = vunpack.c.l.b16 %v4251
      %v4515 = vunpack.c.l.b16 %v4252
      %v4516 = vunpack.c.l.b16 %v4253
      %v4517 = vunpack.c.l.b16 %v4254
      %v4518 = vunpack.c.l.b16 %v4255
      %v4519 = vunpack.c.l.b16 %v4256
      %v4520 = vunpack.c.l.b16 %v4257
      %v4521 = vunpack.c.l.b16 %v4258
      %v4522 = vunpack.c.l.b16 %v4259
      %v4523 = vunpack.c.l.b16 %v4260
      %v4524 = vpack.c.b16 %v4397, %v4396
      %v4525 = vpack.c.b16 %v4399, %v4398
      %v4526 = vpack.c.b16 %v4401, %v4400
      %v4527 = vpack.c.b16 %v4403, %v4402
      %v4528 = vpack.c.b16 %v4405, %v4404
      %v4529 = vpack.c.b16 %v4407, %v4406
      %v4530 = vpack.c.b16 %v4409, %v4408
      %v4531 = vpack.c.b16 %v4411, %v4410
      %v4532 = vpack.c.b16 %v4413, %v4412
      %v4533 = vpack.c.b16 %v4415, %v4414
      %v4534 = vpack.c.b16 %v4417, %v4416
      %v4535 = vpack.c.b16 %v4419, %v4418
      %v4536 = vpack.c.b16 %v4421, %v4420
      %v4537 = vpack.c.b16 %v4423, %v4422
      %v4538 = vpack.c.b16 %v4425, %v4424
      %v4539 = vpack.c.b16 %v4427, %v4426
      %v4540 = vpack.c.b16 %v4429, %v4428
      %v4541 = vpack.c.b16 %v4431, %v4430
      %v4542 = vpack.c.b16 %v4433, %v4432
      %v4543 = vpack.c.b16 %v4435, %v4434
      %v4544 = vpack.c.b16 %v4437, %v4436
      %v4545 = vpack.c.b16 %v4439, %v4438
      %v4546 = vpack.c.b16 %v4441, %v4440
      %v4547 = vpack.c.b16 %v4443, %v4442
      %v4548 = vpack.c.b16 %v4445, %v4444
      %v4549 = vpack.c.b16 %v4447, %v4446
      %v4550 = vpack.c.b16 %v4449, %v4448
      %v4551 = vpack.c.b16 %v4451, %v4450
      %v4552 = vpack.c.b16 %v4453, %v4452
      %v4553 = vpack.c.b16 %v4455, %v4454
      %v4554 = vpack.c.b16 %v4457, %v4456
      %v4555 = vpack.c.b16 %v4459, %v4458
      %v4556 = vpack.c.b16 %v4461, %v4460
      %v4557 = vpack.c.b16 %v4463, %v4462
      %v4558 = vpack.c.b16 %v4465, %v4464
      %v4559 = vpack.c.b16 %v4467, %v4466
      %v4560 = vpack.c.b16 %v4469, %v4468
      %v4561 = vpack.c.b16 %v4471, %v4470
      %v4562 = vpack.c.b16 %v4473, %v4472
      %v4563 = vpack.c.b16 %v4475, %v4474
      %v4564 = vpack.c.b16 %v4477, %v4476
      %v4565 = vpack.c.b16 %v4479, %v4478
      %v4566 = vpack.c.b16 %v4481, %v4480
      %v4567 = vpack.c.b16 %v4483, %v4482
      %v4568 = vpack.c.b16 %v4485, %v4484
      %v4569 = vpack.c.b16 %v4487, %v4486
      %v4570 = vpack.c.b16 %v4489, %v4488
      %v4571 = vpack.c.b16 %v4491, %v4490
      %v4572 = vpack.c.b16 %v4493, %v4492
      %v4573 = vpack.c.b16 %v4495, %v4494
      %v4574 = vpack.c.b16 %v4497, %v4496
      %v4575 = vpack.c.b16 %v4499, %v4498
      %v4576 = vpack.c.b16 %v4501, %v4500
      %v4577 = vpack.c.b16 %v4503, %v4502
      %v4578 = vpack.c.b16 %v4505, %v4504
      %v4579 = vpack.c.b16 %v4507, %v4506
      %v4580 = vpack.c.b16 %v4509, %v4508
      %v4581 = vpack.c.b16 %v4511, %v4510
      %v4582 = vpack.c.b16 %v4513, %v4512
      %v4583 = vpack.c.b16 %v4515, %v4514
      %v4584 = vpack.c.b16 %v4517, %v4516
      %v4585 = vpack.c.b16 %v4519, %v4518
      %v4586 = vpack.c.b16 %v4521, %v4520
      %v4587 = vpack.c.b16 %v4523, %v4522
      %4652 = vmatprep.subr.bf16.mxu0 0
      %4653 = vmatpush1.bf16.msra.mxu0 %v4524
      %4654 = vmatprep.subr.bf16.mxu0 0
      %4655 = vmatpush1.bf16.msra.mxu0 %v4525
      %4656 = vmatprep.subr.bf16.mxu0 0
      %4657 = vmatpush1.bf16.msra.mxu0 %v4526
      %4658 = vmatprep.subr.bf16.mxu0 0
      %4659 = vmatpush1.bf16.msra.mxu0 %v4527
      %4660 = vmatprep.subr.bf16.mxu0 0
      %4661 = vmatpush1.bf16.msra.mxu0 %v4528
      %4662 = vmatprep.subr.bf16.mxu0 0
      %4663 = vmatpush1.bf16.msra.mxu0 %v4529
      %4664 = vmatprep.subr.bf16.mxu0 0
      %4665 = vmatpush1.bf16.msra.mxu0 %v4530
      %4666 = vmatprep.subr.bf16.mxu0 0
      %4667 = vmatpush1.bf16.msra.mxu0 %v4531
      %4668 = vmatprep.subr.bf16.mxu0 0
      %4669 = vmatpush1.bf16.msra.mxu0 %v4532
      %4670 = vmatprep.subr.bf16.mxu0 0
      %4671 = vmatpush1.bf16.msra.mxu0 %v4533
      %4672 = vmatprep.subr.bf16.mxu0 0
      %4673 = vmatpush1.bf16.msra.mxu0 %v4534
      %4674 = vmatprep.subr.bf16.mxu0 0
      %4675 = vmatpush1.bf16.msra.mxu0 %v4535
      %4676 = vmatprep.subr.bf16.mxu0 0
      %4677 = vmatpush1.bf16.msra.mxu0 %v4536
      %4678 = vmatprep.subr.bf16.mxu0 0
      %4679 = vmatpush1.bf16.msra.mxu0 %v4537
      %4680 = vmatprep.subr.bf16.mxu0 0
      %4681 = vmatpush1.bf16.msra.mxu0 %v4538
      %4682 = vmatprep.subr.bf16.mxu0 0
      %4683 = vmatpush1.bf16.msra.mxu0 %v4539
      %4684 = vmatprep.mubr.bf16.mxu0 %v4126
      %4685 = vmatmul.mubr.bf16.gmra.mrb[0].mxu0 %v4125
      %v4686 = vpop.f32.mrb[0].mxu0
      %v4687 = vadd.f32 %v4266, %v4686
      %v4688 = vpop.f32.mrb[0].mxu0
      %v4689 = vpop.f32.mrb[0].mxu0
      %v4690 = vpop.f32.mrb[0].mxu0
      %4691 = vdwg.mxu0
      %4692 = vmatprep.subr.bf16.mxu0 0
      %4693 = vmatpush1.bf16.msra.mxu0 %v4540
      %4694 = vmatprep.subr.bf16.mxu0 0
      %4695 = vmatpush1.bf16.msra.mxu0 %v4541
      %4696 = vmatprep.subr.bf16.mxu0 0
      %4697 = vmatpush1.bf16.msra.mxu0 %v4542
      %4698 = vmatprep.subr.bf16.mxu0 0
      %4699 = vmatpush1.bf16.msra.mxu0 %v4543
      %4700 = vmatprep.subr.bf16.mxu0 0
      %4701 = vmatpush1.bf16.msra.mxu0 %v4544
      %4702 = vmatprep.subr.bf16.mxu0 0
      %4703 = vmatpush1.bf16.msra.mxu0 %v4545
      %4704 = vmatprep.subr.bf16.mxu0 0
      %4705 = vmatpush1.bf16.msra.mxu0 %v4546
      %4706 = vmatprep.subr.bf16.mxu0 0
      %4707 = vmatpush1.bf16.msra.mxu0 %v4547
      %4708 = vmatprep.subr.bf16.mxu0 0
      %4709 = vmatpush1.bf16.msra.mxu0 %v4548
      %4710 = vmatprep.subr.bf16.mxu0 0
      %4711 = vmatpush1.bf16.msra.mxu0 %v4549
      %4712 = vmatprep.subr.bf16.mxu0 0
      %4713 = vmatpush1.bf16.msra.mxu0 %v4550
      %4714 = vmatprep.subr.bf16.mxu0 0
      %4715 = vmatpush1.bf16.msra.mxu0 %v4551
      %4716 = vmatprep.subr.bf16.mxu0 0
      %4717 = vmatpush1.bf16.msra.mxu0 %v4552
      %4718 = vmatprep.subr.bf16.mxu0 0
      %4719 = vmatpush1.bf16.msra.mxu0 %v4553
      %4720 = vmatprep.subr.bf16.mxu0 0
      %4721 = vmatpush1.bf16.msra.mxu0 %v4554
      %4722 = vmatprep.subr.bf16.mxu0 0
      %4723 = vmatpush1.bf16.msra.mxu0 %v4555
      %4724 = vmatprep.mubr.bf16.mxu0 %v4128
      %4725 = vmatmul.mubr.bf16.gmra.mrb[0].mxu0 %v4127
      %v4726 = vpop.f32.mrb[0].mxu0
      %v4727 = vadd.f32 %v4687, %v4726
      %v4728 = vpop.f32.mrb[0].mxu0
      %v4729 = vpop.f32.mrb[0].mxu0
      %v4730 = vpop.f32.mrb[0].mxu0
      %4731 = vdwg.mxu0
      %4732 = vmatprep.subr.bf16.mxu0 0
      %4733 = vmatpush1.bf16.msra.mxu0 %v4556
      %4734 = vmatprep.subr.bf16.mxu0 0
      %4735 = vmatpush1.bf16.msra.mxu0 %v4557
      %4736 = vmatprep.subr.bf16.mxu0 0
      %4737 = vmatpush1.bf16.msra.mxu0 %v4558
      %4738 = vmatprep.subr.bf16.mxu0 0
      %4739 = vmatpush1.bf16.msra.mxu0 %v4559
      %4740 = vmatprep.subr.bf16.mxu0 0
      %4741 = vmatpush1.bf16.msra.mxu0 %v4560
      %4742 = vmatprep.subr.bf16.mxu0 0
      %4743 = vmatpush1.bf16.msra.mxu0 %v4561
      %4744 = vmatprep.subr.bf16.mxu0 0
      %4745 = vmatpush1.bf16.msra.mxu0 %v4562
      %4746 = vmatprep.subr.bf16.mxu0 0
      %4747 = vmatpush1.bf16.msra.mxu0 %v4563
      %4748 = vmatprep.subr.bf16.mxu0 0
      %4749 = vmatpush1.bf16.msra.mxu0 %v4564
      %4750 = vmatprep.subr.bf16.mxu0 0
      %4751 = vmatpush1.bf16.msra.mxu0 %v4565
      %4752 = vmatprep.subr.bf16.mxu0 0
      %4753 = vmatpush1.bf16.msra.mxu0 %v4566
      %4754 = vmatprep.subr.bf16.mxu0 0
      %4755 = vmatpush1.bf16.msra.mxu0 %v4567
      %4756 = vmatprep.subr.bf16.mxu0 0
      %4757 = vmatpush1.bf16.msra.mxu0 %v4568
      %4758 = vmatprep.subr.bf16.mxu0 0
      %4759 = vmatpush1.bf16.msra.mxu0 %v4569
      %4760 = vmatprep.subr.bf16.mxu0 0
      %4761 = vmatpush1.bf16.msra.mxu0 %v4570
      %4762 = vmatprep.subr.bf16.mxu0 0
      %4763 = vmatpush1.bf16.msra.mxu0 %v4571
      %4764 = vmatprep.mubr.bf16.mxu0 %v4130
      %4765 = vmatmul.mubr.bf16.gmra.mrb[0].mxu0 %v4129
      %v4766 = vpop.f32.mrb[0].mxu0
      %v4767 = vadd.f32 %v4727, %v4766
      %v4768 = vpop.f32.mrb[0].mxu0
      %v4769 = vpop.f32.mrb[0].mxu0
      %v4770 = vpop.f32.mrb[0].mxu0
      %4771 = vdwg.mxu0
      %4772 = vmatprep.subr.bf16.mxu0 0
      %4773 = vmatpush1.bf16.msra.mxu0 %v4572
      %4774 = vmatprep.subr.bf16.mxu0 0
      %4775 = vmatpush1.bf16.msra.mxu0 %v4573
      %4776 = vmatprep.subr.bf16.mxu0 0
      %4777 = vmatpush1.bf16.msra.mxu0 %v4574
      %4778 = vmatprep.subr.bf16.mxu0 0
      %4779 = vmatpush1.bf16.msra.mxu0 %v4575
      %4780 = vmatprep.subr.bf16.mxu0 0
      %4781 = vmatpush1.bf16.msra.mxu0 %v4576
      %4782 = vmatprep.subr.bf16.mxu0 0
      %4783 = vmatpush1.bf16.msra.mxu0 %v4577
      %4784 = vmatprep.subr.bf16.mxu0 0
      %4785 = vmatpush1.bf16.msra.mxu0 %v4578
      %4786 = vmatprep.subr.bf16.mxu0 0
      %4787 = vmatpush1.bf16.msra.mxu0 %v4579
      %4788 = vmatprep.subr.bf16.mxu0 0
      %4789 = vmatpush1.bf16.msra.mxu0 %v4580
      %4790 = vmatprep.subr.bf16.mxu0 0
      %4791 = vmatpush1.bf16.msra.mxu0 %v4581
      %4792 = vmatprep.subr.bf16.mxu0 0
      %4793 = vmatpush1.bf16.msra.mxu0 %v4582
      %4794 = vmatprep.subr.bf16.mxu0 0
      %4795 = vmatpush1.bf16.msra.mxu0 %v4583
      %4796 = vmatprep.subr.bf16.mxu0 0
      %4797 = vmatpush1.bf16.msra.mxu0 %v4584
      %4798 = vmatprep.subr.bf16.mxu0 0
      %4799 = vmatpush1.bf16.msra.mxu0 %v4585
      %4800 = vmatprep.subr.bf16.mxu0 0
      %4801 = vmatpush1.bf16.msra.mxu0 %v4586
      %4802 = vmatprep.subr.bf16.mxu0 0
      %4803 = vmatpush1.bf16.msra.mxu0 %v4587
      %4804 = vmatprep.mubr.bf16.mxu0 %v4132
      %4805 = vmatmul.mubr.bf16.gmra.mrb[0].mxu0 %v4131
      %v4806 = vpop.f32.mrb[0].mxu0
      %v4807 = vadd.f32 %v4767, %v4806
      %v4808 = vpop.f32.mrb[0].mxu0
      %v4809 = vpop.f32.mrb[0].mxu0
      %v4810 = vpop.f32.mrb[0].mxu0
      %4811 = vdwg.mxu0
      %v4812 = vlaneseq
      %v4813 = vand.u32 %v4812, 127
      %vm4814 = vcmp.lt.s32.totalorder %v4813, 6
      %v4815 = vsel %vm4814, %v4807, 0.0
      %4816 = vadd.xlane.f32.xlu0 %v4815
      %v4817 = vpop.xlane.xlu0 %4816
      %v4818 = vmul.f32 %v4817, 0.16666667
      %vm4819 = vcmp.eq.s32.totalorder %v4813, 6
      %v4820 = vsel %vm4819, %v4807, 0.0
      %4821 = vadd.xlane.f32.xlu0 %v4820
      %v4822 = vpop.xlane.xlu0 %4821
      %v4823 = vsub.f32 %v4815, %v4818
      %v4824 = vadd.f32 %v4823, %v4822
      %4825 = vst [vmem:[%s313] sm:$0xff] %v4824
      %p4826 = scmp.lt.s32.totalorder %s20, 2
      %s4827 = scalar_select %p4826, %s20, 2
      %p4828 = scmp.lt.s32.totalorder %s21, 0
      %s4829 = scalar_select %p4828, %s21, 0
      %s4830 = sadd.s32 %s4829, %s4827
      %s4831 = smul.addr %s4830, 8
      %s4832 = scalar_lea.vmem %s5, %s4831
      // Predicated region
      $region41: #{_lambda_.7} parent=39 // pred_check
        %p4833 = pneg %p178
      $region42: #{_lambda_.7} parent=39 // pred_check_branch
        %4835 = sbr.rel (%p4833) target = $region44
      $region43: #{_lambda_.7} parent=39 // pred_region
        _
      $region44: #{_lambda_.7} parent=39 // pred_fallthru
        _
    $region40: #{_lambda_.7} parent=5 // pred_fallthru
      _
    %p4836 = scmp.le.s32.totalorder 2, %s11
    // Predicated region
    $region45: #{_lambda_.7} parent=5 // pred_check
      %p4837 = pneg %p4836
    $region46: #{_lambda_.7} parent=5 // pred_check_branch
      %4839 = sbr.rel (%p4837) target = $region48
    $region47: #{_lambda_.7} parent=5 // pred_region
      %s4840 = ssub.s32 %s11, 2
      // Predicated region
      $region49: #{_lambda_.7} parent=47 // pred_check
        %p4841 = pneg %p184
      $region50: #{_lambda_.7} parent=47 // pred_check_branch
        %4843 = sbr.rel (%p4841) target = $region52
      $region51: #{_lambda_.7} parent=47 // pred_region
        %p4844 = scmp.lt.s32.totalorder %s22, 2
        %s4845 = scalar_select %p4844, %s22, 2
        %p4846 = scmp.lt.s32.totalorder %s23, 0
        %s4847 = scalar_select %p4846, %s23, 0
        %s4848 = sadd.s32 %s4847, %s4845
        %s4849 = smul.addr %s4848, 8
        %s4850 = scalar_lea.vmem %s5, %s4849
      $region52: #{_lambda_.7} parent=47 // pred_fallthru
        _
    $region48: #{_lambda_.7} parent=5 // pred_fallthru
      _
  $region6: #{_lambda_.7} parent=0 // loop_footer
    %s15 = sadd.s32 1, %s11
  $region7: #{_lambda_.7} parent=0 // loop_footer_branch
    %10 = sbr.rel target = $region3
  $region8: #{_lambda_.7} parent=0 // loop_exit
    _

</llo_original>
